<compile_context>
chip_gen: v5e
topology: v5e:2x2
jax: 0.10.0
libtpu: 0.0.40
codegen_flags: <defaults>
</compile_context>

<pallas_src>
import math

import jax
import jax.numpy as jnp
from jax.experimental import pallas as pl
from jax.experimental.pallas import tpu as pltpu

# ----------------------------- config (small shapes) -----------------------------
B = 2            # batch
S = 8            # input_dim == sequence length
E = 32           # hidden_dim
H = 4            # num_heads
HD = E // H      # head dim
FF = 2048        # PyTorch TransformerEncoderLayer default dim_feedforward
L = 2            # num_layers
EPS = 1e-5       # LayerNorm eps (PyTorch default)
BS = B * S       # flattened batch*sequence rows


# ----------------------------- fused forward kernel ------------------------------
def vit_kernel(x_ref, wemb_ref, bemb_ref, pos_ref, bias_ref,
               pool_ref, wfc_ref, bfc_ref,
               wqkv_ref, bqkv_ref, woT_ref, bo_ref,
               g1_ref, be1_ref, w1T_ref, b1_ref, w2_ref, b2_ref,
               g2_ref, be2_ref,
               o_ref, h_sc):
    f32 = jnp.float32
    bf16 = jnp.bfloat16
    scale = 1.0 / math.sqrt(HD)
    l = pl.program_id(0)

    # ---- embedding Linear(1, E) + positional encoding (first grid step only) ----
    @pl.when(l == 0)
    def _():
        h_sc[...] = x_ref[...] * wemb_ref[...] + bemb_ref[...] + pos_ref[...]  # (BS, E)

    h = h_sc[...]                                   # (BS, E) f32, resident across layers
    bias = bias_ref[...]                            # (BS, BS) additive cross-batch mask

    # ---- fused QKV projection: one (BS,E)@(E,3E) matmul ----
    qkv = jnp.dot(h, wqkv_ref[...], preferred_element_type=f32) + bqkv_ref[...]  # (BS, 3E)
    woT = woT_ref[...]                                                           # (E, E)

    # ---- per-head attention; output projection folded in (no concatenate) ----
    attn = jnp.zeros((BS, E), f32)
    for hh in range(H):                                          # static unroll, H = 4
        q = qkv[:, hh * HD:(hh + 1) * HD]                        # (BS, HD)
        k = qkv[:, E + hh * HD:E + (hh + 1) * HD]
        v = qkv[:, 2 * E + hh * HD:2 * E + (hh + 1) * HD]
        s = jax.lax.dot_general(q, k, (((1,), (1,)), ((), ())),
                                preferred_element_type=f32) * scale + bias       # (BS, BS)
        # NOTE: every row has S unmasked (0.0-bias) entries, so the row max is finite
        # and the -1e30 masked entries flush to exactly 0 after exp.
        s = s - jnp.max(s, axis=-1, keepdims=True)
        p = jnp.exp(s)
        p = p * pl.reciprocal(jnp.sum(p, axis=-1, keepdims=True), approx=True)
        o = jnp.dot(p, v, preferred_element_type=f32)                            # (BS, HD)
        attn = attn + jnp.dot(o, woT[hh * HD:(hh + 1) * HD, :],
                              preferred_element_type=f32)                        # (BS, E)
    attn = attn + bo_ref[...]

    # ---- residual + LayerNorm1 (post-norm, f32) ----
    y = h + attn
    mu = jnp.mean(y, axis=-1, keepdims=True)
    var = jnp.mean((y - mu) ** 2, axis=-1, keepdims=True)
    y = (y - mu) * jax.lax.rsqrt(var + EPS) * g1_ref[...] + be1_ref[...]

    # ---- feed-forward: bf16 weights (and bf16-cast MXU operands), f32 accumulation ----
    h1 = jnp.dot(y.astype(bf16), w1T_ref[...], preferred_element_type=f32) + b1_ref[...]   # (BS, FF)
    h1 = jnp.maximum(h1, 0.0)
    z = jax.lax.dot_general(h1.astype(bf16), w2_ref[...], (((1,), (1,)), ((), ())),
                            preferred_element_type=f32) + b2_ref[...]                      # (BS, E)

    # ---- residual + LayerNorm2 (f32) ----
    y2 = y + z
    mu2 = jnp.mean(y2, axis=-1, keepdims=True)
    var2 = jnp.mean((y2 - mu2) ** 2, axis=-1, keepdims=True)
    h_new = (y2 - mu2) * jax.lax.rsqrt(var2 + EPS) * g2_ref[...] + be2_ref[...]
    h_sc[...] = h_new

    # ---- mean-pool over sequence + fc + EXACT sigmoid (last grid step only) ----
    @pl.when(l == L - 1)
    def _():
        m = jnp.dot(pool_ref[...], h_new, preferred_element_type=f32)                      # (B, E)
        logit = jnp.dot(m, wfc_ref[...], preferred_element_type=f32) + bfc_ref[...]        # (B, 1)
        o_ref[...] = 1.0 / (1.0 + jnp.exp(-logit))


_PACKED_ORDER = ("wqkvT", "bqkv", "woT", "bo", "g1", "be1",
                 "w1T", "b1", "w2", "b2", "g2", "be2")


def _const_spec(shape):
    n = len(shape)
    return pl.BlockSpec(shape, lambda l, n=n: (0,) * n)


def _layer_spec(shape):
    # shape = (L, ...) stacked over layers; squeeze the leading layer dim in-kernel.
    rest = tuple(shape[1:])
    n = len(rest)
    return pl.BlockSpec((None,) + rest, lambda l, n=n: (l,) + (0,) * n)


@jax.jit
def vit_forward(x, params):
    const_args = [x.reshape(BS, 1),
                  params["w_emb_t"], params["b_emb"], params["pos_flat"], params["attn_bias"],
                  params["pool"], params["w_fc_t"], params["b_fc"]]
    layer_args = [params["packed"][k] for k in _PACKED_ORDER]
    in_specs = ([_const_spec(a.shape) for a in const_args]
                + [_layer_spec(a.shape) for a in layer_args])
    return pl.pallas_call(
        vit_kernel,
        out_shape=jax.ShapeDtypeStruct((B, 1), jnp.float32),
        grid=(L,),
        in_specs=in_specs,
        out_specs=pl.BlockSpec((B, 1), lambda l: (0, 0)),
        scratch_shapes=[pltpu.VMEM((BS, E), jnp.float32)],
        compiler_params=pltpu.CompilerParams(dimension_semantics=("arbitrary",)),
    )(*const_args, *layer_args)


# ----------------------------- parameter init (deterministic) ---------------------
def init_params(key):
    keys = iter(jax.random.split(key, 64))

    def nrm(shape, scale=0.05):
        return scale * jax.random.normal(next(keys), shape, jnp.float32)

    w_emb_t = nrm((1, E))          # Linear(1, E).weight.T
    b_emb = nrm((1, E))
    pos = nrm((S, E), 1.0)         # nn.Parameter(torch.randn(1, S, E)) -> (S, E)

    raw_layers = []
    for _ in range(L):
        w1 = nrm((FF, E))
        w2 = nrm((E, FF))
        raw_layers.append(dict(
            wq=nrm((E, E)), wk=nrm((E, E)), wv=nrm((E, E)),
            bq=nrm((E,)), bk=nrm((E,)), bv=nrm((E,)),
            wo=nrm((E, E)), bo=nrm((E,)),
            w1=w1, b1=nrm((FF,)),
            w2=w2, b2=nrm((E,)),
            # bf16-rounded copies == exactly what the kernel multiplies with
            w1_q=w1.astype(jnp.bfloat16).astype(jnp.float32),
            w2_q=w2.astype(jnp.bfloat16).astype(jnp.float32),
            g1=jnp.ones((E,), jnp.float32), be1=jnp.zeros((E,), jnp.float32),
            g2=jnp.ones((E,), jnp.float32), be2=jnp.zeros((E,), jnp.float32),
        ))

    def stk(f):
        return jnp.stack([f(lp) for lp in raw_layers])

    packed = dict(
        wqkvT=stk(lambda lp: jnp.concatenate([lp["wq"].T, lp["wk"].T, lp["wv"].T], axis=1)),  # (L,E,3E) f32
        bqkv=stk(lambda lp: jnp.concatenate([lp["bq"], lp["bk"], lp["bv"]]).reshape(1, 3 * E)),
        woT=stk(lambda lp: lp["wo"].T),                                     # (L, E, E) f32
        bo=stk(lambda lp: lp["bo"].reshape(1, E)),
        g1=stk(lambda lp: lp["g1"].reshape(1, E)),
        be1=stk(lambda lp: lp["be1"].reshape(1, E)),
        w1T=stk(lambda lp: lp["w1"].T).astype(jnp.bfloat16),                # (L, E, FF) bf16 lane-dense
        b1=stk(lambda lp: lp["b1"].reshape(1, FF)),
        w2=stk(lambda lp: lp["w2"]).astype(jnp.bfloat16),                   # (L, E, FF) bf16 lane-dense
        b2=stk(lambda lp: lp["b2"].reshape(1, E)),
        g2=stk(lambda lp: lp["g2"].reshape(1, E)),
        be2=stk(lambda lp: lp["be2"].reshape(1, E)),
    )

    # additive block mask: 0 within a batch element, -1e30 across batch elements
    row_batch = jnp.arange(BS, dtype=jnp.int32) // S
    attn_bias = jnp.where(row_batch[:, None] == row_batch[None, :],
                          0.0, -1e30).astype(jnp.float32)                   # (BS, BS)
    # pooling matrix: mean over each batch element's S rows
    pool = (jnp.arange(B, dtype=jnp.int32)[:, None]
            == row_batch[None, :]).astype(jnp.float32) / S                  # (B, BS)

    return dict(
        w_emb_t=w_emb_t, b_emb=b_emb, pos=pos,
        pos_flat=jnp.tile(pos, (B, 1)),                                     # (BS, E)
        attn_bias=attn_bias, pool=pool,
        w_fc_t=nrm((E, 1)), b_fc=nrm((1, 1)),
        packed=packed, layers_raw=raw_layers,
    )


# ----------------------------- pure-JAX reference (for validation) ----------------
def reference_forward(x, params):
    # Uses the same bf16-rounded FFN weights as the kernel (f32 everywhere else) so the
    # check isolates kernel correctness from the (review-mandated) weight compression.
    hp = jax.lax.Precision.HIGHEST

    def lin(t, w, b):  # torch Linear: t @ w.T + b
        return jnp.einsum("bse,fe->bsf", t, w, precision=hp) + b

    def layer_norm(t, g, b):
        mu = jnp.mean(t, axis=-1, keepdims=True)
        var = jnp.mean((t - mu) ** 2, axis=-1, keepdims=True)
        return (t - mu) / jnp.sqrt(var + EPS) * g + b

    h = x * params["w_emb_t"] + params["b_emb"] + params["pos"]
    for lp in params["layers_raw"]:
        q = lin(h, lp["wq"], lp["bq"]).reshape(B, S, H, HD).transpose(0, 2, 1, 3)
        k = lin(h, lp["wk"], lp["bk"]).reshape(B, S, H, HD).transpose(0, 2, 1, 3)
        v = lin(h, lp["wv"], lp["bv"]).reshape(B, S, H, HD).transpose(0, 2, 1, 3)
        s = jnp.einsum("bhqd,bhkd->bhqk", q, k, precision=hp) / math.sqrt(HD)
        p = jax.nn.softmax(s, axis=-1)
        o = jnp.einsum("bhqk,bhkd->bhqd", p, v, precision=hp)
        o = o.transpose(0, 2, 1, 3).reshape(B, S, E)
        attn = lin(o, lp["wo"], lp["bo"])
        y = layer_norm(h + attn, lp["g1"], lp["be1"])
        ffn = lin(jax.nn.relu(lin(y, lp["w1_q"], lp["b1"])), lp["w2_q"], lp["b2"])
        h = layer_norm(y + ffn, lp["g2"], lp["be2"])
    m = jnp.mean(h, axis=1)
    logit = jnp.einsum("be,ef->bf", m, params["w_fc_t"], precision=hp) + params["b_fc"]
    return jax.nn.sigmoid(logit)


# ----------------------------- main ------------------------------------------------
if __name__ == "__main__":
    key = jax.random.PRNGKey(0)
    k_x, k_p = jax.random.split(key)
    x = jax.random.normal(k_x, (B, S, 1), jnp.float32)   # (batch, input_dim, 1)
    params = init_params(k_p)

    out = jax.block_until_ready(vit_forward(x, params))
    ref = reference_forward(x, params)

    assert out.shape == (B, 1), f"bad output shape {out.shape}"
    assert bool(jnp.all(jnp.isfinite(out))), "non-finite output"
    err = float(jnp.max(jnp.abs(out - ref)))
    assert err < 5e-3, f"mismatch vs reference: {err}"

    print("KERNEL_OK")
</pallas_src>

<mosaic_0001>
module attributes {stable_mosaic.version = 11 : i64} {
  func.func @vit_kernel(%arg0: i32, %arg1: memref<16x1xf32, #tpu.memory_space<vmem>>, %arg2: memref<1x32xf32, #tpu.memory_space<vmem>>, %arg3: memref<1x32xf32, #tpu.memory_space<vmem>>, %arg4: memref<16x32xf32, #tpu.memory_space<vmem>>, %arg5: memref<16x16xf32, #tpu.memory_space<vmem>>, %arg6: memref<2x16xf32, #tpu.memory_space<vmem>>, %arg7: memref<32x1xf32, #tpu.memory_space<vmem>>, %arg8: memref<1x1xf32, #tpu.memory_space<vmem>>, %arg9: memref<1x32x96xf32, #tpu.memory_space<vmem>>, %arg10: memref<1x1x96xf32, #tpu.memory_space<vmem>>, %arg11: memref<1x32x32xf32, #tpu.memory_space<vmem>>, %arg12: memref<1x1x32xf32, #tpu.memory_space<vmem>>, %arg13: memref<1x1x32xf32, #tpu.memory_space<vmem>>, %arg14: memref<1x1x32xf32, #tpu.memory_space<vmem>>, %arg15: memref<1x32x2048xbf16, #tpu.memory_space<vmem>>, %arg16: memref<1x1x2048xf32, #tpu.memory_space<vmem>>, %arg17: memref<1x32x2048xbf16, #tpu.memory_space<vmem>>, %arg18: memref<1x1x32xf32, #tpu.memory_space<vmem>>, %arg19: memref<1x1x32xf32, #tpu.memory_space<vmem>>, %arg20: memref<1x1x32xf32, #tpu.memory_space<vmem>>, %arg21: memref<2x1xf32, #tpu.memory_space<vmem>>, %arg22: memref<16x32xf32, #tpu.memory_space<vmem>>) attributes {dimension_semantics = [#tpu.dimension_semantics<arbitrary>], iteration_bounds = array<i64: 2>, scalar_prefetch = 0 : i64, scratch_operands = 1 : i64, tpu.core_type = #tpu.core_type<tc>, window_params = [{pipeline_mode = #tpu.pipeline_mode<synchronous>, transform_indices = @transform_0, window_bounds = array<i64: 16, 1>}, {pipeline_mode = #tpu.pipeline_mode<synchronous>, transform_indices = @transform_1, window_bounds = array<i64: 1, 32>}, {pipeline_mode = #tpu.pipeline_mode<synchronous>, transform_indices = @transform_2, window_bounds = array<i64: 1, 32>}, {pipeline_mode = #tpu.pipeline_mode<synchronous>, transform_indices = @transform_3, window_bounds = array<i64: 16, 32>}, {pipeline_mode = #tpu.pipeline_mode<synchronous>, transform_indices = @transform_4, window_bounds = array<i64: 16, 16>}, {pipeline_mode = #tpu.pipeline_mode<synchronous>, transform_indices = @transform_5, window_bounds = array<i64: 2, 16>}, {pipeline_mode = #tpu.pipeline_mode<synchronous>, transform_indices = @transform_6, window_bounds = array<i64: 32, 1>}, {pipeline_mode = #tpu.pipeline_mode<synchronous>, transform_indices = @transform_7, window_bounds = array<i64: 1, 1>}, {transform_indices = @transform_8, window_bounds = array<i64: 1, 32, 96>}, {transform_indices = @transform_9, window_bounds = array<i64: 1, 1, 96>}, {transform_indices = @transform_10, window_bounds = array<i64: 1, 32, 32>}, {transform_indices = @transform_11, window_bounds = array<i64: 1, 1, 32>}, {transform_indices = @transform_12, window_bounds = array<i64: 1, 1, 32>}, {transform_indices = @transform_13, window_bounds = array<i64: 1, 1, 32>}, {transform_indices = @transform_14, window_bounds = array<i64: 1, 32, 2048>}, {transform_indices = @transform_15, window_bounds = array<i64: 1, 1, 2048>}, {transform_indices = @transform_16, window_bounds = array<i64: 1, 32, 2048>}, {transform_indices = @transform_17, window_bounds = array<i64: 1, 1, 32>}, {transform_indices = @transform_18, window_bounds = array<i64: 1, 1, 32>}, {transform_indices = @transform_19, window_bounds = array<i64: 1, 1, 32>}, {pipeline_mode = #tpu.pipeline_mode<synchronous>, transform_indices = @transform_20, window_bounds = array<i64: 2, 1>}]} {
    %c0_i32 = arith.constant 0 : i32
    %0 = arith.cmpi eq, %arg0, %c0_i32 : i32
    %1 = arith.extui %0 : i1 to i32
    %c0_i32_0 = arith.constant 0 : i32
    %2 = arith.cmpi ne, %1, %c0_i32_0 : i32
    scf.if %2 {
      %c0_81 = arith.constant 0 : index
      %c0_82 = arith.constant 0 : index
      %179 = vector.load %arg1[%c0_81, %c0_82] : memref<16x1xf32, #tpu.memory_space<vmem>>, vector<16x1xf32>
      %c0_83 = arith.constant 0 : index
      %c0_84 = arith.constant 0 : index
      %180 = vector.load %arg2[%c0_83, %c0_84] : memref<1x32xf32, #tpu.memory_space<vmem>>, vector<1x32xf32>
      %181 = vector.broadcast %179 : vector<16x1xf32> to vector<16x32xf32>
      %182 = vector.broadcast %180 : vector<1x32xf32> to vector<16x32xf32>
      %183 = arith.mulf %181, %182 : vector<16x32xf32>
      %c0_85 = arith.constant 0 : index
      %c0_86 = arith.constant 0 : index
      %184 = vector.load %arg3[%c0_85, %c0_86] : memref<1x32xf32, #tpu.memory_space<vmem>>, vector<1x32xf32>
      %185 = vector.broadcast %184 : vector<1x32xf32> to vector<16x32xf32>
      %186 = arith.addf %183, %185 : vector<16x32xf32>
      %c0_87 = arith.constant 0 : index
      %c0_88 = arith.constant 0 : index
      %187 = vector.load %arg4[%c0_87, %c0_88] : memref<16x32xf32, #tpu.memory_space<vmem>>, vector<16x32xf32>
      %188 = arith.addf %186, %187 : vector<16x32xf32>
      %c0_89 = arith.constant 0 : index
      %c0_90 = arith.constant 0 : index
      %189 = vector.load %arg22[%c0_89, %c0_90] : memref<16x32xf32, #tpu.memory_space<vmem>>, vector<16x32xf32>
      tpu.vector_store %arg22[%c0_89, %c0_90], %188 {strides = array<i32>} : memref<16x32xf32, #tpu.memory_space<vmem>>, vector<16x32xf32>,
    } else {
    }
    %c0 = arith.constant 0 : index
    %c0_1 = arith.constant 0 : index
    %3 = vector.load %arg22[%c0, %c0_1] : memref<16x32xf32, #tpu.memory_space<vmem>>, vector<16x32xf32>
    %c0_2 = arith.constant 0 : index
    %c0_3 = arith.constant 0 : index
    %4 = vector.load %arg5[%c0_2, %c0_3] : memref<16x16xf32, #tpu.memory_space<vmem>>, vector<16x16xf32>
    %c0_4 = arith.constant 0 : index
    %c0_5 = arith.constant 0 : index
    %c0_6 = arith.constant 0 : index
    %5 = vector.load %arg9[%c0_4, %c0_5, %c0_6] : memref<1x32x96xf32, #tpu.memory_space<vmem>>, vector<1x32x96xf32>
    %6 = vector.shape_cast %5 : vector<1x32x96xf32> to vector<32x96xf32>
    %cst = arith.constant dense<0.000000e+00> : vector<16x96xf32>
    %7 = tpu.matmul %3, %6, %cst {dimension_numbers = #tpu.dot_dimension_numbers<[1], [0], [0], [1], [0, 0, 1, 1], [], []>} : vector<16x32xf32>, vector<32x96xf32>, vector<16x96xf32> -> vector<16x96xf32>
    %c0_7 = arith.constant 0 : index
    %c0_8 = arith.constant 0 : index
    %c0_9 = arith.constant 0 : index
    %8 = vector.load %arg10[%c0_7, %c0_8, %c0_9] : memref<1x1x96xf32, #tpu.memory_space<vmem>>, vector<1x1x96xf32>
    %9 = vector.shape_cast %8 : vector<1x1x96xf32> to vector<1x96xf32>
    %10 = vector.broadcast %9 : vector<1x96xf32> to vector<16x96xf32>
    %11 = arith.addf %7, %10 : vector<16x96xf32>
    %c0_10 = arith.constant 0 : index
    %c0_11 = arith.constant 0 : index
    %c0_12 = arith.constant 0 : index
    %12 = vector.load %arg11[%c0_10, %c0_11, %c0_12] : memref<1x32x32xf32, #tpu.memory_space<vmem>>, vector<1x32x32xf32>
    %13 = vector.shape_cast %12 : vector<1x32x32xf32> to vector<32x32xf32>
    %cst_13 = arith.constant 0.000000e+00 : f32
    %14 = vector.broadcast %cst_13 : f32 to vector<16x32xf32>
    %15 = vector.extract_strided_slice %11 {offsets = [0, 0], sizes = [16, 8], strides = [1, 1]} : vector<16x96xf32> to vector<16x8xf32>
    %16 = vector.extract_strided_slice %11 {offsets = [0, 32], sizes = [16, 8], strides = [1, 1]} : vector<16x96xf32> to vector<16x8xf32>
    %17 = vector.extract_strided_slice %11 {offsets = [0, 64], sizes = [16, 8], strides = [1, 1]} : vector<16x96xf32> to vector<16x8xf32>
    %cst_14 = arith.constant dense<0.000000e+00> : vector<16x16xf32>
    %18 = tpu.matmul %15, %16, %cst_14 {dimension_numbers = #tpu.dot_dimension_numbers<[1], [1], [0], [0], [0, 0, 1, 0], [], []>} : vector<16x8xf32>, vector<16x8xf32>, vector<16x16xf32> -> vector<16x16xf32>
    %cst_15 = arith.constant 0.353553385 : f32
    %19 = vector.broadcast %cst_15 : f32 to vector<16x16xf32>
    %20 = arith.mulf %18, %19 : vector<16x16xf32>
    %21 = arith.addf %20, %4 : vector<16x16xf32>
    %cst_16 = arith.constant dense<0xFF800000> : vector<16xf32>
    %22 = vector.multi_reduction <maximumf>, %21, %cst_16 [1] : vector<16x16xf32> to vector<16xf32>
    %23 = vector.shape_cast %22 : vector<16xf32> to vector<16x1xf32>
    %24 = vector.broadcast %23 : vector<16x1xf32> to vector<16x16xf32>
    %25 = arith.subf %21, %24 : vector<16x16xf32>
    %26 = math.exp %25 : vector<16x16xf32>
    %cst_17 = arith.constant dense<0.000000e+00> : vector<16xf32>
    %27 = vector.multi_reduction <add>, %26, %cst_17 [1] : vector<16x16xf32> to vector<16xf32>
    %28 = vector.shape_cast %27 : vector<16xf32> to vector<16x1xf32>
    %29 = tpu.reciprocal %28 {approx = true} : vector<16x1xf32> -> vector<16x1xf32>
    %30 = vector.broadcast %29 : vector<16x1xf32> to vector<16x16xf32>
    %31 = arith.mulf %26, %30 : vector<16x16xf32>
    %cst_18 = arith.constant dense<0.000000e+00> : vector<16x8xf32>
    %32 = tpu.matmul %31, %17, %cst_18 {dimension_numbers = #tpu.dot_dimension_numbers<[1], [0], [0], [1], [0, 0, 1, 1], [], []>} : vector<16x16xf32>, vector<16x8xf32>, vector<16x8xf32> -> vector<16x8xf32>
    %33 = vector.extract_strided_slice %13 {offsets = [0, 0], sizes = [8, 32], strides = [1, 1]} : vector<32x32xf32> to vector<8x32xf32>
    %cst_19 = arith.constant dense<0.000000e+00> : vector<16x32xf32>
    %34 = tpu.matmul %32, %33, %cst_19 {dimension_numbers = #tpu.dot_dimension_numbers<[1], [0], [0], [1], [0, 0, 1, 1], [], []>} : vector<16x8xf32>, vector<8x32xf32>, vector<16x32xf32> -> vector<16x32xf32>
    %35 = arith.addf %14, %34 : vector<16x32xf32>
    %36 = vector.extract_strided_slice %11 {offsets = [0, 8], sizes = [16, 8], strides = [1, 1]} : vector<16x96xf32> to vector<16x8xf32>
    %37 = vector.extract_strided_slice %11 {offsets = [0, 40], sizes = [16, 8], strides = [1, 1]} : vector<16x96xf32> to vector<16x8xf32>
    %38 = vector.extract_strided_slice %11 {offsets = [0, 72], sizes = [16, 8], strides = [1, 1]} : vector<16x96xf32> to vector<16x8xf32>
    %cst_20 = arith.constant dense<0.000000e+00> : vector<16x16xf32>
    %39 = tpu.matmul %36, %37, %cst_20 {dimension_numbers = #tpu.dot_dimension_numbers<[1], [1], [0], [0], [0, 0, 1, 0], [], []>} : vector<16x8xf32>, vector<16x8xf32>, vector<16x16xf32> -> vector<16x16xf32>
    %cst_21 = arith.constant 0.353553385 : f32
    %40 = vector.broadcast %cst_21 : f32 to vector<16x16xf32>
    %41 = arith.mulf %39, %40 : vector<16x16xf32>
    %42 = arith.addf %41, %4 : vector<16x16xf32>
    %cst_22 = arith.constant dense<0xFF800000> : vector<16xf32>
    %43 = vector.multi_reduction <maximumf>, %42, %cst_22 [1] : vector<16x16xf32> to vector<16xf32>
    %44 = vector.shape_cast %43 : vector<16xf32> to vector<16x1xf32>
    %45 = vector.broadcast %44 : vector<16x1xf32> to vector<16x16xf32>
    %46 = arith.subf %42, %45 : vector<16x16xf32>
    %47 = math.exp %46 : vector<16x16xf32>
    %cst_23 = arith.constant dense<0.000000e+00> : vector<16xf32>
    %48 = vector.multi_reduction <add>, %47, %cst_23 [1] : vector<16x16xf32> to vector<16xf32>
    %49 = vector.shape_cast %48 : vector<16xf32> to vector<16x1xf32>
    %50 = tpu.reciprocal %49 {approx = true} : vector<16x1xf32> -> vector<16x1xf32>
    %51 = vector.broadcast %50 : vector<16x1xf32> to vector<16x16xf32>
    %52 = arith.mulf %47, %51 : vector<16x16xf32>
    %cst_24 = arith.constant dense<0.000000e+00> : vector<16x8xf32>
    %53 = tpu.matmul %52, %38, %cst_24 {dimension_numbers = #tpu.dot_dimension_numbers<[1], [0], [0], [1], [0, 0, 1, 1], [], []>} : vector<16x16xf32>, vector<16x8xf32>, vector<16x8xf32> -> vector<16x8xf32>
    %54 = vector.extract_strided_slice %13 {offsets = [8, 0], sizes = [8, 32], strides = [1, 1]} : vector<32x32xf32> to vector<8x32xf32>
    %cst_25 = arith.constant dense<0.000000e+00> : vector<16x32xf32>
    %55 = tpu.matmul %53, %54, %cst_25 {dimension_numbers = #tpu.dot_dimension_numbers<[1], [0], [0], [1], [0, 0, 1, 1], [], []>} : vector<16x8xf32>, vector<8x32xf32>, vector<16x32xf32> -> vector<16x32xf32>
    %56 = arith.addf %35, %55 : vector<16x32xf32>
    %57 = vector.extract_strided_slice %11 {offsets = [0, 16], sizes = [16, 8], strides = [1, 1]} : vector<16x96xf32> to vector<16x8xf32>
    %58 = vector.extract_strided_slice %11 {offsets = [0, 48], sizes = [16, 8], strides = [1, 1]} : vector<16x96xf32> to vector<16x8xf32>
    %59 = vector.extract_strided_slice %11 {offsets = [0, 80], sizes = [16, 8], strides = [1, 1]} : vector<16x96xf32> to vector<16x8xf32>
    %cst_26 = arith.constant dense<0.000000e+00> : vector<16x16xf32>
    %60 = tpu.matmul %57, %58, %cst_26 {dimension_numbers = #tpu.dot_dimension_numbers<[1], [1], [0], [0], [0, 0, 1, 0], [], []>} : vector<16x8xf32>, vector<16x8xf32>, vector<16x16xf32> -> vector<16x16xf32>
    %cst_27 = arith.constant 0.353553385 : f32
    %61 = vector.broadcast %cst_27 : f32 to vector<16x16xf32>
    %62 = arith.mulf %60, %61 : vector<16x16xf32>
    %63 = arith.addf %62, %4 : vector<16x16xf32>
    %cst_28 = arith.constant dense<0xFF800000> : vector<16xf32>
    %64 = vector.multi_reduction <maximumf>, %63, %cst_28 [1] : vector<16x16xf32> to vector<16xf32>
    %65 = vector.shape_cast %64 : vector<16xf32> to vector<16x1xf32>
    %66 = vector.broadcast %65 : vector<16x1xf32> to vector<16x16xf32>
    %67 = arith.subf %63, %66 : vector<16x16xf32>
    %68 = math.exp %67 : vector<16x16xf32>
    %cst_29 = arith.constant dense<0.000000e+00> : vector<16xf32>
    %69 = vector.multi_reduction <add>, %68, %cst_29 [1] : vector<16x16xf32> to vector<16xf32>
    %70 = vector.shape_cast %69 : vector<16xf32> to vector<16x1xf32>
    %71 = tpu.reciprocal %70 {approx = true} : vector<16x1xf32> -> vector<16x1xf32>
    %72 = vector.broadcast %71 : vector<16x1xf32> to vector<16x16xf32>
    %73 = arith.mulf %68, %72 : vector<16x16xf32>
    %cst_30 = arith.constant dense<0.000000e+00> : vector<16x8xf32>
    %74 = tpu.matmul %73, %59, %cst_30 {dimension_numbers = #tpu.dot_dimension_numbers<[1], [0], [0], [1], [0, 0, 1, 1], [], []>} : vector<16x16xf32>, vector<16x8xf32>, vector<16x8xf32> -> vector<16x8xf32>
    %75 = vector.extract_strided_slice %13 {offsets = [16, 0], sizes = [8, 32], strides = [1, 1]} : vector<32x32xf32> to vector<8x32xf32>
    %cst_31 = arith.constant dense<0.000000e+00> : vector<16x32xf32>
    %76 = tpu.matmul %74, %75, %cst_31 {dimension_numbers = #tpu.dot_dimension_numbers<[1], [0], [0], [1], [0, 0, 1, 1], [], []>} : vector<16x8xf32>, vector<8x32xf32>, vector<16x32xf32> -> vector<16x32xf32>
    %77 = arith.addf %56, %76 : vector<16x32xf32>
    %78 = vector.extract_strided_slice %11 {offsets = [0, 24], sizes = [16, 8], strides = [1, 1]} : vector<16x96xf32> to vector<16x8xf32>
    %79 = vector.extract_strided_slice %11 {offsets = [0, 56], sizes = [16, 8], strides = [1, 1]} : vector<16x96xf32> to vector<16x8xf32>
    %80 = vector.extract_strided_slice %11 {offsets = [0, 88], sizes = [16, 8], strides = [1, 1]} : vector<16x96xf32> to vector<16x8xf32>
    %cst_32 = arith.constant dense<0.000000e+00> : vector<16x16xf32>
    %81 = tpu.matmul %78, %79, %cst_32 {dimension_numbers = #tpu.dot_dimension_numbers<[1], [1], [0], [0], [0, 0, 1, 0], [], []>} : vector<16x8xf32>, vector<16x8xf32>, vector<16x16xf32> -> vector<16x16xf32>
    %cst_33 = arith.constant 0.353553385 : f32
    %82 = vector.broadcast %cst_33 : f32 to vector<16x16xf32>
    %83 = arith.mulf %81, %82 : vector<16x16xf32>
    %84 = arith.addf %83, %4 : vector<16x16xf32>
    %cst_34 = arith.constant dense<0xFF800000> : vector<16xf32>
    %85 = vector.multi_reduction <maximumf>, %84, %cst_34 [1] : vector<16x16xf32> to vector<16xf32>
    %86 = vector.shape_cast %85 : vector<16xf32> to vector<16x1xf32>
    %87 = vector.broadcast %86 : vector<16x1xf32> to vector<16x16xf32>
    %88 = arith.subf %84, %87 : vector<16x16xf32>
    %89 = math.exp %88 : vector<16x16xf32>
    %cst_35 = arith.constant dense<0.000000e+00> : vector<16xf32>
    %90 = vector.multi_reduction <add>, %89, %cst_35 [1] : vector<16x16xf32> to vector<16xf32>
    %91 = vector.shape_cast %90 : vector<16xf32> to vector<16x1xf32>
    %92 = tpu.reciprocal %91 {approx = true} : vector<16x1xf32> -> vector<16x1xf32>
    %93 = vector.broadcast %92 : vector<16x1xf32> to vector<16x16xf32>
    %94 = arith.mulf %89, %93 : vector<16x16xf32>
    %cst_36 = arith.constant dense<0.000000e+00> : vector<16x8xf32>
    %95 = tpu.matmul %94, %80, %cst_36 {dimension_numbers = #tpu.dot_dimension_numbers<[1], [0], [0], [1], [0, 0, 1, 1], [], []>} : vector<16x16xf32>, vector<16x8xf32>, vector<16x8xf32> -> vector<16x8xf32>
    %96 = vector.extract_strided_slice %13 {offsets = [24, 0], sizes = [8, 32], strides = [1, 1]} : vector<32x32xf32> to vector<8x32xf32>
    %cst_37 = arith.constant dense<0.000000e+00> : vector<16x32xf32>
    %97 = tpu.matmul %95, %96, %cst_37 {dimension_numbers = #tpu.dot_dimension_numbers<[1], [0], [0], [1], [0, 0, 1, 1], [], []>} : vector<16x8xf32>, vector<8x32xf32>, vector<16x32xf32> -> vector<16x32xf32>
    %98 = arith.addf %77, %97 : vector<16x32xf32>
    %c0_38 = arith.constant 0 : index
    %c0_39 = arith.constant 0 : index
    %c0_40 = arith.constant 0 : index
    %99 = vector.load %arg12[%c0_38, %c0_39, %c0_40] : memref<1x1x32xf32, #tpu.memory_space<vmem>>, vector<1x1x32xf32>
    %100 = vector.shape_cast %99 : vector<1x1x32xf32> to vector<1x32xf32>
    %101 = vector.broadcast %100 : vector<1x32xf32> to vector<16x32xf32>
    %102 = arith.addf %98, %101 : vector<16x32xf32>
    %103 = arith.addf %3, %102 : vector<16x32xf32>
    %cst_41 = arith.constant dense<0.000000e+00> : vector<16xf32>
    %104 = vector.multi_reduction <add>, %103, %cst_41 [1] : vector<16x32xf32> to vector<16xf32>
    %105 = vector.shape_cast %104 : vector<16xf32> to vector<16x1xf32>
    %cst_42 = arith.constant 3.200000e+01 : f32
    %106 = vector.broadcast %cst_42 : f32 to vector<16x1xf32>
    %107 = arith.divf %105, %106 : vector<16x1xf32>
    %108 = vector.broadcast %107 : vector<16x1xf32> to vector<16x32xf32>
    %109 = arith.subf %103, %108 : vector<16x32xf32>
    %110 = arith.mulf %109, %109 : vector<16x32xf32>
    %cst_43 = arith.constant dense<0.000000e+00> : vector<16xf32>
    %111 = vector.multi_reduction <add>, %110, %cst_43 [1] : vector<16x32xf32> to vector<16xf32>
    %112 = vector.shape_cast %111 : vector<16xf32> to vector<16x1xf32>
    %cst_44 = arith.constant 3.200000e+01 : f32
    %113 = vector.broadcast %cst_44 : f32 to vector<16x1xf32>
    %114 = arith.divf %112, %113 : vector<16x1xf32>
    %115 = vector.broadcast %107 : vector<16x1xf32> to vector<16x32xf32>
    %116 = arith.subf %103, %115 : vector<16x32xf32>
    %cst_45 = arith.constant 9.99999974E-6 : f32
    %117 = vector.broadcast %cst_45 : f32 to vector<16x1xf32>
    %118 = arith.addf %114, %117 : vector<16x1xf32>
    %119 = math.rsqrt %118 : vector<16x1xf32>
    %120 = vector.broadcast %119 : vector<16x1xf32> to vector<16x32xf32>
    %121 = arith.mulf %116, %120 : vector<16x32xf32>
    %c0_46 = arith.constant 0 : index
    %c0_47 = arith.constant 0 : index
    %c0_48 = arith.constant 0 : index
    %122 = vector.load %arg13[%c0_46, %c0_47, %c0_48] : memref<1x1x32xf32, #tpu.memory_space<vmem>>, vector<1x1x32xf32>
    %123 = vector.shape_cast %122 : vector<1x1x32xf32> to vector<1x32xf32>
    %124 = vector.broadcast %123 : vector<1x32xf32> to vector<16x32xf32>
    %125 = arith.mulf %121, %124 : vector<16x32xf32>
    %c0_49 = arith.constant 0 : index
    %c0_50 = arith.constant 0 : index
    %c0_51 = arith.constant 0 : index
    %126 = vector.load %arg14[%c0_49, %c0_50, %c0_51] : memref<1x1x32xf32, #tpu.memory_space<vmem>>, vector<1x1x32xf32>
    %127 = vector.shape_cast %126 : vector<1x1x32xf32> to vector<1x32xf32>
    %128 = vector.broadcast %127 : vector<1x32xf32> to vector<16x32xf32>
    %129 = arith.addf %125, %128 : vector<16x32xf32>
    %130 = arith.truncf %129 : vector<16x32xf32> to vector<16x32xbf16>
    %c0_52 = arith.constant 0 : index
    %c0_53 = arith.constant 0 : index
    %c0_54 = arith.constant 0 : index
    %131 = vector.load %arg15[%c0_52, %c0_53, %c0_54] : memref<1x32x2048xbf16, #tpu.memory_space<vmem>>, vector<1x32x2048xbf16>
    %132 = vector.shape_cast %131 : vector<1x32x2048xbf16> to vector<32x2048xbf16>
    %cst_55 = arith.constant dense<0.000000e+00> : vector<16x2048xf32>
    %133 = tpu.matmul %130, %132, %cst_55 {dimension_numbers = #tpu.dot_dimension_numbers<[1], [0], [0], [1], [0, 0, 1, 1], [], []>} : vector<16x32xbf16>, vector<32x2048xbf16>, vector<16x2048xf32> -> vector<16x2048xf32>
    %c0_56 = arith.constant 0 : index
    %c0_57 = arith.constant 0 : index
    %c0_58 = arith.constant 0 : index
    %134 = vector.load %arg16[%c0_56, %c0_57, %c0_58] : memref<1x1x2048xf32, #tpu.memory_space<vmem>>, vector<1x1x2048xf32>
    %135 = vector.shape_cast %134 : vector<1x1x2048xf32> to vector<1x2048xf32>
    %136 = vector.broadcast %135 : vector<1x2048xf32> to vector<16x2048xf32>
    %137 = arith.addf %133, %136 : vector<16x2048xf32>
    %cst_59 = arith.constant 0.000000e+00 : f32
    %138 = vector.broadcast %cst_59 : f32 to vector<16x2048xf32>
    %139 = arith.maximumf %137, %138 : vector<16x2048xf32>
    %140 = arith.truncf %139 : vector<16x2048xf32> to vector<16x2048xbf16>
    %c0_60 = arith.constant 0 : index
    %c0_61 = arith.constant 0 : index
    %c0_62 = arith.constant 0 : index
    %141 = vector.load %arg17[%c0_60, %c0_61, %c0_62] : memref<1x32x2048xbf16, #tpu.memory_space<vmem>>, vector<1x32x2048xbf16>
    %142 = vector.shape_cast %141 : vector<1x32x2048xbf16> to vector<32x2048xbf16>
    %cst_63 = arith.constant dense<0.000000e+00> : vector<16x32xf32>
    %143 = tpu.matmul %140, %142, %cst_63 {dimension_numbers = #tpu.dot_dimension_numbers<[1], [1], [0], [0], [0, 0, 1, 0], [], []>} : vector<16x2048xbf16>, vector<32x2048xbf16>, vector<16x32xf32> -> vector<16x32xf32>
    %c0_64 = arith.constant 0 : index
    %c0_65 = arith.constant 0 : index
    %c0_66 = arith.constant 0 : index
    %144 = vector.load %arg18[%c0_64, %c0_65, %c0_66] : memref<1x1x32xf32, #tpu.memory_space<vmem>>, vector<1x1x32xf32>
    %145 = vector.shape_cast %144 : vector<1x1x32xf32> to vector<1x32xf32>
    %146 = vector.broadcast %145 : vector<1x32xf32> to vector<16x32xf32>
    %147 = arith.addf %143, %146 : vector<16x32xf32>
    %148 = arith.addf %129, %147 : vector<16x32xf32>
    %cst_67 = arith.constant dense<0.000000e+00> : vector<16xf32>
    %149 = vector.multi_reduction <add>, %148, %cst_67 [1] : vector<16x32xf32> to vector<16xf32>
    %150 = vector.shape_cast %149 : vector<16xf32> to vector<16x1xf32>
    %cst_68 = arith.constant 3.200000e+01 : f32
    %151 = vector.broadcast %cst_68 : f32 to vector<16x1xf32>
    %152 = arith.divf %150, %151 : vector<16x1xf32>
    %153 = vector.broadcast %152 : vector<16x1xf32> to vector<16x32xf32>
    %154 = arith.subf %148, %153 : vector<16x32xf32>
    %155 = arith.mulf %154, %154 : vector<16x32xf32>
    %cst_69 = arith.constant dense<0.000000e+00> : vector<16xf32>
    %156 = vector.multi_reduction <add>, %155, %cst_69 [1] : vector<16x32xf32> to vector<16xf32>
    %157 = vector.shape_cast %156 : vector<16xf32> to vector<16x1xf32>
    %cst_70 = arith.constant 3.200000e+01 : f32
    %158 = vector.broadcast %cst_70 : f32 to vector<16x1xf32>
    %159 = arith.divf %157, %158 : vector<16x1xf32>
    %160 = vector.broadcast %152 : vector<16x1xf32> to vector<16x32xf32>
    %161 = arith.subf %148, %160 : vector<16x32xf32>
    %cst_71 = arith.constant 9.99999974E-6 : f32
    %162 = vector.broadcast %cst_71 : f32 to vector<16x1xf32>
    %163 = arith.addf %159, %162 : vector<16x1xf32>
    %164 = math.rsqrt %163 : vector<16x1xf32>
    %165 = vector.broadcast %164 : vector<16x1xf32> to vector<16x32xf32>
    %166 = arith.mulf %161, %165 : vector<16x32xf32>
    %c0_72 = arith.constant 0 : index
    %c0_73 = arith.constant 0 : index
    %c0_74 = arith.constant 0 : index
    %167 = vector.load %arg19[%c0_72, %c0_73, %c0_74] : memref<1x1x32xf32, #tpu.memory_space<vmem>>, vector<1x1x32xf32>
    %168 = vector.shape_cast %167 : vector<1x1x32xf32> to vector<1x32xf32>
    %169 = vector.broadcast %168 : vector<1x32xf32> to vector<16x32xf32>
    %170 = arith.mulf %166, %169 : vector<16x32xf32>
    %c0_75 = arith.constant 0 : index
    %c0_76 = arith.constant 0 : index
    %c0_77 = arith.constant 0 : index
    %171 = vector.load %arg20[%c0_75, %c0_76, %c0_77] : memref<1x1x32xf32, #tpu.memory_space<vmem>>, vector<1x1x32xf32>
    %172 = vector.shape_cast %171 : vector<1x1x32xf32> to vector<1x32xf32>
    %173 = vector.broadcast %172 : vector<1x32xf32> to vector<16x32xf32>
    %174 = arith.addf %170, %173 : vector<16x32xf32>
    %c0_78 = arith.constant 0 : index
    %c0_79 = arith.constant 0 : index
    %175 = vector.load %arg22[%c0_78, %c0_79] : memref<16x32xf32, #tpu.memory_space<vmem>>, vector<16x32xf32>
    tpu.vector_store %arg22[%c0_78, %c0_79], %174 {strides = array<i32>} : memref<16x32xf32, #tpu.memory_space<vmem>>, vector<16x32xf32>,
    %c1_i32 = arith.constant 1 : i32
    %176 = arith.cmpi eq, %arg0, %c1_i32 : i32
    %177 = arith.extui %176 : i1 to i32
    %c0_i32_80 = arith.constant 0 : i32
    %178 = arith.cmpi ne, %177, %c0_i32_80 : i32
    scf.if %178 {
      %c0_81 = arith.constant 0 : index
      %c0_82 = arith.constant 0 : index
      %179 = vector.load %arg6[%c0_81, %c0_82] : memref<2x16xf32, #tpu.memory_space<vmem>>, vector<2x16xf32>
      %cst_83 = arith.constant dense<0.000000e+00> : vector<2x32xf32>
      %180 = tpu.matmul %179, %174, %cst_83 {dimension_numbers = #tpu.dot_dimension_numbers<[1], [0], [0], [1], [0, 0, 1, 1], [], []>} : vector<2x16xf32>, vector<16x32xf32>, vector<2x32xf32> -> vector<2x32xf32>
      %c0_84 = arith.constant 0 : index
      %c0_85 = arith.constant 0 : index
      %181 = vector.load %arg7[%c0_84, %c0_85] : memref<32x1xf32, #tpu.memory_space<vmem>>, vector<32x1xf32>
      %cst_86 = arith.constant dense<0.000000e+00> : vector<2x1xf32>
      %182 = tpu.matmul %180, %181, %cst_86 {dimension_numbers = #tpu.dot_dimension_numbers<[1], [0], [0], [1], [0, 0, 1, 1], [], []>} : vector<2x32xf32>, vector<32x1xf32>, vector<2x1xf32> -> vector<2x1xf32>
      %c0_87 = arith.constant 0 : index
      %c0_88 = arith.constant 0 : index
      %183 = vector.load %arg8[%c0_87, %c0_88] : memref<1x1xf32, #tpu.memory_space<vmem>>, vector<1x1xf32>
      %184 = vector.broadcast %183 : vector<1x1xf32> to vector<2x1xf32>
      %185 = arith.addf %182, %184 : vector<2x1xf32>
      %cst_89 = arith.constant 0.000000e+00 : f32
      %186 = vector.broadcast %cst_89 : f32 to vector<2x1xf32>
      %187 = arith.subf %186, %185 : vector<2x1xf32>
      %188 = math.exp %187 : vector<2x1xf32>
      %cst_90 = arith.constant 1.000000e+00 : f32
      %189 = vector.broadcast %cst_90 : f32 to vector<2x1xf32>
      %190 = arith.addf %189, %188 : vector<2x1xf32>
      %cst_91 = arith.constant 1.000000e+00 : f32
      %191 = vector.broadcast %cst_91 : f32 to vector<2x1xf32>
      %192 = arith.divf %191, %190 : vector<2x1xf32>
      %c0_92 = arith.constant 0 : index
      %c0_93 = arith.constant 0 : index
      %193 = vector.load %arg21[%c0_92, %c0_93] : memref<2x1xf32, #tpu.memory_space<vmem>>, vector<2x1xf32>
      tpu.vector_store %arg21[%c0_92, %c0_93], %192 {strides = array<i32>} : memref<2x1xf32, #tpu.memory_space<vmem>>, vector<2x1xf32>,
    } else {
    }
    return
  }
  func.func @transform_0(%arg0: i32) -> (i32, i32) {
    %c0_i32 = arith.constant 0 : i32
    %c0_i32_0 = arith.constant 0 : i32
    %c0_i32_1 = arith.constant 0 : i32
    return %c0_i32, %c0_i32_0 : i32, i32
  }
  func.func @transform_1(%arg0: i32) -> (i32, i32) {
    %c0_i32 = arith.constant 0 : i32
    %c0_i32_0 = arith.constant 0 : i32
    %c0_i32_1 = arith.constant 0 : i32
    return %c0_i32, %c0_i32_0 : i32, i32
  }
  func.func @transform_2(%arg0: i32) -> (i32, i32) {
    %c0_i32 = arith.constant 0 : i32
    %c0_i32_0 = arith.constant 0 : i32
    %c0_i32_1 = arith.constant 0 : i32
    return %c0_i32, %c0_i32_0 : i32, i32
  }
  func.func @transform_3(%arg0: i32) -> (i32, i32) {
    %c0_i32 = arith.constant 0 : i32
    %c0_i32_0 = arith.constant 0 : i32
    %c0_i32_1 = arith.constant 0 : i32
    return %c0_i32, %c0_i32_0 : i32, i32
  }
  func.func @transform_4(%arg0: i32) -> (i32, i32) {
    %c0_i32 = arith.constant 0 : i32
    %c0_i32_0 = arith.constant 0 : i32
    %c0_i32_1 = arith.constant 0 : i32
    return %c0_i32, %c0_i32_0 : i32, i32
  }
  func.func @transform_5(%arg0: i32) -> (i32, i32) {
    %c0_i32 = arith.constant 0 : i32
    %c0_i32_0 = arith.constant 0 : i32
    %c0_i32_1 = arith.constant 0 : i32
    return %c0_i32, %c0_i32_0 : i32, i32
  }
  func.func @transform_6(%arg0: i32) -> (i32, i32) {
    %c0_i32 = arith.constant 0 : i32
    %c0_i32_0 = arith.constant 0 : i32
    %c0_i32_1 = arith.constant 0 : i32
    return %c0_i32, %c0_i32_0 : i32, i32
  }
  func.func @transform_7(%arg0: i32) -> (i32, i32) {
    %c0_i32 = arith.constant 0 : i32
    %c0_i32_0 = arith.constant 0 : i32
    %c0_i32_1 = arith.constant 0 : i32
    return %c0_i32, %c0_i32_0 : i32, i32
  }
  func.func @transform_8(%arg0: i32) -> (i32, i32, i32) {
    %c0_i32 = arith.constant 0 : i32
    %c0_i32_0 = arith.constant 0 : i32
    %c0_i32_1 = arith.constant 0 : i32
    return %arg0, %c0_i32, %c0_i32_0 : i32, i32, i32
  }
  func.func @transform_9(%arg0: i32) -> (i32, i32, i32) {
    %c0_i32 = arith.constant 0 : i32
    %c0_i32_0 = arith.constant 0 : i32
    %c0_i32_1 = arith.constant 0 : i32
    return %arg0, %c0_i32, %c0_i32_0 : i32, i32, i32
  }
  func.func @transform_10(%arg0: i32) -> (i32, i32, i32) {
    %c0_i32 = arith.constant 0 : i32
    %c0_i32_0 = arith.constant 0 : i32
    %c0_i32_1 = arith.constant 0 : i32
    return %arg0, %c0_i32, %c0_i32_0 : i32, i32, i32
  }
  func.func @transform_11(%arg0: i32) -> (i32, i32, i32) {
    %c0_i32 = arith.constant 0 : i32
    %c0_i32_0 = arith.constant 0 : i32
    %c0_i32_1 = arith.constant 0 : i32
    return %arg0, %c0_i32, %c0_i32_0 : i32, i32, i32
  }
  func.func @transform_12(%arg0: i32) -> (i32, i32, i32) {
    %c0_i32 = arith.constant 0 : i32
    %c0_i32_0 = arith.constant 0 : i32
    %c0_i32_1 = arith.constant 0 : i32
    return %arg0, %c0_i32, %c0_i32_0 : i32, i32, i32
  }
  func.func @transform_13(%arg0: i32) -> (i32, i32, i32) {
    %c0_i32 = arith.constant 0 : i32
    %c0_i32_0 = arith.constant 0 : i32
    %c0_i32_1 = arith.constant 0 : i32
    return %arg0, %c0_i32, %c0_i32_0 : i32, i32, i32
  }
  func.func @transform_14(%arg0: i32) -> (i32, i32, i32) {
    %c0_i32 = arith.constant 0 : i32
    %c0_i32_0 = arith.constant 0 : i32
    %c0_i32_1 = arith.constant 0 : i32
    return %arg0, %c0_i32, %c0_i32_0 : i32, i32, i32
  }
  func.func @transform_15(%arg0: i32) -> (i32, i32, i32) {
    %c0_i32 = arith.constant 0 : i32
    %c0_i32_0 = arith.constant 0 : i32
    %c0_i32_1 = arith.constant 0 : i32
    return %arg0, %c0_i32, %c0_i32_0 : i32, i32, i32
  }
  func.func @transform_16(%arg0: i32) -> (i32, i32, i32) {
    %c0_i32 = arith.constant 0 : i32
    %c0_i32_0 = arith.constant 0 : i32
    %c0_i32_1 = arith.constant 0 : i32
    return %arg0, %c0_i32, %c0_i32_0 : i32, i32, i32
  }
  func.func @transform_17(%arg0: i32) -> (i32, i32, i32) {
    %c0_i32 = arith.constant 0 : i32
    %c0_i32_0 = arith.constant 0 : i32
    %c0_i32_1 = arith.constant 0 : i32
    return %arg0, %c0_i32, %c0_i32_0 : i32, i32, i32
  }
  func.func @transform_18(%arg0: i32) -> (i32, i32, i32) {
    %c0_i32 = arith.constant 0 : i32
    %c0_i32_0 = arith.constant 0 : i32
    %c0_i32_1 = arith.constant 0 : i32
    return %arg0, %c0_i32, %c0_i32_0 : i32, i32, i32
  }
  func.func @transform_19(%arg0: i32) -> (i32, i32, i32) {
    %c0_i32 = arith.constant 0 : i32
    %c0_i32_0 = arith.constant 0 : i32
    %c0_i32_1 = arith.constant 0 : i32
    return %arg0, %c0_i32, %c0_i32_0 : i32, i32, i32
  }
  func.func @transform_20(%arg0: i32) -> (i32, i32) {
    %c0_i32 = arith.constant 0 : i32
    %c0_i32_0 = arith.constant 0 : i32
    %c0_i32_1 = arith.constant 0 : i32
    return %c0_i32, %c0_i32_0 : i32, i32
  }
}

</mosaic_0001>

<llo_original>
// kernel: vit_forward.1
$region0: #{vit_forward.1}
  #allocation0 [shape = 'u32[]', space=smem, size = 0x4, offset = 0x4, fixed_abs, tag = 'smem constant byte address 0x4 - core index']
  #allocation1 [shape = 'u32[72,128]{1,0:T(1,128)}', space=vmem, size = 0x9000, scoped, tag = 'internal scratch']
  #allocation2 [shape = 'f32[16,32]{1,0:T(8,128)}', space=vmem, size = 0x2000, scoped, tag = 'scratch operand']
  #allocation3 [shape = 'f32[1,1]{1,0:T(1,128)S(1)}', space=vmem, size = 0x200, scoped, tag = 'scoped memory for vit_forward.1']
  %s0 = inlined_call_operand.vmem [shape: f32[16,1], index: 0, kind: input, shape index: {}]
  %s1 = inlined_call_operand.vmem [shape: f32[1,32], index: 1, kind: input, shape index: {}]
  %s2 = inlined_call_operand.hbm [shape: f32[1,32], index: 2, kind: input, shape index: {}]
  %s3 = inlined_call_operand.vmem [shape: f32[16,32], index: 3, kind: input, shape index: {}]
  %s4 = inlined_call_operand.hbm [shape: f32[16,16], index: 4, kind: input, shape index: {}]
  %s5 = inlined_call_operand.vmem [shape: f32[2,16], index: 5, kind: input, shape index: {}]
  %s6 = inlined_call_operand.vmem [shape: f32[32,1], index: 6, kind: input, shape index: {}]
  %s7 = inlined_call_operand.<no memory space> [shape: f32[1,1], index: 7, kind: input, shape index: {}]
  %s8 = inlined_call_operand.hbm [shape: f32[2,32,96], index: 8, kind: input, shape index: {}]
  %s9 = inlined_call_operand.vmem [shape: f32[2,1,96], index: 9, kind: input, shape index: {}]
  %s10 = inlined_call_operand.hbm [shape: f32[2,32,32], index: 10, kind: input, shape index: {}]
  %s11 = inlined_call_operand.vmem [shape: f32[2,1,32], index: 11, kind: input, shape index: {}]
  %s12 = inlined_call_operand.vmem [shape: f32[2,1,32], index: 12, kind: input, shape index: {}]
  %s13 = inlined_call_operand.vmem [shape: f32[2,1,32], index: 13, kind: input, shape index: {}]
  %s14 = inlined_call_operand.hbm [shape: bf16[2,32,2048], index: 14, kind: input, shape index: {}]
  %s15 = inlined_call_operand.vmem [shape: f32[2,1,2048], index: 15, kind: input, shape index: {}]
  %s16 = inlined_call_operand.hbm [shape: bf16[2,32,2048], index: 16, kind: input, shape index: {}]
  %s17 = inlined_call_operand.vmem [shape: f32[2,1,32], index: 17, kind: input, shape index: {}]
  %s18 = inlined_call_operand.vmem [shape: f32[2,1,32], index: 18, kind: input, shape index: {}]
  %s19 = inlined_call_operand.hbm [shape: f32[2,1,32], index: 19, kind: input, shape index: {}]
  %s20 = inlined_call_operand.vmem [shape: f32[2,1], index: 20, kind: output, shape index: {}]
  %s21 = sld [smem:[#allocation0]]
  $region149: #{vit_forward.1} parent=0
    _
  %s23 = ssub.s32 1, %s21
  %s24 = scalar_select 0, %s23, %s21
  %v25 = vstv %s7
  %26 = vst [vmem:[#allocation3] sm:$0x1] %v25
  $region1: #{vit_forward.1} parent=0
    #allocation4 [shape = 'u8[512]{0}', space=vmem, size = 0x400, scoped, tag = 'input window, operand 2, single buffered']
    #allocation5 [shape = 's32[2]{0}', space=sflag, size = 0x8, scoped, tag = 'scoped memory for vit_forward.1']
    #allocation6 [shape = 'u8[8192]{0}', space=vmem, size = 0x2000, scoped, tag = 'input window, operand 4, single buffered']
    #allocation7 [shape = 's32[1]{0}', space=sflag, size = 0x4, scoped, tag = 'scoped memory for vit_forward.1']
    #allocation8 [shape = 'u8[32768]{0}', space=vmem, size = 0x8000, scoped, tag = 'input window, operand 8']
    #allocation9 [shape = 'u8[32768]{0}', space=vmem, size = 0x8000, scoped, tag = 'input window, operand 10']
    #allocation10 [shape = 'u8[262144]{0}', space=vmem, size = 0x40000, scoped, tag = 'input window, operand 14']
    #allocation11 [shape = 'u8[262144]{0}', space=vmem, size = 0x40000, scoped, tag = 'input window, operand 16']
    #allocation12 [shape = 'u8[1024]{0}', space=vmem, size = 0x400, scoped, tag = 'input window, operand 19']
    %27 = vsyncpa [#allocation5], 0
    %28 = vsyncpa [#allocation7], 0
    loop: start=0, step=1, limit=4
    $region2: #{vit_forward.1} parent=1 // loop_pre_header
      _
    $region3: #{vit_forward.1} parent=1 // loop_header
      %s30 = sphi 0, %s34
      %p31 = scmp.ge.s32.totalorder %s30, 4
      %s38 = sphi 0, %s38
      %s40 = sphi 0, %s38
      %s41 = sphi 0, %s40
      %s55 = sphi 0, %s41
      %s59 = sphi 0, %s59
      %s61 = sphi 0, %s59
      %s62 = sphi 0, %s61
      %s76 = sphi 0, %s62
      %s80 = sphi 0, %s80
      %s82 = sphi 0, %s80
      %s83 = sphi 0, %s82
      %s97 = sphi 0, %s83
      %s101 = sphi 0, %s101
      %s103 = sphi 0, %s101
      %s104 = sphi 0, %s103
      %s118 = sphi 0, %s104
      %s122 = sphi 0, %s122
      %s124 = sphi 0, %s122
      %s125 = sphi 0, %s124
      %s139 = sphi 0, %s125
      %s143 = sphi 0, %s143
      %s145 = sphi 0, %s143
      %s146 = sphi 0, %s145
      %s160 = sphi 0, %s146
      %s164 = sphi 0, %s164
      %s166 = sphi 0, %s164
      %s167 = sphi 0, %s166
      %s181 = sphi 0, %s167
      %s185 = sphi 0, %s185
      %s187 = sphi 0, %s185
      %s188 = sphi 0, %s187
      %s202 = sphi 0, %s188
      %s208 = sphi 0, %s210
      %s211 = sphi 0, %s208
      %s212 = sphi 0, %s211
      %s228 = sphi 0, %s212
      %s234 = sphi 0, %s236
      %s237 = sphi 0, %s234
      %s238 = sphi 0, %s237
      %s254 = sphi 0, %s238
      %s260 = sphi 0, %s262
      %s263 = sphi 0, %s260
      %s264 = sphi 0, %s263
      %s280 = sphi 0, %s264
      %s286 = sphi 0, %s288
      %s289 = sphi 0, %s286
      %s290 = sphi 0, %s289
      %s306 = sphi 0, %s290
      %s312 = sphi 0, %s314
      %s315 = sphi 0, %s312
      %s316 = sphi 0, %s315
      %s332 = sphi 0, %s316
      %s338 = sphi 0, %s340
      %s341 = sphi 0, %s338
      %s342 = sphi 0, %s341
      %s358 = sphi 0, %s342
      %s364 = sphi 0, %s366
      %s367 = sphi 0, %s364
      %s368 = sphi 0, %s367
      %s384 = sphi 0, %s368
      %s390 = sphi 0, %s392
      %s393 = sphi 0, %s390
      %s394 = sphi 0, %s393
      %s410 = sphi 0, %s394
      %s416 = sphi 0, %s418
      %s419 = sphi 0, %s416
      %s420 = sphi 0, %s419
      %s436 = sphi 0, %s420
      %s442 = sphi 0, %s444
      %s445 = sphi 0, %s442
      %s446 = sphi 0, %s445
      %s462 = sphi 0, %s446
      %s468 = sphi 0, %s470
      %s471 = sphi 0, %s468
      %s472 = sphi 0, %s471
      %s488 = sphi 0, %s472
      %s494 = sphi 0, %s496
      %s497 = sphi 0, %s494
      %s498 = sphi 0, %s497
      %s514 = sphi 0, %s498
      %s518 = sphi 0, %s518
      %s520 = sphi 0, %s518
      %s521 = sphi 0, %s520
      %s535 = sphi 0, %s521
    $region4: #{vit_forward.1} parent=1 // loop_header_branch
      %33 = sbr.rel (%p31) target = $region8
    $region5: #{vit_forward.1} parent=1 // loop_body
      %s35 = ssub.s32 %s30, 1
      %s36 = ssub.s32 %s30, 2
      %s37 = sadd.s32 %s30, 1
      %s39 = sadd.s32 %s38, 1
      %p42 = scmp.eq.s32.totalorder %s30, 1
      %p43 = scmp.ne.s32.totalorder %s38, %s40
      %p44 = scmp.eq.s32.totalorder %s30, 0
      %p45 = por %p43, %p44
      %p46 = scmp.ne.s32.totalorder %s38, %s40
      %p47 = scmp.eq.s32.totalorder %s35, 1
      %p48 = por %p46, %p47
      %p49 = scmp.ne.s32.totalorder %s40, %s41
      %p50 = scmp.eq.s32.totalorder %s35, 0
      %p51 = por %p49, %p50
      %p52 = scmp.ne.s32.totalorder %s40, %s41
      %p53 = scmp.eq.s32.totalorder %s36, 1
      %p54 = por %p52, %p53
      %p56 = scmp.ne.s32.totalorder %s41, %s55
      %p57 = scmp.eq.s32.totalorder %s36, 0
      %p58 = por %p56, %p57
      %s60 = sadd.s32 %s59, 1
      %p63 = scmp.eq.s32.totalorder %s30, 1
      %p64 = scmp.ne.s32.totalorder %s59, %s61
      %p65 = scmp.eq.s32.totalorder %s30, 0
      %p66 = por %p64, %p65
      %p67 = scmp.ne.s32.totalorder %s59, %s61
      %p68 = scmp.eq.s32.totalorder %s35, 1
      %p69 = por %p67, %p68
      %p70 = scmp.ne.s32.totalorder %s61, %s62
      %p71 = scmp.eq.s32.totalorder %s35, 0
      %p72 = por %p70, %p71
      %p73 = scmp.ne.s32.totalorder %s61, %s62
      %p74 = scmp.eq.s32.totalorder %s36, 1
      %p75 = por %p73, %p74
      %p77 = scmp.ne.s32.totalorder %s62, %s76
      %p78 = scmp.eq.s32.totalorder %s36, 0
      %p79 = por %p77, %p78
      %s81 = sadd.s32 %s80, 1
      %p84 = scmp.eq.s32.totalorder %s30, 1
      %p85 = scmp.ne.s32.totalorder %s80, %s82
      %p86 = scmp.eq.s32.totalorder %s30, 0
      %p87 = por %p85, %p86
      %p88 = scmp.ne.s32.totalorder %s80, %s82
      %p89 = scmp.eq.s32.totalorder %s35, 1
      %p90 = por %p88, %p89
      %p91 = scmp.ne.s32.totalorder %s82, %s83
      %p92 = scmp.eq.s32.totalorder %s35, 0
      %p93 = por %p91, %p92
      %p94 = scmp.ne.s32.totalorder %s82, %s83
      %p95 = scmp.eq.s32.totalorder %s36, 1
      %p96 = por %p94, %p95
      %p98 = scmp.ne.s32.totalorder %s83, %s97
      %p99 = scmp.eq.s32.totalorder %s36, 0
      %p100 = por %p98, %p99
      %s102 = sadd.s32 %s101, 1
      %p105 = scmp.eq.s32.totalorder %s30, 1
      %p106 = scmp.ne.s32.totalorder %s101, %s103
      %p107 = scmp.eq.s32.totalorder %s30, 0
      %p108 = por %p106, %p107
      %p109 = scmp.ne.s32.totalorder %s101, %s103
      %p110 = scmp.eq.s32.totalorder %s35, 1
      %p111 = por %p109, %p110
      %p112 = scmp.ne.s32.totalorder %s103, %s104
      %p113 = scmp.eq.s32.totalorder %s35, 0
      %p114 = por %p112, %p113
      %p115 = scmp.ne.s32.totalorder %s103, %s104
      %p116 = scmp.eq.s32.totalorder %s36, 1
      %p117 = por %p115, %p116
      %p119 = scmp.ne.s32.totalorder %s104, %s118
      %p120 = scmp.eq.s32.totalorder %s36, 0
      %p121 = por %p119, %p120
      %s123 = sadd.s32 %s122, 1
      %p126 = scmp.eq.s32.totalorder %s30, 1
      %p127 = scmp.ne.s32.totalorder %s122, %s124
      %p128 = scmp.eq.s32.totalorder %s30, 0
      %p129 = por %p127, %p128
      %p130 = scmp.ne.s32.totalorder %s122, %s124
      %p131 = scmp.eq.s32.totalorder %s35, 1
      %p132 = por %p130, %p131
      %p133 = scmp.ne.s32.totalorder %s124, %s125
      %p134 = scmp.eq.s32.totalorder %s35, 0
      %p135 = por %p133, %p134
      %p136 = scmp.ne.s32.totalorder %s124, %s125
      %p137 = scmp.eq.s32.totalorder %s36, 1
      %p138 = por %p136, %p137
      %p140 = scmp.ne.s32.totalorder %s125, %s139
      %p141 = scmp.eq.s32.totalorder %s36, 0
      %p142 = por %p140, %p141
      %s144 = sadd.s32 %s143, 1
      %p147 = scmp.eq.s32.totalorder %s30, 1
      %p148 = scmp.ne.s32.totalorder %s143, %s145
      %p149 = scmp.eq.s32.totalorder %s30, 0
      %p150 = por %p148, %p149
      %p151 = scmp.ne.s32.totalorder %s143, %s145
      %p152 = scmp.eq.s32.totalorder %s35, 1
      %p153 = por %p151, %p152
      %p154 = scmp.ne.s32.totalorder %s145, %s146
      %p155 = scmp.eq.s32.totalorder %s35, 0
      %p156 = por %p154, %p155
      %p157 = scmp.ne.s32.totalorder %s145, %s146
      %p158 = scmp.eq.s32.totalorder %s36, 1
      %p159 = por %p157, %p158
      %p161 = scmp.ne.s32.totalorder %s146, %s160
      %p162 = scmp.eq.s32.totalorder %s36, 0
      %p163 = por %p161, %p162
      %s165 = sadd.s32 %s164, 1
      %p168 = scmp.eq.s32.totalorder %s30, 1
      %p169 = scmp.ne.s32.totalorder %s164, %s166
      %p170 = scmp.eq.s32.totalorder %s30, 0
      %p171 = por %p169, %p170
      %p172 = scmp.ne.s32.totalorder %s164, %s166
      %p173 = scmp.eq.s32.totalorder %s35, 1
      %p174 = por %p172, %p173
      %p175 = scmp.ne.s32.totalorder %s166, %s167
      %p176 = scmp.eq.s32.totalorder %s35, 0
      %p177 = por %p175, %p176
      %p178 = scmp.ne.s32.totalorder %s166, %s167
      %p179 = scmp.eq.s32.totalorder %s36, 1
      %p180 = por %p178, %p179
      %p182 = scmp.ne.s32.totalorder %s167, %s181
      %p183 = scmp.eq.s32.totalorder %s36, 0
      %p184 = por %p182, %p183
      %s186 = sadd.s32 %s185, 1
      %p189 = scmp.eq.s32.totalorder %s30, 1
      %p190 = scmp.ne.s32.totalorder %s185, %s187
      %p191 = scmp.eq.s32.totalorder %s30, 0
      %p192 = por %p190, %p191
      %p193 = scmp.ne.s32.totalorder %s185, %s187
      %p194 = scmp.eq.s32.totalorder %s35, 1
      %p195 = por %p193, %p194
      %p196 = scmp.ne.s32.totalorder %s187, %s188
      %p197 = scmp.eq.s32.totalorder %s35, 0
      %p198 = por %p196, %p197
      %p199 = scmp.ne.s32.totalorder %s187, %s188
      %p200 = scmp.eq.s32.totalorder %s36, 1
      %p201 = por %p199, %p200
      %p203 = scmp.ne.s32.totalorder %s188, %s202
      %p204 = scmp.eq.s32.totalorder %s36, 0
      %p205 = por %p203, %p204
      %s206 = ssub.s32 %s30, %s37
      %p207 = scmp.eq.s32.totalorder %s206, 0
      %s209 = sadd.s32 %s208, 1
      %s210 = scalar_select %p207, %s208, %s209
      %p213 = pneg %p207
      %p214 = scmp.eq.s32.totalorder %s30, 1
      %p215 = por %p213, %p214
      %p216 = scmp.ne.s32.totalorder %s208, %s211
      %p217 = scmp.eq.s32.totalorder %s30, 0
      %p218 = por %p216, %p217
      %p219 = scmp.ne.s32.totalorder %s208, %s211
      %p220 = scmp.eq.s32.totalorder %s35, 1
      %p221 = por %p219, %p220
      %p222 = scmp.ne.s32.totalorder %s211, %s212
      %p223 = scmp.eq.s32.totalorder %s35, 0
      %p224 = por %p222, %p223
      %p225 = scmp.ne.s32.totalorder %s211, %s212
      %p226 = scmp.eq.s32.totalorder %s36, 1
      %p227 = por %p225, %p226
      %p229 = scmp.ne.s32.totalorder %s212, %s228
      %p230 = scmp.eq.s32.totalorder %s36, 0
      %p231 = por %p229, %p230
      %s232 = ssub.s32 %s30, %s37
      %p233 = scmp.eq.s32.totalorder %s232, 0
      %s235 = sadd.s32 %s234, 1
      %s236 = scalar_select %p233, %s234, %s235
      %p239 = pneg %p233
      %p240 = scmp.eq.s32.totalorder %s30, 1
      %p241 = por %p239, %p240
      %p242 = scmp.ne.s32.totalorder %s234, %s237
      %p243 = scmp.eq.s32.totalorder %s30, 0
      %p244 = por %p242, %p243
      %p245 = scmp.ne.s32.totalorder %s234, %s237
      %p246 = scmp.eq.s32.totalorder %s35, 1
      %p247 = por %p245, %p246
      %p248 = scmp.ne.s32.totalorder %s237, %s238
      %p249 = scmp.eq.s32.totalorder %s35, 0
      %p250 = por %p248, %p249
      %p251 = scmp.ne.s32.totalorder %s237, %s238
      %p252 = scmp.eq.s32.totalorder %s36, 1
      %p253 = por %p251, %p252
      %p255 = scmp.ne.s32.totalorder %s238, %s254
      %p256 = scmp.eq.s32.totalorder %s36, 0
      %p257 = por %p255, %p256
      %s258 = ssub.s32 %s30, %s37
      %p259 = scmp.eq.s32.totalorder %s258, 0
      %s261 = sadd.s32 %s260, 1
      %s262 = scalar_select %p259, %s260, %s261
      %p265 = pneg %p259
      %p266 = scmp.eq.s32.totalorder %s30, 1
      %p267 = por %p265, %p266
      %p268 = scmp.ne.s32.totalorder %s260, %s263
      %p269 = scmp.eq.s32.totalorder %s30, 0
      %p270 = por %p268, %p269
      %p271 = scmp.ne.s32.totalorder %s260, %s263
      %p272 = scmp.eq.s32.totalorder %s35, 1
      %p273 = por %p271, %p272
      %p274 = scmp.ne.s32.totalorder %s263, %s264
      %p275 = scmp.eq.s32.totalorder %s35, 0
      %p276 = por %p274, %p275
      %p277 = scmp.ne.s32.totalorder %s263, %s264
      %p278 = scmp.eq.s32.totalorder %s36, 1
      %p279 = por %p277, %p278
      %p281 = scmp.ne.s32.totalorder %s264, %s280
      %p282 = scmp.eq.s32.totalorder %s36, 0
      %p283 = por %p281, %p282
      %s284 = ssub.s32 %s30, %s37
      %p285 = scmp.eq.s32.totalorder %s284, 0
      %s287 = sadd.s32 %s286, 1
      %s288 = scalar_select %p285, %s286, %s287
      %p291 = pneg %p285
      %p292 = scmp.eq.s32.totalorder %s30, 1
      %p293 = por %p291, %p292
      %p294 = scmp.ne.s32.totalorder %s286, %s289
      %p295 = scmp.eq.s32.totalorder %s30, 0
      %p296 = por %p294, %p295
      %p297 = scmp.ne.s32.totalorder %s286, %s289
      %p298 = scmp.eq.s32.totalorder %s35, 1
      %p299 = por %p297, %p298
      %p300 = scmp.ne.s32.totalorder %s289, %s290
      %p301 = scmp.eq.s32.totalorder %s35, 0
      %p302 = por %p300, %p301
      %p303 = scmp.ne.s32.totalorder %s289, %s290
      %p304 = scmp.eq.s32.totalorder %s36, 1
      %p305 = por %p303, %p304
      %p307 = scmp.ne.s32.totalorder %s290, %s306
      %p308 = scmp.eq.s32.totalorder %s36, 0
      %p309 = por %p307, %p308
      %s310 = ssub.s32 %s30, %s37
      %p311 = scmp.eq.s32.totalorder %s310, 0
      %s313 = sadd.s32 %s312, 1
      %s314 = scalar_select %p311, %s312, %s313
      %p317 = pneg %p311
      %p318 = scmp.eq.s32.totalorder %s30, 1
      %p319 = por %p317, %p318
      %p320 = scmp.ne.s32.totalorder %s312, %s315
      %p321 = scmp.eq.s32.totalorder %s30, 0
      %p322 = por %p320, %p321
      %p323 = scmp.ne.s32.totalorder %s312, %s315
      %p324 = scmp.eq.s32.totalorder %s35, 1
      %p325 = por %p323, %p324
      %p326 = scmp.ne.s32.totalorder %s315, %s316
      %p327 = scmp.eq.s32.totalorder %s35, 0
      %p328 = por %p326, %p327
      %p329 = scmp.ne.s32.totalorder %s315, %s316
      %p330 = scmp.eq.s32.totalorder %s36, 1
      %p331 = por %p329, %p330
      %p333 = scmp.ne.s32.totalorder %s316, %s332
      %p334 = scmp.eq.s32.totalorder %s36, 0
      %p335 = por %p333, %p334
      %s336 = ssub.s32 %s30, %s37
      %p337 = scmp.eq.s32.totalorder %s336, 0
      %s339 = sadd.s32 %s338, 1
      %s340 = scalar_select %p337, %s338, %s339
      %p343 = pneg %p337
      %p344 = scmp.eq.s32.totalorder %s30, 1
      %p345 = por %p343, %p344
      %p346 = scmp.ne.s32.totalorder %s338, %s341
      %p347 = scmp.eq.s32.totalorder %s30, 0
      %p348 = por %p346, %p347
      %p349 = scmp.ne.s32.totalorder %s338, %s341
      %p350 = scmp.eq.s32.totalorder %s35, 1
      %p351 = por %p349, %p350
      %p352 = scmp.ne.s32.totalorder %s341, %s342
      %p353 = scmp.eq.s32.totalorder %s35, 0
      %p354 = por %p352, %p353
      %p355 = scmp.ne.s32.totalorder %s341, %s342
      %p356 = scmp.eq.s32.totalorder %s36, 1
      %p357 = por %p355, %p356
      %p359 = scmp.ne.s32.totalorder %s342, %s358
      %p360 = scmp.eq.s32.totalorder %s36, 0
      %p361 = por %p359, %p360
      %s362 = ssub.s32 %s30, %s37
      %p363 = scmp.eq.s32.totalorder %s362, 0
      %s365 = sadd.s32 %s364, 1
      %s366 = scalar_select %p363, %s364, %s365
      %p369 = pneg %p363
      %p370 = scmp.eq.s32.totalorder %s30, 1
      %p371 = por %p369, %p370
      %p372 = scmp.ne.s32.totalorder %s364, %s367
      %p373 = scmp.eq.s32.totalorder %s30, 0
      %p374 = por %p372, %p373
      %p375 = scmp.ne.s32.totalorder %s364, %s367
      %p376 = scmp.eq.s32.totalorder %s35, 1
      %p377 = por %p375, %p376
      %p378 = scmp.ne.s32.totalorder %s367, %s368
      %p379 = scmp.eq.s32.totalorder %s35, 0
      %p380 = por %p378, %p379
      %p381 = scmp.ne.s32.totalorder %s367, %s368
      %p382 = scmp.eq.s32.totalorder %s36, 1
      %p383 = por %p381, %p382
      %p385 = scmp.ne.s32.totalorder %s368, %s384
      %p386 = scmp.eq.s32.totalorder %s36, 0
      %p387 = por %p385, %p386
      %s388 = ssub.s32 %s30, %s37
      %p389 = scmp.eq.s32.totalorder %s388, 0
      %s391 = sadd.s32 %s390, 1
      %s392 = scalar_select %p389, %s390, %s391
      %p395 = pneg %p389
      %p396 = scmp.eq.s32.totalorder %s30, 1
      %p397 = por %p395, %p396
      %p398 = scmp.ne.s32.totalorder %s390, %s393
      %p399 = scmp.eq.s32.totalorder %s30, 0
      %p400 = por %p398, %p399
      %p401 = scmp.ne.s32.totalorder %s390, %s393
      %p402 = scmp.eq.s32.totalorder %s35, 1
      %p403 = por %p401, %p402
      %p404 = scmp.ne.s32.totalorder %s393, %s394
      %p405 = scmp.eq.s32.totalorder %s35, 0
      %p406 = por %p404, %p405
      %p407 = scmp.ne.s32.totalorder %s393, %s394
      %p408 = scmp.eq.s32.totalorder %s36, 1
      %p409 = por %p407, %p408
      %p411 = scmp.ne.s32.totalorder %s394, %s410
      %p412 = scmp.eq.s32.totalorder %s36, 0
      %p413 = por %p411, %p412
      %s414 = ssub.s32 %s30, %s37
      %p415 = scmp.eq.s32.totalorder %s414, 0
      %s417 = sadd.s32 %s416, 1
      %s418 = scalar_select %p415, %s416, %s417
      %p421 = pneg %p415
      %p422 = scmp.eq.s32.totalorder %s30, 1
      %p423 = por %p421, %p422
      %p424 = scmp.ne.s32.totalorder %s416, %s419
      %p425 = scmp.eq.s32.totalorder %s30, 0
      %p426 = por %p424, %p425
      %p427 = scmp.ne.s32.totalorder %s416, %s419
      %p428 = scmp.eq.s32.totalorder %s35, 1
      %p429 = por %p427, %p428
      %p430 = scmp.ne.s32.totalorder %s419, %s420
      %p431 = scmp.eq.s32.totalorder %s35, 0
      %p432 = por %p430, %p431
      %p433 = scmp.ne.s32.totalorder %s419, %s420
      %p434 = scmp.eq.s32.totalorder %s36, 1
      %p435 = por %p433, %p434
      %p437 = scmp.ne.s32.totalorder %s420, %s436
      %p438 = scmp.eq.s32.totalorder %s36, 0
      %p439 = por %p437, %p438
      %s440 = ssub.s32 %s30, %s37
      %p441 = scmp.eq.s32.totalorder %s440, 0
      %s443 = sadd.s32 %s442, 1
      %s444 = scalar_select %p441, %s442, %s443
      %p447 = pneg %p441
      %p448 = scmp.eq.s32.totalorder %s30, 1
      %p449 = por %p447, %p448
      %p450 = scmp.ne.s32.totalorder %s442, %s445
      %p451 = scmp.eq.s32.totalorder %s30, 0
      %p452 = por %p450, %p451
      %p453 = scmp.ne.s32.totalorder %s442, %s445
      %p454 = scmp.eq.s32.totalorder %s35, 1
      %p455 = por %p453, %p454
      %p456 = scmp.ne.s32.totalorder %s445, %s446
      %p457 = scmp.eq.s32.totalorder %s35, 0
      %p458 = por %p456, %p457
      %p459 = scmp.ne.s32.totalorder %s445, %s446
      %p460 = scmp.eq.s32.totalorder %s36, 1
      %p461 = por %p459, %p460
      %p463 = scmp.ne.s32.totalorder %s446, %s462
      %p464 = scmp.eq.s32.totalorder %s36, 0
      %p465 = por %p463, %p464
      %s466 = ssub.s32 %s30, %s37
      %p467 = scmp.eq.s32.totalorder %s466, 0
      %s469 = sadd.s32 %s468, 1
      %s470 = scalar_select %p467, %s468, %s469
      %p473 = pneg %p467
      %p474 = scmp.eq.s32.totalorder %s30, 1
      %p475 = por %p473, %p474
      %p476 = scmp.ne.s32.totalorder %s468, %s471
      %p477 = scmp.eq.s32.totalorder %s30, 0
      %p478 = por %p476, %p477
      %p479 = scmp.ne.s32.totalorder %s468, %s471
      %p480 = scmp.eq.s32.totalorder %s35, 1
      %p481 = por %p479, %p480
      %p482 = scmp.ne.s32.totalorder %s471, %s472
      %p483 = scmp.eq.s32.totalorder %s35, 0
      %p484 = por %p482, %p483
      %p485 = scmp.ne.s32.totalorder %s471, %s472
      %p486 = scmp.eq.s32.totalorder %s36, 1
      %p487 = por %p485, %p486
      %p489 = scmp.ne.s32.totalorder %s472, %s488
      %p490 = scmp.eq.s32.totalorder %s36, 0
      %p491 = por %p489, %p490
      %s492 = ssub.s32 %s30, %s37
      %p493 = scmp.eq.s32.totalorder %s492, 0
      %s495 = sadd.s32 %s494, 1
      %s496 = scalar_select %p493, %s494, %s495
      %p499 = pneg %p493
      %p500 = scmp.eq.s32.totalorder %s30, 1
      %p501 = por %p499, %p500
      %p502 = scmp.ne.s32.totalorder %s494, %s497
      %p503 = scmp.eq.s32.totalorder %s30, 0
      %p504 = por %p502, %p503
      %p505 = scmp.ne.s32.totalorder %s494, %s497
      %p506 = scmp.eq.s32.totalorder %s35, 1
      %p507 = por %p505, %p506
      %p508 = scmp.ne.s32.totalorder %s497, %s498
      %p509 = scmp.eq.s32.totalorder %s35, 0
      %p510 = por %p508, %p509
      %p511 = scmp.ne.s32.totalorder %s497, %s498
      %p512 = scmp.eq.s32.totalorder %s36, 1
      %p513 = por %p511, %p512
      %p515 = scmp.ne.s32.totalorder %s498, %s514
      %p516 = scmp.eq.s32.totalorder %s36, 0
      %p517 = por %p515, %p516
      %s519 = sadd.s32 %s518, 1
      %p522 = scmp.eq.s32.totalorder %s30, 1
      %p523 = scmp.ne.s32.totalorder %s518, %s520
      %p524 = scmp.eq.s32.totalorder %s30, 0
      %p525 = por %p523, %p524
      %p526 = scmp.ne.s32.totalorder %s518, %s520
      %p527 = scmp.eq.s32.totalorder %s35, 1
      %p528 = por %p526, %p527
      %p529 = scmp.ne.s32.totalorder %s520, %s521
      %p530 = scmp.eq.s32.totalorder %s35, 0
      %p531 = por %p529, %p530
      %p532 = scmp.ne.s32.totalorder %s520, %s521
      %p533 = scmp.eq.s32.totalorder %s36, 1
      %p534 = por %p532, %p533
      %p536 = scmp.ne.s32.totalorder %s521, %s535
      %p537 = scmp.eq.s32.totalorder %s36, 0
      %p538 = por %p536, %p537
      %p539 = scmp.le.s32.totalorder 1, %s30
      %p540 = scmp.lt.s32.totalorder %s30, 3
      %p541 = pnand %p539, %p540
      %p542 = pneg %p541
      // Predicated region
      $region9: #{vit_forward.1} parent=5 // pred_check
        _
      $region10: #{vit_forward.1} parent=5 // pred_check_branch
        %544 = sbr.rel (%p541) target = $region12
      $region11: #{vit_forward.1} parent=5 // pred_region
        %s545 = ssub.s32 %s30, 1
        // Predicated region
        $region13: #{vit_forward.1} parent=11 // pred_check
          %p546 = pneg %p51
        $region14: #{vit_forward.1} parent=11 // pred_check_branch
          %548 = sbr.rel (%p546) target = $region16
        $region15: #{vit_forward.1} parent=11 // pred_region
          _
        $region16: #{vit_forward.1} parent=11 // pred_fallthru
          _
        // Predicated region
        $region17: #{vit_forward.1} parent=11 // pred_check
          %p549 = pneg %p72
        $region18: #{vit_forward.1} parent=11 // pred_check_branch
          %551 = sbr.rel (%p549) target = $region20
        $region19: #{vit_forward.1} parent=11 // pred_region
          _
        $region20: #{vit_forward.1} parent=11 // pred_fallthru
          _
        // Predicated region
        $region21: #{vit_forward.1} parent=11 // pred_check
          %p552 = pneg %p93
        $region22: #{vit_forward.1} parent=11 // pred_check_branch
          %554 = sbr.rel (%p552) target = $region24
        $region23: #{vit_forward.1} parent=11 // pred_region
          %556 = vsyncadd [#allocation5], 0
          %s558 = sshll.u32 %s2, 4
          %s559 = int_to_ptr.hbm [resolvable:$true] %s558
          %s560 = sshll.u32 [#allocation4], 4
          %s561 = int_to_ptr.vmem [resolvable:$true] %s560
          %563 = dma.hbm_to_vmem [thread:$0]  %s559, 16, %s561, [#allocation5]
        $region24: #{vit_forward.1} parent=11 // pred_fallthru
          _
        // Predicated region
        $region25: #{vit_forward.1} parent=11 // pred_check
          %p564 = pneg %p114
        $region26: #{vit_forward.1} parent=11 // pred_check_branch
          %566 = sbr.rel (%p564) target = $region28
        $region27: #{vit_forward.1} parent=11 // pred_region
          _
        $region28: #{vit_forward.1} parent=11 // pred_fallthru
          _
        // Predicated region
        $region29: #{vit_forward.1} parent=11 // pred_check
          %p567 = pneg %p135
        $region30: #{vit_forward.1} parent=11 // pred_check_branch
          %569 = sbr.rel (%p567) target = $region32
        $region31: #{vit_forward.1} parent=11 // pred_region
          %571 = vsyncadd [#allocation7], 0
          %s572 = sshll.u32 %s4, 4
          %s573 = int_to_ptr.hbm [resolvable:$true] %s572
          %s574 = sshll.u32 [#allocation6], 4
          %s575 = int_to_ptr.vmem [resolvable:$true] %s574
          %580 = dma.hbm_to_vmem [thread:$0]  %s573, 256, %s575, [#allocation7], 128, 128, 8
        $region32: #{vit_forward.1} parent=11 // pred_fallthru
          _
        // Predicated region
        $region33: #{vit_forward.1} parent=11 // pred_check
          %p581 = pneg %p156
        $region34: #{vit_forward.1} parent=11 // pred_check_branch
          %583 = sbr.rel (%p581) target = $region36
        $region35: #{vit_forward.1} parent=11 // pred_region
          _
        $region36: #{vit_forward.1} parent=11 // pred_fallthru
          _
        // Predicated region
        $region37: #{vit_forward.1} parent=11 // pred_check
          %p584 = pneg %p177
        $region38: #{vit_forward.1} parent=11 // pred_check_branch
          %586 = sbr.rel (%p584) target = $region40
        $region39: #{vit_forward.1} parent=11 // pred_region
          _
        $region40: #{vit_forward.1} parent=11 // pred_fallthru
          _
        // Predicated region
        $region41: #{vit_forward.1} parent=11 // pred_check
          %p587 = pneg %p198
        $region42: #{vit_forward.1} parent=11 // pred_check_branch
          %589 = sbr.rel (%p587) target = $region44
        $region43: #{vit_forward.1} parent=11 // pred_region
          _
        $region44: #{vit_forward.1} parent=11 // pred_fallthru
          _
      $region12: #{vit_forward.1} parent=5 // pred_fallthru
        _
      %p590 = scmp.lt.s32.totalorder %s30, 2
      // Predicated region
      $region45: #{vit_forward.1} parent=5 // pred_check
        %p591 = pneg %p590
      $region46: #{vit_forward.1} parent=5 // pred_check_branch
        %593 = sbr.rel (%p591) target = $region48
      $region47: #{vit_forward.1} parent=5 // pred_region
        // Predicated region
        $region49: #{vit_forward.1} parent=47 // pred_check
          %p594 = pneg %p218
        $region50: #{vit_forward.1} parent=47 // pred_check_branch
          %596 = sbr.rel (%p594) target = $region52
        $region51: #{vit_forward.1} parent=47 // pred_region
          %s597 = sand.u32 %s30, 1
          %s598 = scalar_lea.sflag [#allocation5], %s597
          %s599 = sand.u32 %s208, 1
          %s600 = smul.addr %s599, 32
          %s601 = scalar_lea.vmem [#allocation8], %s600
          %603 = vsyncadd %s598, 0
          %s604 = smul.addr %s30, 4
          %s605 = smul.addr %s604, 8
          %s606 = scalar_lea.hbm %s8, %s605
          %s607 = sshll.u32 %s606, 4
          %s608 = int_to_ptr.hbm [resolvable:$true] %s607
          %s609 = sshll.u32 %s601, 4
          %s610 = int_to_ptr.vmem [resolvable:$true] %s609
          %615 = dma.hbm_to_vmem [thread:$0]  %s608, 512, %s610, %s598, 128, 128, 8
        $region52: #{vit_forward.1} parent=47 // pred_fallthru
          _
        // Predicated region
        $region53: #{vit_forward.1} parent=47 // pred_check
          %p616 = pneg %p244
        $region54: #{vit_forward.1} parent=47 // pred_check_branch
          %618 = sbr.rel (%p616) target = $region56
        $region55: #{vit_forward.1} parent=47 // pred_region
          %p619 = scmp.lt.s32.totalorder %s30, 1
          %s620 = scalar_select %p619, %s30, 1
          %s621 = scalar_lea.vmem %s9, %s620
        $region56: #{vit_forward.1} parent=47 // pred_fallthru
          _
        // Predicated region
        $region57: #{vit_forward.1} parent=47 // pred_check
          %p622 = pneg %p270
        $region58: #{vit_forward.1} parent=47 // pred_check_branch
          %624 = sbr.rel (%p622) target = $region60
        $region59: #{vit_forward.1} parent=47 // pred_region
          %s625 = sand.u32 %s30, 1
          %s626 = scalar_lea.sflag [#allocation5], %s625
          %s627 = sand.u32 %s260, 1
          %s628 = smul.addr %s627, 32
          %s629 = scalar_lea.vmem [#allocation9], %s628
          %631 = vsyncadd %s626, 0
          %s632 = smul.addr %s30, 4
          %s633 = smul.addr %s632, 8
          %s634 = scalar_lea.hbm %s10, %s633
          %s635 = sshll.u32 %s634, 4
          %s636 = int_to_ptr.hbm [resolvable:$true] %s635
          %s637 = sshll.u32 %s629, 4
          %s638 = int_to_ptr.vmem [resolvable:$true] %s637
          %643 = dma.hbm_to_vmem [thread:$0]  %s636, 512, %s638, %s626, 128, 128, 8
        $region60: #{vit_forward.1} parent=47 // pred_fallthru
          _
        // Predicated region
        $region61: #{vit_forward.1} parent=47 // pred_check
          %p644 = pneg %p296
        $region62: #{vit_forward.1} parent=47 // pred_check_branch
          %646 = sbr.rel (%p644) target = $region64
        $region63: #{vit_forward.1} parent=47 // pred_region
          %p647 = scmp.lt.s32.totalorder %s30, 1
          %s648 = scalar_select %p647, %s30, 1
          %s649 = scalar_lea.vmem %s11, %s648
        $region64: #{vit_forward.1} parent=47 // pred_fallthru
          _
        // Predicated region
        $region65: #{vit_forward.1} parent=47 // pred_check
          %p650 = pneg %p322
        $region66: #{vit_forward.1} parent=47 // pred_check_branch
          %652 = sbr.rel (%p650) target = $region68
        $region67: #{vit_forward.1} parent=47 // pred_region
          %p653 = scmp.lt.s32.totalorder %s30, 1
          %s654 = scalar_select %p653, %s30, 1
          %s655 = scalar_lea.vmem %s12, %s654
        $region68: #{vit_forward.1} parent=47 // pred_fallthru
          _
        // Predicated region
        $region69: #{vit_forward.1} parent=47 // pred_check
          %p656 = pneg %p348
        $region70: #{vit_forward.1} parent=47 // pred_check_branch
          %658 = sbr.rel (%p656) target = $region72
        $region71: #{vit_forward.1} parent=47 // pred_region
          %p659 = scmp.lt.s32.totalorder %s30, 1
          %s660 = scalar_select %p659, %s30, 1
          %s661 = scalar_lea.vmem %s13, %s660
        $region72: #{vit_forward.1} parent=47 // pred_fallthru
          _
        // Predicated region
        $region73: #{vit_forward.1} parent=47 // pred_check
          %p662 = pneg %p374
        $region74: #{vit_forward.1} parent=47 // pred_check_branch
          %664 = sbr.rel (%p662) target = $region76
        $region75: #{vit_forward.1} parent=47 // pred_region
          %s665 = sand.u32 %s30, 1
          %s666 = scalar_lea.sflag [#allocation5], %s665
          %s667 = sand.u32 %s364, 1
          %s668 = smul.addr %s667, 256
          %s669 = scalar_lea.vmem [#allocation10], %s668
          %671 = vsyncadd %s666, 0
          %s672 = smul.addr %s30, 64
          %s673 = smul.addr %s672, 4
          %s674 = scalar_lea.hbm %s14, %s673
          %s675 = sshll.u32 %s674, 4
          %s676 = int_to_ptr.hbm [resolvable:$true] %s675
          %s677 = sshll.u32 %s669, 4
          %s678 = int_to_ptr.vmem [resolvable:$true] %s677
          %683 = dma.hbm_to_vmem [thread:$0]  %s676, 4096, %s678, %s666, 1024, 1024, 64
        $region76: #{vit_forward.1} parent=47 // pred_fallthru
          _
        // Predicated region
        $region77: #{vit_forward.1} parent=47 // pred_check
          %p684 = pneg %p400
        $region78: #{vit_forward.1} parent=47 // pred_check_branch
          %686 = sbr.rel (%p684) target = $region80
        $region79: #{vit_forward.1} parent=47 // pred_region
          %p687 = scmp.lt.s32.totalorder %s30, 1
          %s688 = scalar_select %p687, %s30, 1
          %s689 = smul.addr %s688, 16
          %s690 = scalar_lea.vmem %s15, %s689
        $region80: #{vit_forward.1} parent=47 // pred_fallthru
          _
        // Predicated region
        $region81: #{vit_forward.1} parent=47 // pred_check
          %p691 = pneg %p426
        $region82: #{vit_forward.1} parent=47 // pred_check_branch
          %693 = sbr.rel (%p691) target = $region84
        $region83: #{vit_forward.1} parent=47 // pred_region
          %s694 = sand.u32 %s30, 1
          %s695 = scalar_lea.sflag [#allocation5], %s694
          %s696 = sand.u32 %s416, 1
          %s697 = smul.addr %s696, 256
          %s698 = scalar_lea.vmem [#allocation11], %s697
          %700 = vsyncadd %s695, 0
          %s701 = smul.addr %s30, 64
          %s702 = smul.addr %s701, 4
          %s703 = scalar_lea.hbm %s16, %s702
          %s704 = sshll.u32 %s703, 4
          %s705 = int_to_ptr.hbm [resolvable:$true] %s704
          %s706 = sshll.u32 %s698, 4
          %s707 = int_to_ptr.vmem [resolvable:$true] %s706
          %712 = dma.hbm_to_vmem [thread:$0]  %s705, 4096, %s707, %s695, 1024, 1024, 64
        $region84: #{vit_forward.1} parent=47 // pred_fallthru
          _
        // Predicated region
        $region85: #{vit_forward.1} parent=47 // pred_check
          %p713 = pneg %p452
        $region86: #{vit_forward.1} parent=47 // pred_check_branch
          %715 = sbr.rel (%p713) target = $region88
        $region87: #{vit_forward.1} parent=47 // pred_region
          %p716 = scmp.lt.s32.totalorder %s30, 1
          %s717 = scalar_select %p716, %s30, 1
          %s718 = scalar_lea.vmem %s17, %s717
        $region88: #{vit_forward.1} parent=47 // pred_fallthru
          _
        // Predicated region
        $region89: #{vit_forward.1} parent=47 // pred_check
          %p719 = pneg %p478
        $region90: #{vit_forward.1} parent=47 // pred_check_branch
          %721 = sbr.rel (%p719) target = $region92
        $region91: #{vit_forward.1} parent=47 // pred_region
          %p722 = scmp.lt.s32.totalorder %s30, 1
          %s723 = scalar_select %p722, %s30, 1
          %s724 = scalar_lea.vmem %s18, %s723
        $region92: #{vit_forward.1} parent=47 // pred_fallthru
          _
        // Predicated region
        $region93: #{vit_forward.1} parent=47 // pred_check
          %p725 = pneg %p504
        $region94: #{vit_forward.1} parent=47 // pred_check_branch
          %727 = sbr.rel (%p725) target = $region96
        $region95: #{vit_forward.1} parent=47 // pred_region
          %s728 = sand.u32 %s30, 1
          %s729 = scalar_lea.sflag [#allocation5], %s728
          %s730 = sand.u32 %s494, 1
          %s731 = scalar_lea.vmem [#allocation12], %s730
          %733 = vsyncadd %s729, 0
          %s734 = scalar_lea.hbm %s19, %s30
          %s736 = sshll.u32 %s734, 4
          %s737 = int_to_ptr.hbm [resolvable:$true] %s736
          %s738 = sshll.u32 %s731, 4
          %s739 = int_to_ptr.vmem [resolvable:$true] %s738
          %741 = dma.hbm_to_vmem [thread:$0]  %s737, 16, %s739, %s729
        $region96: #{vit_forward.1} parent=47 // pred_fallthru
          _
      $region48: #{vit_forward.1} parent=5 // pred_fallthru
        _
      %p742 = scmp.le.s32.totalorder 1, %s30
      %p743 = scmp.lt.s32.totalorder %s30, 3
      %p744 = pnand %p742, %p743
      %p745 = pneg %p744
      // Predicated region
      $region97: #{vit_forward.1} parent=5 // pred_check
        _
      $region98: #{vit_forward.1} parent=5 // pred_check_branch
        %747 = sbr.rel (%p744) target = $region100
      $region99: #{vit_forward.1} parent=5 // pred_region
        %s748 = ssub.s32 %s30, 1
        // Predicated region
        $region101: #{vit_forward.1} parent=99 // pred_check
          %p749 = pneg %p93
        $region102: #{vit_forward.1} parent=99 // pred_check_branch
          %751 = sbr.rel (%p749) target = $region104
        $region103: #{vit_forward.1} parent=99 // pred_region
          %753 = dma.done [#allocation5], 16
        $region104: #{vit_forward.1} parent=99 // pred_fallthru
          _
        // Predicated region
        $region105: #{vit_forward.1} parent=99 // pred_check
          %p754 = pneg %p135
        $region106: #{vit_forward.1} parent=99 // pred_check_branch
          %756 = sbr.rel (%p754) target = $region108
        $region107: #{vit_forward.1} parent=99 // pred_region
          %758 = dma.done [#allocation7], 256
        $region108: #{vit_forward.1} parent=99 // pred_fallthru
          _
        %s759 = sand.u32 %s35, 1
        %s760 = scalar_lea.sflag [#allocation5], %s759
        %s761 = sand.u32 %s211, 1
        %s762 = smul.addr %s761, 32
        %s763 = scalar_lea.vmem [#allocation8], %s762
        // Predicated region
        $region109: #{vit_forward.1} parent=99 // pred_check
          %p764 = pneg %p224
        $region110: #{vit_forward.1} parent=99 // pred_check_branch
          %766 = sbr.rel (%p764) target = $region112
        $region111: #{vit_forward.1} parent=99 // pred_region
          %768 = dma.done %s760, 512
        $region112: #{vit_forward.1} parent=99 // pred_fallthru
          _
        %s769 = sand.u32 %s35, 1
        %s770 = scalar_lea.sflag [#allocation5], %s769
        %s771 = sand.u32 %s263, 1
        %s772 = smul.addr %s771, 32
        %s773 = scalar_lea.vmem [#allocation9], %s772
        // Predicated region
        $region113: #{vit_forward.1} parent=99 // pred_check
          %p774 = pneg %p276
        $region114: #{vit_forward.1} parent=99 // pred_check_branch
          %776 = sbr.rel (%p774) target = $region116
        $region115: #{vit_forward.1} parent=99 // pred_region
          %778 = dma.done %s770, 512
        $region116: #{vit_forward.1} parent=99 // pred_fallthru
          _
        %s779 = sand.u32 %s35, 1
        %s780 = scalar_lea.sflag [#allocation5], %s779
        %s781 = sand.u32 %s367, 1
        %s782 = smul.addr %s781, 256
        %s783 = scalar_lea.vmem [#allocation10], %s782
        // Predicated region
        $region117: #{vit_forward.1} parent=99 // pred_check
          %p784 = pneg %p380
        $region118: #{vit_forward.1} parent=99 // pred_check_branch
          %786 = sbr.rel (%p784) target = $region120
        $region119: #{vit_forward.1} parent=99 // pred_region
          %788 = dma.done %s780, 4096
        $region120: #{vit_forward.1} parent=99 // pred_fallthru
          _
        %s789 = sand.u32 %s35, 1
        %s790 = scalar_lea.sflag [#allocation5], %s789
        %s791 = sand.u32 %s419, 1
        %s792 = smul.addr %s791, 256
        %s793 = scalar_lea.vmem [#allocation11], %s792
        // Predicated region
        $region121: #{vit_forward.1} parent=99 // pred_check
          %p794 = pneg %p432
        $region122: #{vit_forward.1} parent=99 // pred_check_branch
          %796 = sbr.rel (%p794) target = $region124
        $region123: #{vit_forward.1} parent=99 // pred_region
          %798 = dma.done %s790, 4096
        $region124: #{vit_forward.1} parent=99 // pred_fallthru
          _
        %s799 = sand.u32 %s35, 1
        %s800 = scalar_lea.sflag [#allocation5], %s799
        %s801 = sand.u32 %s497, 1
        %s802 = scalar_lea.vmem [#allocation12], %s801
        // Predicated region
        $region125: #{vit_forward.1} parent=99 // pred_check
          %p803 = pneg %p510
        $region126: #{vit_forward.1} parent=99 // pred_check_branch
          %805 = sbr.rel (%p803) target = $region128
        $region127: #{vit_forward.1} parent=99 // pred_region
          %807 = dma.done %s800, 16
        $region128: #{vit_forward.1} parent=99 // pred_fallthru
          _
        %p808 = pneg %p51
        %p809 = pneg %p48
        %p810 = pneg %p72
        %p811 = pneg %p69
        %p812 = pneg %p93
        %p813 = pneg %p90
        %p814 = pneg %p114
        %p815 = pneg %p111
        %p816 = pneg %p135
        %p817 = pneg %p132
        %p818 = pneg %p156
        %p819 = pneg %p153
        %p820 = pneg %p177
        %p821 = pneg %p174
        %p822 = pneg %p198
        %p823 = pneg %p195
        %s824 = sand.u32 %s35, 1
        %s825 = scalar_lea.sflag [#allocation5], %s824
        %s826 = sand.u32 %s211, 1
        %s827 = smul.addr %s826, 32
        %s828 = scalar_lea.vmem [#allocation8], %s827
        %p829 = pneg %p224
        %p830 = pneg %p221
        %p831 = scmp.lt.s32.totalorder %s35, 1
        %s832 = scalar_select %p831, %s35, 1
        %s833 = scalar_lea.vmem %s9, %s832
        %p834 = pneg %p250
        %p835 = pneg %p247
        %s836 = sand.u32 %s35, 1
        %s837 = scalar_lea.sflag [#allocation5], %s836
        %s838 = sand.u32 %s263, 1
        %s839 = smul.addr %s838, 32
        %s840 = scalar_lea.vmem [#allocation9], %s839
        %p841 = pneg %p276
        %p842 = pneg %p273
        %p843 = scmp.lt.s32.totalorder %s35, 1
        %s844 = scalar_select %p843, %s35, 1
        %s845 = scalar_lea.vmem %s11, %s844
        %p846 = pneg %p302
        %p847 = pneg %p299
        %p848 = scmp.lt.s32.totalorder %s35, 1
        %s849 = scalar_select %p848, %s35, 1
        %s850 = scalar_lea.vmem %s12, %s849
        %p851 = pneg %p328
        %p852 = pneg %p325
        %p853 = scmp.lt.s32.totalorder %s35, 1
        %s854 = scalar_select %p853, %s35, 1
        %s855 = scalar_lea.vmem %s13, %s854
        %p856 = pneg %p354
        %p857 = pneg %p351
        %s858 = sand.u32 %s35, 1
        %s859 = scalar_lea.sflag [#allocation5], %s858
        %s860 = sand.u32 %s367, 1
        %s861 = smul.addr %s860, 256
        %s862 = scalar_lea.vmem [#allocation10], %s861
        %p863 = pneg %p380
        %p864 = pneg %p377
        %p865 = scmp.lt.s32.totalorder %s35, 1
        %s866 = scalar_select %p865, %s35, 1
        %s867 = smul.addr %s866, 16
        %s868 = scalar_lea.vmem %s15, %s867
        %p869 = pneg %p406
        %p870 = pneg %p403
        %s871 = sand.u32 %s35, 1
        %s872 = scalar_lea.sflag [#allocation5], %s871
        %s873 = sand.u32 %s419, 1
        %s874 = smul.addr %s873, 256
        %s875 = scalar_lea.vmem [#allocation11], %s874
        %p876 = pneg %p432
        %p877 = pneg %p429
        %p878 = scmp.lt.s32.totalorder %s35, 1
        %s879 = scalar_select %p878, %s35, 1
        %s880 = scalar_lea.vmem %s17, %s879
        %p881 = pneg %p458
        %p882 = pneg %p455
        %p883 = scmp.lt.s32.totalorder %s35, 1
        %s884 = scalar_select %p883, %s35, 1
        %s885 = scalar_lea.vmem %s18, %s884
        %p886 = pneg %p484
        %p887 = pneg %p481
        %s888 = sand.u32 %s35, 1
        %s889 = scalar_lea.sflag [#allocation5], %s888
        %s890 = sand.u32 %s497, 1
        %s891 = scalar_lea.vmem [#allocation12], %s890
        %p892 = pneg %p510
        %p893 = pneg %p507
        %p894 = pneg %p531
        %p895 = pneg %p528
        %p896 = scmp.lt.s32.totalorder %s35, 1
        %s897 = scalar_select %p896, %s35, 1
        %s898 = scalar_lea.vmem %s9, %s897
        %p899 = scmp.lt.s32.totalorder %s35, 1
        %s900 = scalar_select %p899, %s35, 1
        %s901 = scalar_lea.vmem %s11, %s900
        %p902 = scmp.lt.s32.totalorder %s35, 1
        %s903 = scalar_select %p902, %s35, 1
        %s904 = scalar_lea.vmem %s12, %s903
        %p905 = scmp.lt.s32.totalorder %s35, 1
        %s906 = scalar_select %p905, %s35, 1
        %s907 = scalar_lea.vmem %s13, %s906
        %p908 = scmp.lt.s32.totalorder %s35, 1
        %s909 = scalar_select %p908, %s35, 1
        %s910 = smul.addr %s909, 16
        %s911 = scalar_lea.vmem %s15, %s910
        %p912 = scmp.lt.s32.totalorder %s35, 1
        %s913 = scalar_select %p912, %s35, 1
        %s914 = scalar_lea.vmem %s17, %s913
        %p915 = scmp.lt.s32.totalorder %s35, 1
        %s916 = scalar_select %p915, %s35, 1
        %s917 = scalar_lea.vmem %s18, %s916
        %p919 = scmp.eq.s32.totalorder %s35, 0
        // Predicated region
        $region129: #{vit_forward.1} parent=99 // pred_check
          %p920 = pneg %p919
        $region130: #{vit_forward.1} parent=99 // pred_check_branch
          %922 = sbr.rel (%p920) target = $region132
        $region131: #{vit_forward.1} parent=99 // pred_region
          %v923 = vld [vmem:[%s0] sm:$0xff]
          %v924 = vld [vmem:[%s0 + $0x8] sm:$0xff]
          %v925 = vld [vmem:[%s1] sm:$0x1]
          %927 = vset.pattern.permute.xlu0 0
          %928 = vperm.xlu0 %927, %v923
          %v929 = vpop.permute.xlu0 %928
          %932 = vset.pattern.permute.xlu0 0
          %933 = vperm.xlu0 %932, %v924
          %v934 = vpop.permute.xlu0 %933
          %v937 = vperm.slane %v925, 0
          %v939 = vmul.f32 %v929, %v937
          %v940 = vmul.f32 %v934, %v937
          %v941 = vld [vmem:[#allocation4] sm:$0x1]
          %v943 = vperm.slane %v941, 0
          %v945 = vadd.f32 %v939, %v943
          %v946 = vadd.f32 %v940, %v943
          %v947 = vld [vmem:[%s3] sm:$0xff]
          %v948 = vld [vmem:[%s3 + $0x8] sm:$0xff]
          %v949 = vadd.f32 %v945, %v947
          %v950 = vadd.f32 %v946, %v948
          %vm951 = vcmask 261120
          %952 = vst.msk [vmem:[#allocation2] sm:$0xff] %vm951, %v949
          %953 = vst.msk [vmem:[#allocation2 + $0x8] sm:$0xff] %vm951, %v950
        $region132: #{vit_forward.1} parent=99 // pred_fallthru
          _
        %v954 = vld [vmem:[#allocation2] sm:$0xff]
        %v955 = vld [vmem:[#allocation2 + $0x8] sm:$0xff]
        %v956 = vld [vmem:[#allocation6] sm:$0xff]
        %v957 = vld [vmem:[#allocation6 + $0x8] sm:$0xff]
        %v958 = vld [vmem:[%s763] sm:$0xff]
        %v959 = vld [vmem:[%s763 + $0x8] sm:$0xff]
        %v960 = vld [vmem:[%s763 + $0x10] sm:$0xff]
        %v961 = vld [vmem:[%s763 + $0x18] sm:$0xff]
        %v962 = vld [vmem:[%s898] sm:$0x1]
        %v964 = vperm.slane %v962, 0
        %vm966 = vcmask 261120
        %v968 = vsel %vm966, %v954, 0
        %v971 = vsel %vm966, %v955, 0
        %973 = vmatpush.msra.mxu0 0.0
        %974 = vmatpush.msra.mxu0 0.0
        %975 = vmatpush.msra.mxu0 0.0
        %976 = vmatpush.msra.mxu0 0.0
        %977 = vmatpush.msra.mxu0 0.0
        %978 = vmatpush.msra.mxu0 0.0
        %979 = vmatpush.msra.mxu0 0.0
        %980 = vmatpush.msra.mxu0 0.0
        %981 = vmatpush.msra.mxu0 0.0
        %982 = vmatpush.msra.mxu0 0.0
        %983 = vmatpush.msra.mxu0 0.0
        %984 = vmatpush.msra.mxu0 0.0
        %985 = vmatpush.msra.mxu0 %v961
        %986 = vmatpush.msra.mxu0 %v960
        %987 = vmatpush.msra.mxu0 %v959
        %988 = vmatpush.msra.mxu0 %v958
        %989 = vmatmul.f32.gmra.mxu0 %v968
        %v990 = vpop.f32.mrf.mxu0
        %v991 = vadd.f32 %v964, %v990
        %992 = vmatmul.f32.gmra.mxu0 %v971
        %v993 = vpop.f32.mrf.mxu0
        %v994 = vadd.f32 %v964, %v993
        %995 = vdwg.mxu0
        %v996 = vld [vmem:[%s773] sm:$0xff]
        %v997 = vld [vmem:[%s773 + $0x8] sm:$0xff]
        %v998 = vld [vmem:[%s773 + $0x10] sm:$0xff]
        %v999 = vld [vmem:[%s773 + $0x18] sm:$0xff]
        %1002 = vrot.lane.b32.xlu0 %v991, 96
        %v1003 = vpop.permute.xlu0 %1002
        %1004 = vrot.lane.b32.xlu0 %v994, 96
        %v1005 = vpop.permute.xlu0 %1004
        %vm1006 = vcmask 64512
        %v1007 = vsel %vm1006, %v991, 0
        %v1009 = vsel %vm1006, %v994, 0
        %v1011 = vsel %vm1006, %v1003, 0
        %v1013 = vsel %vm1006, %v1005, 0
        %1015 = vmatpush.xpose.msra.mxu0 0.0
        %1016 = vmatpush.xpose.msra.mxu0 0.0
        %1017 = vmatpush.xpose.msra.mxu0 0.0
        %1018 = vmatpush.xpose.msra.mxu0 0.0
        %1019 = vmatpush.xpose.msra.mxu0 0.0
        %1020 = vmatpush.xpose.msra.mxu0 0.0
        %1021 = vmatpush.xpose.msra.mxu0 0.0
        %1022 = vmatpush.xpose.msra.mxu0 0.0
        %1023 = vmatpush.xpose.msra.mxu0 0.0
        %1024 = vmatpush.xpose.msra.mxu0 0.0
        %1025 = vmatpush.xpose.msra.mxu0 0.0
        %1026 = vmatpush.xpose.msra.mxu0 0.0
        %1027 = vmatpush.xpose.msra.mxu0 0.0
        %1028 = vmatpush.xpose.msra.mxu0 0.0
        %1029 = vmatpush.xpose.msra.mxu0 %v1013
        %1030 = vmatpush.xpose.msra.mxu0 %v1011
        %1031 = vmatmul.f32.gmra.mxu0 %v1007
        %v1032 = vpop.f32.mrf.mxu0
        %v1033 = vadd.f32 0.0, %v1032
        %1034 = vmatmul.f32.gmra.mxu0 %v1009
        %v1035 = vpop.f32.mrf.mxu0
        %v1036 = vadd.f32 0.0, %v1035
        %1037 = vdwg.mxu0
        %v1038 = vmul.f32 %v1033, 0.35355338
        %v1039 = vmul.f32 %v1036, 0.35355338
        %v1040 = vadd.f32 %v1038, %v956
        %v1041 = vadd.f32 %v1039, %v957
        %vm1042 = vcmask 130048
        %v1043 = vsel %vm1042, %v1040, -inf
        %1044 = vmax.xlane.f32.xlu0 %v1043
        %v1045 = vpop.xlane.xlu0 %1044
        %v1046 = vsel %vm1042, %v1041, -inf
        %1047 = vmax.xlane.f32.xlu0 %v1046
        %v1048 = vpop.xlane.xlu0 %1047
        %v1049 = vsub.f32 %v1040, %v1045
        %v1050 = vsub.f32 %v1041, %v1048
        %v1051 = vmul.f32 %v1049, 1.442695
        %v1052 = vpow.pop %v1051
        %v1053 = vmul.f32 %v1050, 1.442695
        %v1054 = vpow.pop %v1053
        %v1055 = vsel %vm1042, %v1052, 0.0
        %1056 = vadd.xlane.f32.xlu0 %v1055
        %v1057 = vpop.xlane.xlu0 %1056
        %v1058 = vsel %vm1042, %v1054, 0.0
        %1059 = vadd.xlane.f32.xlu0 %v1058
        %v1060 = vpop.xlane.xlu0 %1059
        %v1061 = vrcp.pop %v1057
        %v1062 = vrcp.pop %v1060
        %v1063 = vmul.f32 %v1052, %v1061
        %v1064 = vmul.f32 %v1054, %v1062
        %1065 = vrot.lane.b32.xlu0 %v991, 64
        %v1066 = vpop.permute.xlu0 %1065
        %1067 = vrot.lane.b32.xlu0 %v994, 64
        %v1068 = vpop.permute.xlu0 %1067
        %v1072 = vsel %vm1042, %v1063, 0
        %v1075 = vsel %vm1042, %v1064, 0
        %1077 = vmatpush.msra.mxu0 0.0
        %1078 = vmatpush.msra.mxu0 0.0
        %1079 = vmatpush.msra.mxu0 0.0
        %1080 = vmatpush.msra.mxu0 0.0
        %1081 = vmatpush.msra.mxu0 0.0
        %1082 = vmatpush.msra.mxu0 0.0
        %1083 = vmatpush.msra.mxu0 0.0
        %1084 = vmatpush.msra.mxu0 0.0
        %1085 = vmatpush.msra.mxu0 0.0
        %1086 = vmatpush.msra.mxu0 0.0
        %1087 = vmatpush.msra.mxu0 0.0
        %1088 = vmatpush.msra.mxu0 0.0
        %1089 = vmatpush.msra.mxu0 0.0
        %1090 = vmatpush.msra.mxu0 0.0
        %1091 = vmatpush.msra.mxu0 %v1068
        %1092 = vmatpush.msra.mxu0 %v1066
        %1093 = vmatmul.f32.gmra.mxu0 %v1072
        %v1094 = vpop.f32.mrf.mxu0
        %v1095 = vadd.f32 0.0, %v1094
        %1096 = vmatmul.f32.gmra.mxu0 %v1075
        %v1097 = vpop.f32.mrf.mxu0
        %v1098 = vadd.f32 0.0, %v1097
        %1099 = vdwg.mxu0
        %1100 = vrot.lane.b32.xlu0 %v991, 120
        %v1101 = vpop.permute.xlu0 %1100
        %1102 = vrot.lane.b32.xlu0 %v994, 120
        %v1103 = vpop.permute.xlu0 %1102
        %1104 = vrot.lane.b32.xlu0 %v991, 88
        %v1105 = vpop.permute.xlu0 %1104
        %1106 = vrot.lane.b32.xlu0 %v994, 88
        %v1107 = vpop.permute.xlu0 %1106
        %v1108 = vsel %vm1006, %v1101, 0
        %v1110 = vsel %vm1006, %v1103, 0
        %v1112 = vsel %vm1006, %v1105, 0
        %v1114 = vsel %vm1006, %v1107, 0
        %1116 = vmatpush.xpose.msra.mxu0 0.0
        %1117 = vmatpush.xpose.msra.mxu0 0.0
        %1118 = vmatpush.xpose.msra.mxu0 0.0
        %1119 = vmatpush.xpose.msra.mxu0 0.0
        %1120 = vmatpush.xpose.msra.mxu0 0.0
        %1121 = vmatpush.xpose.msra.mxu0 0.0
        %1122 = vmatpush.xpose.msra.mxu0 0.0
        %1123 = vmatpush.xpose.msra.mxu0 0.0
        %1124 = vmatpush.xpose.msra.mxu0 0.0
        %1125 = vmatpush.xpose.msra.mxu0 0.0
        %1126 = vmatpush.xpose.msra.mxu0 0.0
        %1127 = vmatpush.xpose.msra.mxu0 0.0
        %1128 = vmatpush.xpose.msra.mxu0 0.0
        %1129 = vmatpush.xpose.msra.mxu0 0.0
        %1130 = vmatpush.xpose.msra.mxu0 %v1114
        %1131 = vmatpush.xpose.msra.mxu0 %v1112
        %1132 = vmatmul.f32.gmra.mxu0 %v1108
        %v1133 = vpop.f32.mrf.mxu0
        %v1134 = vadd.f32 0.0, %v1133
        %1135 = vmatmul.f32.gmra.mxu0 %v1110
        %v1136 = vpop.f32.mrf.mxu0
        %v1137 = vadd.f32 0.0, %v1136
        %1138 = vdwg.mxu0
        %v1139 = vmul.f32 %v1134, 0.35355338
        %v1140 = vmul.f32 %v1137, 0.35355338
        %v1141 = vadd.f32 %v1139, %v956
        %v1142 = vadd.f32 %v1140, %v957
        %v1143 = vsel %vm1042, %v1141, -inf
        %1144 = vmax.xlane.f32.xlu0 %v1143
        %v1145 = vpop.xlane.xlu0 %1144
        %v1146 = vsel %vm1042, %v1142, -inf
        %1147 = vmax.xlane.f32.xlu0 %v1146
        %v1148 = vpop.xlane.xlu0 %1147
        %v1149 = vsub.f32 %v1141, %v1145
        %v1150 = vsub.f32 %v1142, %v1148
        %v1151 = vmul.f32 %v1149, 1.442695
        %v1152 = vpow.pop %v1151
        %v1153 = vmul.f32 %v1150, 1.442695
        %v1154 = vpow.pop %v1153
        %v1155 = vsel %vm1042, %v1152, 0.0
        %1156 = vadd.xlane.f32.xlu0 %v1155
        %v1157 = vpop.xlane.xlu0 %1156
        %v1158 = vsel %vm1042, %v1154, 0.0
        %1159 = vadd.xlane.f32.xlu0 %v1158
        %v1160 = vpop.xlane.xlu0 %1159
        %v1161 = vrcp.pop %v1157
        %v1162 = vrcp.pop %v1160
        %v1163 = vmul.f32 %v1152, %v1161
        %v1164 = vmul.f32 %v1154, %v1162
        %1165 = vrot.lane.b32.xlu0 %v991, 56
        %v1166 = vpop.permute.xlu0 %1165
        %1167 = vrot.lane.b32.xlu0 %v994, 56
        %v1168 = vpop.permute.xlu0 %1167
        %v1172 = vsel %vm1042, %v1163, 0
        %v1175 = vsel %vm1042, %v1164, 0
        %1177 = vmatpush.msra.mxu0 0.0
        %1178 = vmatpush.msra.mxu0 0.0
        %1179 = vmatpush.msra.mxu0 0.0
        %1180 = vmatpush.msra.mxu0 0.0
        %1181 = vmatpush.msra.mxu0 0.0
        %1182 = vmatpush.msra.mxu0 0.0
        %1183 = vmatpush.msra.mxu0 0.0
        %1184 = vmatpush.msra.mxu0 0.0
        %1185 = vmatpush.msra.mxu0 0.0
        %1186 = vmatpush.msra.mxu0 0.0
        %1187 = vmatpush.msra.mxu0 0.0
        %1188 = vmatpush.msra.mxu0 0.0
        %1189 = vmatpush.msra.mxu0 0.0
        %1190 = vmatpush.msra.mxu0 0.0
        %1191 = vmatpush.msra.mxu0 %v1168
        %1192 = vmatpush.msra.mxu0 %v1166
        %1193 = vmatmul.f32.gmra.mxu0 %v1172
        %v1194 = vpop.f32.mrf.mxu0
        %v1195 = vadd.f32 0.0, %v1194
        %1196 = vmatmul.f32.gmra.mxu0 %v1175
        %v1197 = vpop.f32.mrf.mxu0
        %v1198 = vadd.f32 0.0, %v1197
        %1199 = vdwg.mxu0
        %v1201 = vsel %vm1006, %v1195, 0
        %v1204 = vsel %vm1006, %v1198, 0
        %1206 = vmatpush.msra.mxu0 0.0
        %1207 = vmatpush.msra.mxu0 0.0
        %1208 = vmatpush.msra.mxu0 0.0
        %1209 = vmatpush.msra.mxu0 0.0
        %1210 = vmatpush.msra.mxu0 0.0
        %1211 = vmatpush.msra.mxu0 0.0
        %1212 = vmatpush.msra.mxu0 0.0
        %1213 = vmatpush.msra.mxu0 0.0
        %1214 = vmatpush.msra.mxu0 0.0
        %1215 = vmatpush.msra.mxu0 0.0
        %1216 = vmatpush.msra.mxu0 0.0
        %1217 = vmatpush.msra.mxu0 0.0
        %1218 = vmatpush.msra.mxu0 0.0
        %1219 = vmatpush.msra.mxu0 0.0
        %1220 = vmatpush.msra.mxu0 0.0
        %1221 = vmatpush.msra.mxu0 %v997
        %1222 = vmatmul.f32.gmra.mxu0 %v1201
        %v1223 = vpop.f32.mrf.mxu0
        %v1224 = vadd.f32 0.0, %v1223
        %1225 = vmatmul.f32.gmra.mxu0 %v1204
        %v1226 = vpop.f32.mrf.mxu0
        %v1227 = vadd.f32 0.0, %v1226
        %1228 = vdwg.mxu0
        %v1230 = vsel %vm1006, %v1095, 0
        %v1233 = vsel %vm1006, %v1098, 0
        %1235 = vmatpush.msra.mxu0 0.0
        %1236 = vmatpush.msra.mxu0 0.0
        %1237 = vmatpush.msra.mxu0 0.0
        %1238 = vmatpush.msra.mxu0 0.0
        %1239 = vmatpush.msra.mxu0 0.0
        %1240 = vmatpush.msra.mxu0 0.0
        %1241 = vmatpush.msra.mxu0 0.0
        %1242 = vmatpush.msra.mxu0 0.0
        %1243 = vmatpush.msra.mxu0 0.0
        %1244 = vmatpush.msra.mxu0 0.0
        %1245 = vmatpush.msra.mxu0 0.0
        %1246 = vmatpush.msra.mxu0 0.0
        %1247 = vmatpush.msra.mxu0 0.0
        %1248 = vmatpush.msra.mxu0 0.0
        %1249 = vmatpush.msra.mxu0 0.0
        %1250 = vmatpush.msra.mxu0 %v996
        %1251 = vmatmul.f32.gmra.mxu0 %v1230
        %v1252 = vpop.f32.mrf.mxu0
        %v1253 = vadd.f32 %v1224, %v1252
        %1254 = vmatmul.f32.gmra.mxu0 %v1233
        %v1255 = vpop.f32.mrf.mxu0
        %v1256 = vadd.f32 %v1227, %v1255
        %1257 = vdwg.mxu0
        %1258 = vrot.lane.b32.xlu0 %v991, 112
        %v1259 = vpop.permute.xlu0 %1258
        %1260 = vrot.lane.b32.xlu0 %v994, 112
        %v1261 = vpop.permute.xlu0 %1260
        %1262 = vrot.lane.b32.xlu0 %v991, 80
        %v1263 = vpop.permute.xlu0 %1262
        %1264 = vrot.lane.b32.xlu0 %v994, 80
        %v1265 = vpop.permute.xlu0 %1264
        %v1266 = vsel %vm1006, %v1259, 0
        %v1268 = vsel %vm1006, %v1261, 0
        %v1270 = vsel %vm1006, %v1263, 0
        %v1272 = vsel %vm1006, %v1265, 0
        %1274 = vmatpush.xpose.msra.mxu0 0.0
        %1275 = vmatpush.xpose.msra.mxu0 0.0
        %1276 = vmatpush.xpose.msra.mxu0 0.0
        %1277 = vmatpush.xpose.msra.mxu0 0.0
        %1278 = vmatpush.xpose.msra.mxu0 0.0
        %1279 = vmatpush.xpose.msra.mxu0 0.0
        %1280 = vmatpush.xpose.msra.mxu0 0.0
        %1281 = vmatpush.xpose.msra.mxu0 0.0
        %1282 = vmatpush.xpose.msra.mxu0 0.0
        %1283 = vmatpush.xpose.msra.mxu0 0.0
        %1284 = vmatpush.xpose.msra.mxu0 0.0
        %1285 = vmatpush.xpose.msra.mxu0 0.0
        %1286 = vmatpush.xpose.msra.mxu0 0.0
        %1287 = vmatpush.xpose.msra.mxu0 0.0
        %1288 = vmatpush.xpose.msra.mxu0 %v1272
        %1289 = vmatpush.xpose.msra.mxu0 %v1270
        %1290 = vmatmul.f32.gmra.mxu0 %v1266
        %v1291 = vpop.f32.mrf.mxu0
        %v1292 = vadd.f32 0.0, %v1291
        %1293 = vmatmul.f32.gmra.mxu0 %v1268
        %v1294 = vpop.f32.mrf.mxu0
        %v1295 = vadd.f32 0.0, %v1294
        %1296 = vdwg.mxu0
        %v1297 = vmul.f32 %v1292, 0.35355338
        %v1298 = vmul.f32 %v1295, 0.35355338
        %v1299 = vadd.f32 %v1297, %v956
        %v1300 = vadd.f32 %v1298, %v957
        %v1301 = vsel %vm1042, %v1299, -inf
        %1302 = vmax.xlane.f32.xlu0 %v1301
        %v1303 = vpop.xlane.xlu0 %1302
        %v1304 = vsel %vm1042, %v1300, -inf
        %1305 = vmax.xlane.f32.xlu0 %v1304
        %v1306 = vpop.xlane.xlu0 %1305
        %v1307 = vsub.f32 %v1299, %v1303
        %v1308 = vsub.f32 %v1300, %v1306
        %v1309 = vmul.f32 %v1307, 1.442695
        %v1310 = vpow.pop %v1309
        %v1311 = vmul.f32 %v1308, 1.442695
        %v1312 = vpow.pop %v1311
        %v1313 = vsel %vm1042, %v1310, 0.0
        %1314 = vadd.xlane.f32.xlu0 %v1313
        %v1315 = vpop.xlane.xlu0 %1314
        %v1316 = vsel %vm1042, %v1312, 0.0
        %1317 = vadd.xlane.f32.xlu0 %v1316
        %v1318 = vpop.xlane.xlu0 %1317
        %v1319 = vrcp.pop %v1315
        %v1320 = vrcp.pop %v1318
        %v1321 = vmul.f32 %v1310, %v1319
        %v1322 = vmul.f32 %v1312, %v1320
        %1323 = vrot.lane.b32.xlu0 %v991, 48
        %v1324 = vpop.permute.xlu0 %1323
        %1325 = vrot.lane.b32.xlu0 %v994, 48
        %v1326 = vpop.permute.xlu0 %1325
        %v1330 = vsel %vm1042, %v1321, 0
        %v1333 = vsel %vm1042, %v1322, 0
        %1335 = vmatpush.msra.mxu0 0.0
        %1336 = vmatpush.msra.mxu0 0.0
        %1337 = vmatpush.msra.mxu0 0.0
        %1338 = vmatpush.msra.mxu0 0.0
        %1339 = vmatpush.msra.mxu0 0.0
        %1340 = vmatpush.msra.mxu0 0.0
        %1341 = vmatpush.msra.mxu0 0.0
        %1342 = vmatpush.msra.mxu0 0.0
        %1343 = vmatpush.msra.mxu0 0.0
        %1344 = vmatpush.msra.mxu0 0.0
        %1345 = vmatpush.msra.mxu0 0.0
        %1346 = vmatpush.msra.mxu0 0.0
        %1347 = vmatpush.msra.mxu0 0.0
        %1348 = vmatpush.msra.mxu0 0.0
        %1349 = vmatpush.msra.mxu0 %v1326
        %1350 = vmatpush.msra.mxu0 %v1324
        %1351 = vmatmul.f32.gmra.mxu0 %v1330
        %v1352 = vpop.f32.mrf.mxu0
        %v1353 = vadd.f32 0.0, %v1352
        %1354 = vmatmul.f32.gmra.mxu0 %v1333
        %v1355 = vpop.f32.mrf.mxu0
        %v1356 = vadd.f32 0.0, %v1355
        %1357 = vdwg.mxu0
        %v1359 = vsel %vm1006, %v1353, 0
        %v1362 = vsel %vm1006, %v1356, 0
        %1364 = vmatpush.msra.mxu0 0.0
        %1365 = vmatpush.msra.mxu0 0.0
        %1366 = vmatpush.msra.mxu0 0.0
        %1367 = vmatpush.msra.mxu0 0.0
        %1368 = vmatpush.msra.mxu0 0.0
        %1369 = vmatpush.msra.mxu0 0.0
        %1370 = vmatpush.msra.mxu0 0.0
        %1371 = vmatpush.msra.mxu0 0.0
        %1372 = vmatpush.msra.mxu0 0.0
        %1373 = vmatpush.msra.mxu0 0.0
        %1374 = vmatpush.msra.mxu0 0.0
        %1375 = vmatpush.msra.mxu0 0.0
        %1376 = vmatpush.msra.mxu0 0.0
        %1377 = vmatpush.msra.mxu0 0.0
        %1378 = vmatpush.msra.mxu0 0.0
        %1379 = vmatpush.msra.mxu0 %v998
        %1380 = vmatmul.f32.gmra.mxu0 %v1359
        %v1381 = vpop.f32.mrf.mxu0
        %v1382 = vadd.f32 0.0, %v1381
        %1383 = vmatmul.f32.gmra.mxu0 %v1362
        %v1384 = vpop.f32.mrf.mxu0
        %v1385 = vadd.f32 0.0, %v1384
        %1386 = vdwg.mxu0
        %v1387 = vadd.f32 %v1253, %v1382
        %v1388 = vadd.f32 %v1256, %v1385
        %1389 = vrot.lane.b32.xlu0 %v991, 104
        %v1390 = vpop.permute.xlu0 %1389
        %1391 = vrot.lane.b32.xlu0 %v994, 104
        %v1392 = vpop.permute.xlu0 %1391
        %1393 = vrot.lane.b32.xlu0 %v991, 72
        %v1394 = vpop.permute.xlu0 %1393
        %1395 = vrot.lane.b32.xlu0 %v994, 72
        %v1396 = vpop.permute.xlu0 %1395
        %v1397 = vsel %vm1006, %v1390, 0
        %v1399 = vsel %vm1006, %v1392, 0
        %v1401 = vsel %vm1006, %v1394, 0
        %v1403 = vsel %vm1006, %v1396, 0
        %1405 = vmatpush.xpose.msra.mxu0 0.0
        %1406 = vmatpush.xpose.msra.mxu0 0.0
        %1407 = vmatpush.xpose.msra.mxu0 0.0
        %1408 = vmatpush.xpose.msra.mxu0 0.0
        %1409 = vmatpush.xpose.msra.mxu0 0.0
        %1410 = vmatpush.xpose.msra.mxu0 0.0
        %1411 = vmatpush.xpose.msra.mxu0 0.0
        %1412 = vmatpush.xpose.msra.mxu0 0.0
        %1413 = vmatpush.xpose.msra.mxu0 0.0
        %1414 = vmatpush.xpose.msra.mxu0 0.0
        %1415 = vmatpush.xpose.msra.mxu0 0.0
        %1416 = vmatpush.xpose.msra.mxu0 0.0
        %1417 = vmatpush.xpose.msra.mxu0 0.0
        %1418 = vmatpush.xpose.msra.mxu0 0.0
        %1419 = vmatpush.xpose.msra.mxu0 %v1403
        %1420 = vmatpush.xpose.msra.mxu0 %v1401
        %1421 = vmatmul.f32.gmra.mxu0 %v1397
        %v1422 = vpop.f32.mrf.mxu0
        %v1423 = vadd.f32 0.0, %v1422
        %1424 = vmatmul.f32.gmra.mxu0 %v1399
        %v1425 = vpop.f32.mrf.mxu0
        %v1426 = vadd.f32 0.0, %v1425
        %1427 = vdwg.mxu0
        %v1428 = vmul.f32 %v1423, 0.35355338
        %v1429 = vmul.f32 %v1426, 0.35355338
        %v1430 = vadd.f32 %v1428, %v956
        %v1431 = vadd.f32 %v1429, %v957
        %v1432 = vsel %vm1042, %v1430, -inf
        %1433 = vmax.xlane.f32.xlu0 %v1432
        %v1434 = vpop.xlane.xlu0 %1433
        %v1435 = vsel %vm1042, %v1431, -inf
        %1436 = vmax.xlane.f32.xlu0 %v1435
        %v1437 = vpop.xlane.xlu0 %1436
        %v1438 = vsub.f32 %v1430, %v1434
        %v1439 = vsub.f32 %v1431, %v1437
        %v1440 = vmul.f32 %v1438, 1.442695
        %v1441 = vpow.pop %v1440
        %v1442 = vmul.f32 %v1439, 1.442695
        %v1443 = vpow.pop %v1442
        %v1444 = vsel %vm1042, %v1441, 0.0
        %1445 = vadd.xlane.f32.xlu0 %v1444
        %v1446 = vpop.xlane.xlu0 %1445
        %v1447 = vsel %vm1042, %v1443, 0.0
        %1448 = vadd.xlane.f32.xlu0 %v1447
        %v1449 = vpop.xlane.xlu0 %1448
        %v1450 = vrcp.pop %v1446
        %v1451 = vrcp.pop %v1449
        %v1452 = vmul.f32 %v1441, %v1450
        %v1453 = vmul.f32 %v1443, %v1451
        %1454 = vrot.lane.b32.xlu0 %v991, 40
        %v1455 = vpop.permute.xlu0 %1454
        %1456 = vrot.lane.b32.xlu0 %v994, 40
        %v1457 = vpop.permute.xlu0 %1456
        %v1461 = vsel %vm1042, %v1452, 0
        %v1464 = vsel %vm1042, %v1453, 0
        %1466 = vmatpush.msra.mxu0 0.0
        %1467 = vmatpush.msra.mxu0 0.0
        %1468 = vmatpush.msra.mxu0 0.0
        %1469 = vmatpush.msra.mxu0 0.0
        %1470 = vmatpush.msra.mxu0 0.0
        %1471 = vmatpush.msra.mxu0 0.0
        %1472 = vmatpush.msra.mxu0 0.0
        %1473 = vmatpush.msra.mxu0 0.0
        %1474 = vmatpush.msra.mxu0 0.0
        %1475 = vmatpush.msra.mxu0 0.0
        %1476 = vmatpush.msra.mxu0 0.0
        %1477 = vmatpush.msra.mxu0 0.0
        %1478 = vmatpush.msra.mxu0 0.0
        %1479 = vmatpush.msra.mxu0 0.0
        %1480 = vmatpush.msra.mxu0 %v1457
        %1481 = vmatpush.msra.mxu0 %v1455
        %1482 = vmatmul.f32.gmra.mxu0 %v1461
        %v1483 = vpop.f32.mrf.mxu0
        %v1484 = vadd.f32 0.0, %v1483
        %1485 = vmatmul.f32.gmra.mxu0 %v1464
        %v1486 = vpop.f32.mrf.mxu0
        %v1487 = vadd.f32 0.0, %v1486
        %1488 = vdwg.mxu0
        %v1490 = vsel %vm1006, %v1484, 0
        %v1493 = vsel %vm1006, %v1487, 0
        %1495 = vmatpush.msra.mxu0 0.0
        %1496 = vmatpush.msra.mxu0 0.0
        %1497 = vmatpush.msra.mxu0 0.0
        %1498 = vmatpush.msra.mxu0 0.0
        %1499 = vmatpush.msra.mxu0 0.0
        %1500 = vmatpush.msra.mxu0 0.0
        %1501 = vmatpush.msra.mxu0 0.0
        %1502 = vmatpush.msra.mxu0 0.0
        %1503 = vmatpush.msra.mxu0 0.0
        %1504 = vmatpush.msra.mxu0 0.0
        %1505 = vmatpush.msra.mxu0 0.0
        %1506 = vmatpush.msra.mxu0 0.0
        %1507 = vmatpush.msra.mxu0 0.0
        %1508 = vmatpush.msra.mxu0 0.0
        %1509 = vmatpush.msra.mxu0 0.0
        %1510 = vmatpush.msra.mxu0 %v999
        %1511 = vmatmul.f32.gmra.mxu0 %v1490
        %v1512 = vpop.f32.mrf.mxu0
        %v1513 = vadd.f32 0.0, %v1512
        %1514 = vmatmul.f32.gmra.mxu0 %v1493
        %v1515 = vpop.f32.mrf.mxu0
        %v1516 = vadd.f32 0.0, %v1515
        %1517 = vdwg.mxu0
        %v1518 = vadd.f32 %v1387, %v1513
        %v1519 = vadd.f32 %v1388, %v1516
        %v1520 = vld [vmem:[%s901] sm:$0x1]
        %v1522 = vperm.slane %v1520, 0
        %v1524 = vadd.f32 %v1518, %v1522
        %v1525 = vadd.f32 %v1519, %v1522
        %v1526 = vadd.f32 %v954, %v1524
        %v1527 = vadd.f32 %v955, %v1525
        %v1528 = vsel %vm966, %v1526, 0.0
        %1529 = vadd.xlane.f32.xlu0 %v1528
        %v1530 = vpop.xlane.xlu0 %1529
        %v1531 = vsel %vm966, %v1527, 0.0
        %1532 = vadd.xlane.f32.xlu0 %v1531
        %v1533 = vpop.xlane.xlu0 %1532
        %v1534 = vrcp.pop 32.0
        %v1535 = vmul.f32 32.0, %v1534
        %v1536 = vsub.f32 1.0, %v1535
        %v1537 = vmul.f32 %v1534, %v1536
        %v1538 = vadd.f32 %v1534, %v1537
        %vm1539 = vweird.f32 %v1534
        %v1540 = vsel %vm1539, %v1534, %v1538
        %v1541 = vmul.f32 %v1530, %v1540
        %v1542 = vmul.f32 %v1533, %v1540
        %v1543 = vsub.f32 %v1526, %v1541
        %v1544 = vsub.f32 %v1527, %v1542
        %v1545 = vmul.f32 %v1543, %v1543
        %v1546 = vmul.f32 %v1544, %v1544
        %v1547 = vsel %vm966, %v1545, 0.0
        %1548 = vadd.xlane.f32.xlu0 %v1547
        %v1549 = vpop.xlane.xlu0 %1548
        %v1550 = vsel %vm966, %v1546, 0.0
        %1551 = vadd.xlane.f32.xlu0 %v1550
        %v1552 = vpop.xlane.xlu0 %1551
        %v1553 = vmul.f32 %v1549, %v1540
        %v1554 = vmul.f32 %v1552, %v1540
        %v1555 = vadd.f32 %v1553, 1e-05
        %v1556 = vadd.f32 %v1554, 1e-05
        %v1557 = vrsqrt.pop %v1555
        %v1558 = vmul.f32 %v1557, %v1555
        %v1559 = vmul.f32 %v1558, %v1557
        %v1560 = vmul.f32 0.5, %v1559
        %v1561 = vsub.f32 1.5, %v1560
        %v1562 = vmul.f32 %v1557, %v1561
        %vm1563 = vweird.f32 %v1555
        %vm1564 = vweird.f32 %v1557
        %vm1565 = vmor %vm1563, %vm1564
        %v1566 = vsel %vm1565, %v1557, %v1562
        %v1567 = vrsqrt.pop %v1556
        %v1568 = vmul.f32 %v1567, %v1556
        %v1569 = vmul.f32 %v1568, %v1567
        %v1570 = vmul.f32 0.5, %v1569
        %v1571 = vsub.f32 1.5, %v1570
        %v1572 = vmul.f32 %v1567, %v1571
        %vm1573 = vweird.f32 %v1556
        %vm1574 = vweird.f32 %v1567
        %vm1575 = vmor %vm1573, %vm1574
        %v1576 = vsel %vm1575, %v1567, %v1572
        %v1577 = vmul.f32 %v1543, %v1566
        %v1578 = vmul.f32 %v1544, %v1576
        %v1579 = vld [vmem:[%s904] sm:$0x1]
        %v1581 = vperm.slane %v1579, 0
        %v1583 = vmul.f32 %v1577, %v1581
        %v1584 = vmul.f32 %v1578, %v1581
        %v1585 = vld [vmem:[%s907] sm:$0x1]
        %v1587 = vperm.slane %v1585, 0
        %v1589 = vadd.f32 %v1583, %v1587
        %v1590 = vadd.f32 %v1584, %v1587
        %v1591 = vpack.c.bf16 %v1590, %v1589
        %v1592 = vld [vmem:[%s783] sm:$0xff]
        %v1593 = vld [vmem:[%s783 + $0x8] sm:$0xff]
        %v1594 = vld [vmem:[%s783 + $0x10] sm:$0xff]
        %v1595 = vld [vmem:[%s783 + $0x18] sm:$0xff]
        %v1596 = vld [vmem:[%s783 + $0x20] sm:$0xff]
        %v1597 = vld [vmem:[%s783 + $0x28] sm:$0xff]
        %v1598 = vld [vmem:[%s783 + $0x30] sm:$0xff]
        %v1599 = vld [vmem:[%s783 + $0x38] sm:$0xff]
        %v1600 = vld [vmem:[%s783 + $0x40] sm:$0xff]
        %v1601 = vld [vmem:[%s783 + $0x48] sm:$0xff]
        %v1602 = vld [vmem:[%s783 + $0x50] sm:$0xff]
        %v1603 = vld [vmem:[%s783 + $0x58] sm:$0xff]
        %v1604 = vld [vmem:[%s783 + $0x60] sm:$0xff]
        %v1605 = vld [vmem:[%s783 + $0x68] sm:$0xff]
        %v1606 = vld [vmem:[%s783 + $0x70] sm:$0xff]
        %v1607 = vld [vmem:[%s783 + $0x78] sm:$0xff]
        %v1608 = vld [vmem:[%s783 + $0x80] sm:$0xff]
        %v1609 = vld [vmem:[%s783 + $0x88] sm:$0xff]
        %v1610 = vld [vmem:[%s783 + $0x90] sm:$0xff]
        %v1611 = vld [vmem:[%s783 + $0x98] sm:$0xff]
        %v1612 = vld [vmem:[%s783 + $0xa0] sm:$0xff]
        %v1613 = vld [vmem:[%s783 + $0xa8] sm:$0xff]
        %v1614 = vld [vmem:[%s783 + $0xb0] sm:$0xff]
        %v1615 = vld [vmem:[%s783 + $0xb8] sm:$0xff]
        %v1616 = vld [vmem:[%s783 + $0xc0] sm:$0xff]
        %v1617 = vld [vmem:[%s783 + $0xc8] sm:$0xff]
        %v1618 = vld [vmem:[%s783 + $0xd0] sm:$0xff]
        %v1619 = vld [vmem:[%s783 + $0xd8] sm:$0xff]
        %v1620 = vld [vmem:[%s783 + $0xe0] sm:$0xff]
        %v1621 = vld [vmem:[%s783 + $0xe8] sm:$0xff]
        %v1622 = vld [vmem:[%s783 + $0xf0] sm:$0xff]
        %v1623 = vld [vmem:[%s783 + $0xf8] sm:$0xff]
        %v1624 = vld [vmem:[%s911] sm:$0xff]
        %v1625 = vld [vmem:[%s911 + $0x8] sm:$0xff]
        %v1628 = vperm.slane %v1624, 0
        %v1629 = vperm.slane %v1624, 1
        %v1630 = vperm.slane %v1624, 2
        %v1631 = vperm.slane %v1624, 3
        %v1632 = vperm.slane %v1624, 4
        %v1633 = vperm.slane %v1624, 5
        %v1634 = vperm.slane %v1624, 6
        %v1635 = vperm.slane %v1624, 7
        %v1636 = vperm.slane %v1625, 0
        %v1637 = vperm.slane %v1625, 1
        %v1638 = vperm.slane %v1625, 2
        %v1639 = vperm.slane %v1625, 3
        %v1640 = vperm.slane %v1625, 4
        %v1641 = vperm.slane %v1625, 5
        %v1642 = vperm.slane %v1625, 6
        %v1643 = vperm.slane %v1625, 7
        %v1692 = vunpack.c.l.b16 %v1592
        %v1693 = vunpack.c.h.b16 %v1592
        %v1694 = vunpack.c.l.b16 %v1593
        %v1695 = vunpack.c.h.b16 %v1593
        %v1696 = vunpack.c.l.b16 %v1594
        %v1697 = vunpack.c.h.b16 %v1594
        %v1698 = vunpack.c.l.b16 %v1595
        %v1699 = vunpack.c.h.b16 %v1595
        %v1700 = vunpack.c.l.b16 %v1596
        %v1701 = vunpack.c.h.b16 %v1596
        %v1702 = vunpack.c.l.b16 %v1597
        %v1703 = vunpack.c.h.b16 %v1597
        %v1704 = vunpack.c.l.b16 %v1598
        %v1705 = vunpack.c.h.b16 %v1598
        %v1706 = vunpack.c.l.b16 %v1599
        %v1707 = vunpack.c.h.b16 %v1599
        %v1708 = vunpack.c.l.b16 %v1600
        %v1709 = vunpack.c.h.b16 %v1600
        %v1710 = vunpack.c.l.b16 %v1601
        %v1711 = vunpack.c.h.b16 %v1601
        %v1712 = vunpack.c.l.b16 %v1602
        %v1713 = vunpack.c.h.b16 %v1602
        %v1714 = vunpack.c.l.b16 %v1603
        %v1715 = vunpack.c.h.b16 %v1603
        %v1716 = vunpack.c.l.b16 %v1604
        %v1717 = vunpack.c.h.b16 %v1604
        %v1718 = vunpack.c.l.b16 %v1605
        %v1719 = vunpack.c.h.b16 %v1605
        %v1720 = vunpack.c.l.b16 %v1606
        %v1721 = vunpack.c.h.b16 %v1606
        %v1722 = vunpack.c.l.b16 %v1607
        %v1723 = vunpack.c.h.b16 %v1607
        %v1724 = vunpack.c.l.b16 %v1608
        %v1725 = vunpack.c.h.b16 %v1608
        %v1726 = vunpack.c.l.b16 %v1609
        %v1727 = vunpack.c.h.b16 %v1609
        %v1728 = vunpack.c.l.b16 %v1610
        %v1729 = vunpack.c.h.b16 %v1610
        %v1730 = vunpack.c.l.b16 %v1611
        %v1731 = vunpack.c.h.b16 %v1611
        %v1732 = vunpack.c.l.b16 %v1612
        %v1733 = vunpack.c.h.b16 %v1612
        %v1734 = vunpack.c.l.b16 %v1613
        %v1735 = vunpack.c.h.b16 %v1613
        %v1736 = vunpack.c.l.b16 %v1614
        %v1737 = vunpack.c.h.b16 %v1614
        %v1738 = vunpack.c.l.b16 %v1615
        %v1739 = vunpack.c.h.b16 %v1615
        %v1740 = vunpack.c.l.b16 %v1616
        %v1741 = vunpack.c.h.b16 %v1616
        %v1742 = vunpack.c.l.b16 %v1617
        %v1743 = vunpack.c.h.b16 %v1617
        %v1744 = vunpack.c.l.b16 %v1618
        %v1745 = vunpack.c.h.b16 %v1618
        %v1746 = vunpack.c.l.b16 %v1619
        %v1747 = vunpack.c.h.b16 %v1619
        %v1748 = vunpack.c.l.b16 %v1620
        %v1749 = vunpack.c.h.b16 %v1620
        %v1750 = vunpack.c.l.b16 %v1621
        %v1751 = vunpack.c.h.b16 %v1621
        %v1752 = vunpack.c.l.b16 %v1622
        %v1753 = vunpack.c.h.b16 %v1622
        %v1754 = vunpack.c.l.b16 %v1623
        %v1755 = vunpack.c.h.b16 %v1623
        %v1756 = vpack.c.b16 %v1708, %v1692
        %v1757 = vpack.c.b16 %v1709, %v1693
        %v1758 = vpack.c.b16 %v1710, %v1694
        %v1759 = vpack.c.b16 %v1711, %v1695
        %v1760 = vpack.c.b16 %v1712, %v1696
        %v1761 = vpack.c.b16 %v1713, %v1697
        %v1762 = vpack.c.b16 %v1714, %v1698
        %v1763 = vpack.c.b16 %v1715, %v1699
        %v1764 = vpack.c.b16 %v1716, %v1700
        %v1765 = vpack.c.b16 %v1717, %v1701
        %v1766 = vpack.c.b16 %v1718, %v1702
        %v1767 = vpack.c.b16 %v1719, %v1703
        %v1768 = vpack.c.b16 %v1720, %v1704
        %v1769 = vpack.c.b16 %v1721, %v1705
        %v1770 = vpack.c.b16 %v1722, %v1706
        %v1771 = vpack.c.b16 %v1723, %v1707
        %v1772 = vpack.c.b16 %v1740, %v1724
        %v1773 = vpack.c.b16 %v1741, %v1725
        %v1774 = vpack.c.b16 %v1742, %v1726
        %v1775 = vpack.c.b16 %v1743, %v1727
        %v1776 = vpack.c.b16 %v1744, %v1728
        %v1777 = vpack.c.b16 %v1745, %v1729
        %v1778 = vpack.c.b16 %v1746, %v1730
        %v1779 = vpack.c.b16 %v1747, %v1731
        %v1780 = vpack.c.b16 %v1748, %v1732
        %v1781 = vpack.c.b16 %v1749, %v1733
        %v1782 = vpack.c.b16 %v1750, %v1734
        %v1783 = vpack.c.b16 %v1751, %v1735
        %v1784 = vpack.c.b16 %v1752, %v1736
        %v1785 = vpack.c.b16 %v1753, %v1737
        %v1786 = vpack.c.b16 %v1754, %v1738
        %v1787 = vpack.c.b16 %v1755, %v1739
        %v1821 = vsel %vm966, %v1591, 0
        %1823 = vmatpush.bf16.msra.mxu0 0
        %1824 = vmatpush.bf16.msra.mxu0 0
        %1825 = vmatpush.bf16.msra.mxu0 0
        %1826 = vmatpush.bf16.msra.mxu0 0
        %1827 = vmatpush.bf16.msra.mxu0 0
        %1828 = vmatpush.bf16.msra.mxu0 0
        %1829 = vmatpush.bf16.msra.mxu0 %v1772
        %1830 = vmatpush.bf16.msra.mxu0 %v1756
        %1831 = vmatmul.bf16.gmra.mxu0 %v1821
        %v1832 = vpop.f32.mrf.mxu0
        %v1833 = vadd.f32 %v1628, %v1832
        %v1834 = vpop.f32.mrf.mxu0
        %v1835 = vadd.f32 %v1628, %v1834
        %1836 = vdwg.mxu0
        %1837 = vmatpush.bf16.msra.mxu0 0
        %1838 = vmatpush.bf16.msra.mxu0 0
        %1839 = vmatpush.bf16.msra.mxu0 0
        %1840 = vmatpush.bf16.msra.mxu0 0
        %1841 = vmatpush.bf16.msra.mxu0 0
        %1842 = vmatpush.bf16.msra.mxu0 0
        %1843 = vmatpush.bf16.msra.mxu0 %v1773
        %1844 = vmatpush.bf16.msra.mxu0 %v1757
        %1845 = vmatmul.bf16.gmra.mxu0 %v1821
        %v1846 = vpop.f32.mrf.mxu0
        %v1847 = vadd.f32 %v1629, %v1846
        %v1848 = vpop.f32.mrf.mxu0
        %v1849 = vadd.f32 %v1629, %v1848
        %1850 = vdwg.mxu0
        %1851 = vmatpush.bf16.msra.mxu0 0
        %1852 = vmatpush.bf16.msra.mxu0 0
        %1853 = vmatpush.bf16.msra.mxu0 0
        %1854 = vmatpush.bf16.msra.mxu0 0
        %1855 = vmatpush.bf16.msra.mxu0 0
        %1856 = vmatpush.bf16.msra.mxu0 0
        %1857 = vmatpush.bf16.msra.mxu0 %v1774
        %1858 = vmatpush.bf16.msra.mxu0 %v1758
        %1859 = vmatmul.bf16.gmra.mxu0 %v1821
        %v1860 = vpop.f32.mrf.mxu0
        %v1861 = vadd.f32 %v1630, %v1860
        %v1862 = vpop.f32.mrf.mxu0
        %v1863 = vadd.f32 %v1630, %v1862
        %1864 = vdwg.mxu0
        %1865 = vmatpush.bf16.msra.mxu0 0
        %1866 = vmatpush.bf16.msra.mxu0 0
        %1867 = vmatpush.bf16.msra.mxu0 0
        %1868 = vmatpush.bf16.msra.mxu0 0
        %1869 = vmatpush.bf16.msra.mxu0 0
        %1870 = vmatpush.bf16.msra.mxu0 0
        %1871 = vmatpush.bf16.msra.mxu0 %v1775
        %1872 = vmatpush.bf16.msra.mxu0 %v1759
        %1873 = vmatmul.bf16.gmra.mxu0 %v1821
        %v1874 = vpop.f32.mrf.mxu0
        %v1875 = vadd.f32 %v1631, %v1874
        %v1876 = vpop.f32.mrf.mxu0
        %v1877 = vadd.f32 %v1631, %v1876
        %1878 = vdwg.mxu0
        %1879 = vmatpush.bf16.msra.mxu0 0
        %1880 = vmatpush.bf16.msra.mxu0 0
        %1881 = vmatpush.bf16.msra.mxu0 0
        %1882 = vmatpush.bf16.msra.mxu0 0
        %1883 = vmatpush.bf16.msra.mxu0 0
        %1884 = vmatpush.bf16.msra.mxu0 0
        %1885 = vmatpush.bf16.msra.mxu0 %v1776
        %1886 = vmatpush.bf16.msra.mxu0 %v1760
        %1887 = vmatmul.bf16.gmra.mxu0 %v1821
        %v1888 = vpop.f32.mrf.mxu0
        %v1889 = vadd.f32 %v1632, %v1888
        %v1890 = vpop.f32.mrf.mxu0
        %v1891 = vadd.f32 %v1632, %v1890
        %1892 = vdwg.mxu0
        %1893 = vmatpush.bf16.msra.mxu0 0
        %1894 = vmatpush.bf16.msra.mxu0 0
        %1895 = vmatpush.bf16.msra.mxu0 0
        %1896 = vmatpush.bf16.msra.mxu0 0
        %1897 = vmatpush.bf16.msra.mxu0 0
        %1898 = vmatpush.bf16.msra.mxu0 0
        %1899 = vmatpush.bf16.msra.mxu0 %v1777
        %1900 = vmatpush.bf16.msra.mxu0 %v1761
        %1901 = vmatmul.bf16.gmra.mxu0 %v1821
        %v1902 = vpop.f32.mrf.mxu0
        %v1903 = vadd.f32 %v1633, %v1902
        %v1904 = vpop.f32.mrf.mxu0
        %v1905 = vadd.f32 %v1633, %v1904
        %1906 = vdwg.mxu0
        %1907 = vmatpush.bf16.msra.mxu0 0
        %1908 = vmatpush.bf16.msra.mxu0 0
        %1909 = vmatpush.bf16.msra.mxu0 0
        %1910 = vmatpush.bf16.msra.mxu0 0
        %1911 = vmatpush.bf16.msra.mxu0 0
        %1912 = vmatpush.bf16.msra.mxu0 0
        %1913 = vmatpush.bf16.msra.mxu0 %v1778
        %1914 = vmatpush.bf16.msra.mxu0 %v1762
        %1915 = vmatmul.bf16.gmra.mxu0 %v1821
        %v1916 = vpop.f32.mrf.mxu0
        %v1917 = vadd.f32 %v1634, %v1916
        %v1918 = vpop.f32.mrf.mxu0
        %v1919 = vadd.f32 %v1634, %v1918
        %1920 = vdwg.mxu0
        %1921 = vmatpush.bf16.msra.mxu0 0
        %1922 = vmatpush.bf16.msra.mxu0 0
        %1923 = vmatpush.bf16.msra.mxu0 0
        %1924 = vmatpush.bf16.msra.mxu0 0
        %1925 = vmatpush.bf16.msra.mxu0 0
        %1926 = vmatpush.bf16.msra.mxu0 0
        %1927 = vmatpush.bf16.msra.mxu0 %v1779
        %1928 = vmatpush.bf16.msra.mxu0 %v1763
        %1929 = vmatmul.bf16.gmra.mxu0 %v1821
        %v1930 = vpop.f32.mrf.mxu0
        %v1931 = vadd.f32 %v1635, %v1930
        %v1932 = vpop.f32.mrf.mxu0
        %v1933 = vadd.f32 %v1635, %v1932
        %1934 = vdwg.mxu0
        %1935 = vmatpush.bf16.msra.mxu0 0
        %1936 = vmatpush.bf16.msra.mxu0 0
        %1937 = vmatpush.bf16.msra.mxu0 0
        %1938 = vmatpush.bf16.msra.mxu0 0
        %1939 = vmatpush.bf16.msra.mxu0 0
        %1940 = vmatpush.bf16.msra.mxu0 0
        %1941 = vmatpush.bf16.msra.mxu0 %v1780
        %1942 = vmatpush.bf16.msra.mxu0 %v1764
        %1943 = vmatmul.bf16.gmra.mxu0 %v1821
        %v1944 = vpop.f32.mrf.mxu0
        %v1945 = vadd.f32 %v1636, %v1944
        %v1946 = vpop.f32.mrf.mxu0
        %v1947 = vadd.f32 %v1636, %v1946
        %1948 = vdwg.mxu0
        %1949 = vmatpush.bf16.msra.mxu0 0
        %1950 = vmatpush.bf16.msra.mxu0 0
        %1951 = vmatpush.bf16.msra.mxu0 0
        %1952 = vmatpush.bf16.msra.mxu0 0
        %1953 = vmatpush.bf16.msra.mxu0 0
        %1954 = vmatpush.bf16.msra.mxu0 0
        %1955 = vmatpush.bf16.msra.mxu0 %v1781
        %1956 = vmatpush.bf16.msra.mxu0 %v1765
        %1957 = vmatmul.bf16.gmra.mxu0 %v1821
        %v1958 = vpop.f32.mrf.mxu0
        %v1959 = vadd.f32 %v1637, %v1958
        %v1960 = vpop.f32.mrf.mxu0
        %v1961 = vadd.f32 %v1637, %v1960
        %1962 = vdwg.mxu0
        %1963 = vmatpush.bf16.msra.mxu0 0
        %1964 = vmatpush.bf16.msra.mxu0 0
        %1965 = vmatpush.bf16.msra.mxu0 0
        %1966 = vmatpush.bf16.msra.mxu0 0
        %1967 = vmatpush.bf16.msra.mxu0 0
        %1968 = vmatpush.bf16.msra.mxu0 0
        %1969 = vmatpush.bf16.msra.mxu0 %v1782
        %1970 = vmatpush.bf16.msra.mxu0 %v1766
        %1971 = vmatmul.bf16.gmra.mxu0 %v1821
        %v1972 = vpop.f32.mrf.mxu0
        %v1973 = vadd.f32 %v1638, %v1972
        %v1974 = vpop.f32.mrf.mxu0
        %v1975 = vadd.f32 %v1638, %v1974
        %1976 = vdwg.mxu0
        %1977 = vmatpush.bf16.msra.mxu0 0
        %1978 = vmatpush.bf16.msra.mxu0 0
        %1979 = vmatpush.bf16.msra.mxu0 0
        %1980 = vmatpush.bf16.msra.mxu0 0
        %1981 = vmatpush.bf16.msra.mxu0 0
        %1982 = vmatpush.bf16.msra.mxu0 0
        %1983 = vmatpush.bf16.msra.mxu0 %v1783
        %1984 = vmatpush.bf16.msra.mxu0 %v1767
        %1985 = vmatmul.bf16.gmra.mxu0 %v1821
        %v1986 = vpop.f32.mrf.mxu0
        %v1987 = vadd.f32 %v1639, %v1986
        %v1988 = vpop.f32.mrf.mxu0
        %v1989 = vadd.f32 %v1639, %v1988
        %1990 = vdwg.mxu0
        %1991 = vmatpush.bf16.msra.mxu0 0
        %1992 = vmatpush.bf16.msra.mxu0 0
        %1993 = vmatpush.bf16.msra.mxu0 0
        %1994 = vmatpush.bf16.msra.mxu0 0
        %1995 = vmatpush.bf16.msra.mxu0 0
        %1996 = vmatpush.bf16.msra.mxu0 0
        %1997 = vmatpush.bf16.msra.mxu0 %v1784
        %1998 = vmatpush.bf16.msra.mxu0 %v1768
        %1999 = vmatmul.bf16.gmra.mxu0 %v1821
        %v2000 = vpop.f32.mrf.mxu0
        %v2001 = vadd.f32 %v1640, %v2000
        %v2002 = vpop.f32.mrf.mxu0
        %v2003 = vadd.f32 %v1640, %v2002
        %2004 = vdwg.mxu0
        %2005 = vmatpush.bf16.msra.mxu0 0
        %2006 = vmatpush.bf16.msra.mxu0 0
        %2007 = vmatpush.bf16.msra.mxu0 0
        %2008 = vmatpush.bf16.msra.mxu0 0
        %2009 = vmatpush.bf16.msra.mxu0 0
        %2010 = vmatpush.bf16.msra.mxu0 0
        %2011 = vmatpush.bf16.msra.mxu0 %v1785
        %2012 = vmatpush.bf16.msra.mxu0 %v1769
        %2013 = vmatmul.bf16.gmra.mxu0 %v1821
        %v2014 = vpop.f32.mrf.mxu0
        %v2015 = vadd.f32 %v1641, %v2014
        %v2016 = vpop.f32.mrf.mxu0
        %v2017 = vadd.f32 %v1641, %v2016
        %2018 = vdwg.mxu0
        %2019 = vmatpush.bf16.msra.mxu0 0
        %2020 = vmatpush.bf16.msra.mxu0 0
        %2021 = vmatpush.bf16.msra.mxu0 0
        %2022 = vmatpush.bf16.msra.mxu0 0
        %2023 = vmatpush.bf16.msra.mxu0 0
        %2024 = vmatpush.bf16.msra.mxu0 0
        %2025 = vmatpush.bf16.msra.mxu0 %v1786
        %2026 = vmatpush.bf16.msra.mxu0 %v1770
        %2027 = vmatmul.bf16.gmra.mxu0 %v1821
        %v2028 = vpop.f32.mrf.mxu0
        %v2029 = vadd.f32 %v1642, %v2028
        %v2030 = vpop.f32.mrf.mxu0
        %v2031 = vadd.f32 %v1642, %v2030
        %2032 = vdwg.mxu0
        %2033 = vmatpush.bf16.msra.mxu0 0
        %2034 = vmatpush.bf16.msra.mxu0 0
        %2035 = vmatpush.bf16.msra.mxu0 0
        %2036 = vmatpush.bf16.msra.mxu0 0
        %2037 = vmatpush.bf16.msra.mxu0 0
        %2038 = vmatpush.bf16.msra.mxu0 0
        %2039 = vmatpush.bf16.msra.mxu0 %v1787
        %2040 = vmatpush.bf16.msra.mxu0 %v1771
        %2041 = vmatmul.bf16.gmra.mxu0 %v1821
        %v2042 = vpop.f32.mrf.mxu0
        %v2043 = vadd.f32 %v1643, %v2042
        %v2044 = vpop.f32.mrf.mxu0
        %v2045 = vadd.f32 %v1643, %v2044
        %2046 = vdwg.mxu0
        %v2047 = vmax.f32 %v1833, 0.0
        %v2048 = vmax.f32 %v1847, 0.0
        %v2049 = vmax.f32 %v1861, 0.0
        %v2050 = vmax.f32 %v1875, 0.0
        %v2051 = vmax.f32 %v1889, 0.0
        %v2052 = vmax.f32 %v1903, 0.0
        %v2053 = vmax.f32 %v1917, 0.0
        %v2054 = vmax.f32 %v1931, 0.0
        %v2055 = vmax.f32 %v1945, 0.0
        %v2056 = vmax.f32 %v1959, 0.0
        %v2057 = vmax.f32 %v1973, 0.0
        %v2058 = vmax.f32 %v1987, 0.0
        %v2059 = vmax.f32 %v2001, 0.0
        %v2060 = vmax.f32 %v2015, 0.0
        %v2061 = vmax.f32 %v2029, 0.0
        %v2062 = vmax.f32 %v2043, 0.0
        %v2063 = vmax.f32 %v1835, 0.0
        %v2064 = vmax.f32 %v1849, 0.0
        %v2065 = vmax.f32 %v1863, 0.0
        %v2066 = vmax.f32 %v1877, 0.0
        %v2067 = vmax.f32 %v1891, 0.0
        %v2068 = vmax.f32 %v1905, 0.0
        %v2069 = vmax.f32 %v1919, 0.0
        %v2070 = vmax.f32 %v1933, 0.0
        %v2071 = vmax.f32 %v1947, 0.0
        %v2072 = vmax.f32 %v1961, 0.0
        %v2073 = vmax.f32 %v1975, 0.0
        %v2074 = vmax.f32 %v1989, 0.0
        %v2075 = vmax.f32 %v2003, 0.0
        %v2076 = vmax.f32 %v2017, 0.0
        %v2077 = vmax.f32 %v2031, 0.0
        %v2078 = vmax.f32 %v2045, 0.0
        %v2079 = vpack.c.bf16 %v2063, %v2047
        %v2080 = vpack.c.bf16 %v2064, %v2048
        %v2081 = vpack.c.bf16 %v2065, %v2049
        %v2082 = vpack.c.bf16 %v2066, %v2050
        %v2083 = vpack.c.bf16 %v2067, %v2051
        %v2084 = vpack.c.bf16 %v2068, %v2052
        %v2085 = vpack.c.bf16 %v2069, %v2053
        %v2086 = vpack.c.bf16 %v2070, %v2054
        %v2087 = vpack.c.bf16 %v2071, %v2055
        %v2088 = vpack.c.bf16 %v2072, %v2056
        %v2089 = vpack.c.bf16 %v2073, %v2057
        %v2090 = vpack.c.bf16 %v2074, %v2058
        %v2091 = vpack.c.bf16 %v2075, %v2059
        %v2092 = vpack.c.bf16 %v2076, %v2060
        %v2093 = vpack.c.bf16 %v2077, %v2061
        %v2094 = vpack.c.bf16 %v2078, %v2062
        %v2095 = vld [vmem:[%s793] sm:$0xff]
        %v2096 = vld [vmem:[%s793 + $0x8] sm:$0xff]
        %v2097 = vld [vmem:[%s793 + $0x10] sm:$0xff]
        %v2098 = vld [vmem:[%s793 + $0x18] sm:$0xff]
        %v2099 = vld [vmem:[%s793 + $0x20] sm:$0xff]
        %v2100 = vld [vmem:[%s793 + $0x28] sm:$0xff]
        %v2101 = vld [vmem:[%s793 + $0x30] sm:$0xff]
        %v2102 = vld [vmem:[%s793 + $0x38] sm:$0xff]
        %v2103 = vld [vmem:[%s793 + $0x40] sm:$0xff]
        %v2104 = vld [vmem:[%s793 + $0x48] sm:$0xff]
        %v2105 = vld [vmem:[%s793 + $0x50] sm:$0xff]
        %v2106 = vld [vmem:[%s793 + $0x58] sm:$0xff]
        %v2107 = vld [vmem:[%s793 + $0x60] sm:$0xff]
        %v2108 = vld [vmem:[%s793 + $0x68] sm:$0xff]
        %v2109 = vld [vmem:[%s793 + $0x70] sm:$0xff]
        %v2110 = vld [vmem:[%s793 + $0x78] sm:$0xff]
        %v2111 = vld [vmem:[%s793 + $0x80] sm:$0xff]
        %v2112 = vld [vmem:[%s793 + $0x88] sm:$0xff]
        %v2113 = vld [vmem:[%s793 + $0x90] sm:$0xff]
        %v2114 = vld [vmem:[%s793 + $0x98] sm:$0xff]
        %v2115 = vld [vmem:[%s793 + $0xa0] sm:$0xff]
        %v2116 = vld [vmem:[%s793 + $0xa8] sm:$0xff]
        %v2117 = vld [vmem:[%s793 + $0xb0] sm:$0xff]
        %v2118 = vld [vmem:[%s793 + $0xb8] sm:$0xff]
        %v2119 = vld [vmem:[%s793 + $0xc0] sm:$0xff]
        %v2120 = vld [vmem:[%s793 + $0xc8] sm:$0xff]
        %v2121 = vld [vmem:[%s793 + $0xd0] sm:$0xff]
        %v2122 = vld [vmem:[%s793 + $0xd8] sm:$0xff]
        %v2123 = vld [vmem:[%s793 + $0xe0] sm:$0xff]
        %v2124 = vld [vmem:[%s793 + $0xe8] sm:$0xff]
        %v2125 = vld [vmem:[%s793 + $0xf0] sm:$0xff]
        %v2126 = vld [vmem:[%s793 + $0xf8] sm:$0xff]
        %v2127 = vld [vmem:[%s914] sm:$0x1]
        %v2129 = vperm.slane %v2127, 0
        %v2163 = vunpack.c.l.b16 %v2095
        %v2164 = vunpack.c.h.b16 %v2095
        %v2165 = vunpack.c.l.b16 %v2096
        %v2166 = vunpack.c.h.b16 %v2096
        %v2167 = vunpack.c.l.b16 %v2097
        %v2168 = vunpack.c.h.b16 %v2097
        %v2169 = vunpack.c.l.b16 %v2098
        %v2170 = vunpack.c.h.b16 %v2098
        %v2171 = vunpack.c.l.b16 %v2099
        %v2172 = vunpack.c.h.b16 %v2099
        %v2173 = vunpack.c.l.b16 %v2100
        %v2174 = vunpack.c.h.b16 %v2100
        %v2175 = vunpack.c.l.b16 %v2101
        %v2176 = vunpack.c.h.b16 %v2101
        %v2177 = vunpack.c.l.b16 %v2102
        %v2178 = vunpack.c.h.b16 %v2102
        %v2179 = vunpack.c.l.b16 %v2103
        %v2180 = vunpack.c.h.b16 %v2103
        %v2181 = vunpack.c.l.b16 %v2104
        %v2182 = vunpack.c.h.b16 %v2104
        %v2183 = vunpack.c.l.b16 %v2105
        %v2184 = vunpack.c.h.b16 %v2105
        %v2185 = vunpack.c.l.b16 %v2106
        %v2186 = vunpack.c.h.b16 %v2106
        %v2187 = vunpack.c.l.b16 %v2107
        %v2188 = vunpack.c.h.b16 %v2107
        %v2189 = vunpack.c.l.b16 %v2108
        %v2190 = vunpack.c.h.b16 %v2108
        %v2191 = vunpack.c.l.b16 %v2109
        %v2192 = vunpack.c.h.b16 %v2109
        %v2193 = vunpack.c.l.b16 %v2110
        %v2194 = vunpack.c.h.b16 %v2110
        %v2195 = vunpack.c.l.b16 %v2111
        %v2196 = vunpack.c.h.b16 %v2111
        %v2197 = vunpack.c.l.b16 %v2112
        %v2198 = vunpack.c.h.b16 %v2112
        %v2199 = vunpack.c.l.b16 %v2113
        %v2200 = vunpack.c.h.b16 %v2113
        %v2201 = vunpack.c.l.b16 %v2114
        %v2202 = vunpack.c.h.b16 %v2114
        %v2203 = vunpack.c.l.b16 %v2115
        %v2204 = vunpack.c.h.b16 %v2115
        %v2205 = vunpack.c.l.b16 %v2116
        %v2206 = vunpack.c.h.b16 %v2116
        %v2207 = vunpack.c.l.b16 %v2117
        %v2208 = vunpack.c.h.b16 %v2117
        %v2209 = vunpack.c.l.b16 %v2118
        %v2210 = vunpack.c.h.b16 %v2118
        %v2211 = vunpack.c.l.b16 %v2119
        %v2212 = vunpack.c.h.b16 %v2119
        %v2213 = vunpack.c.l.b16 %v2120
        %v2214 = vunpack.c.h.b16 %v2120
        %v2215 = vunpack.c.l.b16 %v2121
        %v2216 = vunpack.c.h.b16 %v2121
        %v2217 = vunpack.c.l.b16 %v2122
        %v2218 = vunpack.c.h.b16 %v2122
        %v2219 = vunpack.c.l.b16 %v2123
        %v2220 = vunpack.c.h.b16 %v2123
        %v2221 = vunpack.c.l.b16 %v2124
        %v2222 = vunpack.c.h.b16 %v2124
        %v2223 = vunpack.c.l.b16 %v2125
        %v2224 = vunpack.c.h.b16 %v2125
        %v2225 = vunpack.c.l.b16 %v2126
        %v2226 = vunpack.c.h.b16 %v2126
        %v2227 = vpack.c.b16 %v2179, %v2163
        %v2228 = vpack.c.b16 %v2180, %v2164
        %v2229 = vpack.c.b16 %v2181, %v2165
        %v2230 = vpack.c.b16 %v2182, %v2166
        %v2231 = vpack.c.b16 %v2183, %v2167
        %v2232 = vpack.c.b16 %v2184, %v2168
        %v2233 = vpack.c.b16 %v2185, %v2169
        %v2234 = vpack.c.b16 %v2186, %v2170
        %v2235 = vpack.c.b16 %v2187, %v2171
        %v2236 = vpack.c.b16 %v2188, %v2172
        %v2237 = vpack.c.b16 %v2189, %v2173
        %v2238 = vpack.c.b16 %v2190, %v2174
        %v2239 = vpack.c.b16 %v2191, %v2175
        %v2240 = vpack.c.b16 %v2192, %v2176
        %v2241 = vpack.c.b16 %v2193, %v2177
        %v2242 = vpack.c.b16 %v2194, %v2178
        %v2243 = vpack.c.b16 %v2211, %v2195
        %v2244 = vpack.c.b16 %v2212, %v2196
        %v2245 = vpack.c.b16 %v2213, %v2197
        %v2246 = vpack.c.b16 %v2214, %v2198
        %v2247 = vpack.c.b16 %v2215, %v2199
        %v2248 = vpack.c.b16 %v2216, %v2200
        %v2249 = vpack.c.b16 %v2217, %v2201
        %v2250 = vpack.c.b16 %v2218, %v2202
        %v2251 = vpack.c.b16 %v2219, %v2203
        %v2252 = vpack.c.b16 %v2220, %v2204
        %v2253 = vpack.c.b16 %v2221, %v2205
        %v2254 = vpack.c.b16 %v2222, %v2206
        %v2255 = vpack.c.b16 %v2223, %v2207
        %v2256 = vpack.c.b16 %v2224, %v2208
        %v2257 = vpack.c.b16 %v2225, %v2209
        %v2258 = vpack.c.b16 %v2226, %v2210
        %2291 = vmatpush.bf16.xpose.msra.mxu0 0
        %2292 = vmatpush.bf16.xpose.msra.mxu0 0
        %2293 = vmatpush.bf16.xpose.msra.mxu0 0
        %2294 = vmatpush.bf16.xpose.msra.mxu0 0
        %2295 = vmatpush.bf16.xpose.msra.mxu0 0
        %2296 = vmatpush.bf16.xpose.msra.mxu0 0
        %2297 = vmatpush.bf16.xpose.msra.mxu0 %v2243
        %2298 = vmatpush.bf16.xpose.msra.mxu0 %v2227
        %2299 = vmatmul.bf16.gmra.mxu0 %v2079
        %v2300 = vpop.f32.mrf.mxu0
        %v2301 = vadd.f32 %v2129, %v2300
        %v2302 = vpop.f32.mrf.mxu0
        %v2303 = vadd.f32 %v2129, %v2302
        %2304 = vdwg.mxu0
        %2305 = vmatpush.bf16.xpose.msra.mxu0 0
        %2306 = vmatpush.bf16.xpose.msra.mxu0 0
        %2307 = vmatpush.bf16.xpose.msra.mxu0 0
        %2308 = vmatpush.bf16.xpose.msra.mxu0 0
        %2309 = vmatpush.bf16.xpose.msra.mxu0 0
        %2310 = vmatpush.bf16.xpose.msra.mxu0 0
        %2311 = vmatpush.bf16.xpose.msra.mxu0 %v2244
        %2312 = vmatpush.bf16.xpose.msra.mxu0 %v2228
        %2313 = vmatmul.bf16.gmra.mxu0 %v2080
        %v2314 = vpop.f32.mrf.mxu0
        %v2315 = vadd.f32 %v2301, %v2314
        %v2316 = vpop.f32.mrf.mxu0
        %v2317 = vadd.f32 %v2303, %v2316
        %2318 = vdwg.mxu0
        %2319 = vmatpush.bf16.xpose.msra.mxu0 0
        %2320 = vmatpush.bf16.xpose.msra.mxu0 0
        %2321 = vmatpush.bf16.xpose.msra.mxu0 0
        %2322 = vmatpush.bf16.xpose.msra.mxu0 0
        %2323 = vmatpush.bf16.xpose.msra.mxu0 0
        %2324 = vmatpush.bf16.xpose.msra.mxu0 0
        %2325 = vmatpush.bf16.xpose.msra.mxu0 %v2245
        %2326 = vmatpush.bf16.xpose.msra.mxu0 %v2229
        %2327 = vmatmul.bf16.gmra.mxu0 %v2081
        %v2328 = vpop.f32.mrf.mxu0
        %v2329 = vadd.f32 %v2315, %v2328
        %v2330 = vpop.f32.mrf.mxu0
        %v2331 = vadd.f32 %v2317, %v2330
        %2332 = vdwg.mxu0
        %2333 = vmatpush.bf16.xpose.msra.mxu0 0
        %2334 = vmatpush.bf16.xpose.msra.mxu0 0
        %2335 = vmatpush.bf16.xpose.msra.mxu0 0
        %2336 = vmatpush.bf16.xpose.msra.mxu0 0
        %2337 = vmatpush.bf16.xpose.msra.mxu0 0
        %2338 = vmatpush.bf16.xpose.msra.mxu0 0
        %2339 = vmatpush.bf16.xpose.msra.mxu0 %v2246
        %2340 = vmatpush.bf16.xpose.msra.mxu0 %v2230
        %2341 = vmatmul.bf16.gmra.mxu0 %v2082
        %v2342 = vpop.f32.mrf.mxu0
        %v2343 = vadd.f32 %v2329, %v2342
        %v2344 = vpop.f32.mrf.mxu0
        %v2345 = vadd.f32 %v2331, %v2344
        %2346 = vdwg.mxu0
        %2347 = vmatpush.bf16.xpose.msra.mxu0 0
        %2348 = vmatpush.bf16.xpose.msra.mxu0 0
        %2349 = vmatpush.bf16.xpose.msra.mxu0 0
        %2350 = vmatpush.bf16.xpose.msra.mxu0 0
        %2351 = vmatpush.bf16.xpose.msra.mxu0 0
        %2352 = vmatpush.bf16.xpose.msra.mxu0 0
        %2353 = vmatpush.bf16.xpose.msra.mxu0 %v2247
        %2354 = vmatpush.bf16.xpose.msra.mxu0 %v2231
        %2355 = vmatmul.bf16.gmra.mxu0 %v2083
        %v2356 = vpop.f32.mrf.mxu0
        %v2357 = vadd.f32 %v2343, %v2356
        %v2358 = vpop.f32.mrf.mxu0
        %v2359 = vadd.f32 %v2345, %v2358
        %2360 = vdwg.mxu0
        %2361 = vmatpush.bf16.xpose.msra.mxu0 0
        %2362 = vmatpush.bf16.xpose.msra.mxu0 0
        %2363 = vmatpush.bf16.xpose.msra.mxu0 0
        %2364 = vmatpush.bf16.xpose.msra.mxu0 0
        %2365 = vmatpush.bf16.xpose.msra.mxu0 0
        %2366 = vmatpush.bf16.xpose.msra.mxu0 0
        %2367 = vmatpush.bf16.xpose.msra.mxu0 %v2248
        %2368 = vmatpush.bf16.xpose.msra.mxu0 %v2232
        %2369 = vmatmul.bf16.gmra.mxu0 %v2084
        %v2370 = vpop.f32.mrf.mxu0
        %v2371 = vadd.f32 %v2357, %v2370
        %v2372 = vpop.f32.mrf.mxu0
        %v2373 = vadd.f32 %v2359, %v2372
        %2374 = vdwg.mxu0
        %2375 = vmatpush.bf16.xpose.msra.mxu0 0
        %2376 = vmatpush.bf16.xpose.msra.mxu0 0
        %2377 = vmatpush.bf16.xpose.msra.mxu0 0
        %2378 = vmatpush.bf16.xpose.msra.mxu0 0
        %2379 = vmatpush.bf16.xpose.msra.mxu0 0
        %2380 = vmatpush.bf16.xpose.msra.mxu0 0
        %2381 = vmatpush.bf16.xpose.msra.mxu0 %v2249
        %2382 = vmatpush.bf16.xpose.msra.mxu0 %v2233
        %2383 = vmatmul.bf16.gmra.mxu0 %v2085
        %v2384 = vpop.f32.mrf.mxu0
        %v2385 = vadd.f32 %v2371, %v2384
        %v2386 = vpop.f32.mrf.mxu0
        %v2387 = vadd.f32 %v2373, %v2386
        %2388 = vdwg.mxu0
        %2389 = vmatpush.bf16.xpose.msra.mxu0 0
        %2390 = vmatpush.bf16.xpose.msra.mxu0 0
        %2391 = vmatpush.bf16.xpose.msra.mxu0 0
        %2392 = vmatpush.bf16.xpose.msra.mxu0 0
        %2393 = vmatpush.bf16.xpose.msra.mxu0 0
        %2394 = vmatpush.bf16.xpose.msra.mxu0 0
        %2395 = vmatpush.bf16.xpose.msra.mxu0 %v2250
        %2396 = vmatpush.bf16.xpose.msra.mxu0 %v2234
        %2397 = vmatmul.bf16.gmra.mxu0 %v2086
        %v2398 = vpop.f32.mrf.mxu0
        %v2399 = vadd.f32 %v2385, %v2398
        %v2400 = vpop.f32.mrf.mxu0
        %v2401 = vadd.f32 %v2387, %v2400
        %2402 = vdwg.mxu0
        %2403 = vmatpush.bf16.xpose.msra.mxu0 0
        %2404 = vmatpush.bf16.xpose.msra.mxu0 0
        %2405 = vmatpush.bf16.xpose.msra.mxu0 0
        %2406 = vmatpush.bf16.xpose.msra.mxu0 0
        %2407 = vmatpush.bf16.xpose.msra.mxu0 0
        %2408 = vmatpush.bf16.xpose.msra.mxu0 0
        %2409 = vmatpush.bf16.xpose.msra.mxu0 %v2251
        %2410 = vmatpush.bf16.xpose.msra.mxu0 %v2235
        %2411 = vmatmul.bf16.gmra.mxu0 %v2087
        %v2412 = vpop.f32.mrf.mxu0
        %v2413 = vadd.f32 %v2399, %v2412
        %v2414 = vpop.f32.mrf.mxu0
        %v2415 = vadd.f32 %v2401, %v2414
        %2416 = vdwg.mxu0
        %2417 = vmatpush.bf16.xpose.msra.mxu0 0
        %2418 = vmatpush.bf16.xpose.msra.mxu0 0
        %2419 = vmatpush.bf16.xpose.msra.mxu0 0
        %2420 = vmatpush.bf16.xpose.msra.mxu0 0
        %2421 = vmatpush.bf16.xpose.msra.mxu0 0
        %2422 = vmatpush.bf16.xpose.msra.mxu0 0
        %2423 = vmatpush.bf16.xpose.msra.mxu0 %v2252
        %2424 = vmatpush.bf16.xpose.msra.mxu0 %v2236
        %2425 = vmatmul.bf16.gmra.mxu0 %v2088
        %v2426 = vpop.f32.mrf.mxu0
        %v2427 = vadd.f32 %v2413, %v2426
        %v2428 = vpop.f32.mrf.mxu0
        %v2429 = vadd.f32 %v2415, %v2428
        %2430 = vdwg.mxu0
        %2431 = vmatpush.bf16.xpose.msra.mxu0 0
        %2432 = vmatpush.bf16.xpose.msra.mxu0 0
        %2433 = vmatpush.bf16.xpose.msra.mxu0 0
        %2434 = vmatpush.bf16.xpose.msra.mxu0 0
        %2435 = vmatpush.bf16.xpose.msra.mxu0 0
        %2436 = vmatpush.bf16.xpose.msra.mxu0 0
        %2437 = vmatpush.bf16.xpose.msra.mxu0 %v2253
        %2438 = vmatpush.bf16.xpose.msra.mxu0 %v2237
        %2439 = vmatmul.bf16.gmra.mxu0 %v2089
        %v2440 = vpop.f32.mrf.mxu0
        %v2441 = vadd.f32 %v2427, %v2440
        %v2442 = vpop.f32.mrf.mxu0
        %v2443 = vadd.f32 %v2429, %v2442
        %2444 = vdwg.mxu0
        %2445 = vmatpush.bf16.xpose.msra.mxu0 0
        %2446 = vmatpush.bf16.xpose.msra.mxu0 0
        %2447 = vmatpush.bf16.xpose.msra.mxu0 0
        %2448 = vmatpush.bf16.xpose.msra.mxu0 0
        %2449 = vmatpush.bf16.xpose.msra.mxu0 0
        %2450 = vmatpush.bf16.xpose.msra.mxu0 0
        %2451 = vmatpush.bf16.xpose.msra.mxu0 %v2254
        %2452 = vmatpush.bf16.xpose.msra.mxu0 %v2238
        %2453 = vmatmul.bf16.gmra.mxu0 %v2090
        %v2454 = vpop.f32.mrf.mxu0
        %v2455 = vadd.f32 %v2441, %v2454
        %v2456 = vpop.f32.mrf.mxu0
        %v2457 = vadd.f32 %v2443, %v2456
        %2458 = vdwg.mxu0
        %2459 = vmatpush.bf16.xpose.msra.mxu0 0
        %2460 = vmatpush.bf16.xpose.msra.mxu0 0
        %2461 = vmatpush.bf16.xpose.msra.mxu0 0
        %2462 = vmatpush.bf16.xpose.msra.mxu0 0
        %2463 = vmatpush.bf16.xpose.msra.mxu0 0
        %2464 = vmatpush.bf16.xpose.msra.mxu0 0
        %2465 = vmatpush.bf16.xpose.msra.mxu0 %v2255
        %2466 = vmatpush.bf16.xpose.msra.mxu0 %v2239
        %2467 = vmatmul.bf16.gmra.mxu0 %v2091
        %v2468 = vpop.f32.mrf.mxu0
        %v2469 = vadd.f32 %v2455, %v2468
        %v2470 = vpop.f32.mrf.mxu0
        %v2471 = vadd.f32 %v2457, %v2470
        %2472 = vdwg.mxu0
        %2473 = vmatpush.bf16.xpose.msra.mxu0 0
        %2474 = vmatpush.bf16.xpose.msra.mxu0 0
        %2475 = vmatpush.bf16.xpose.msra.mxu0 0
        %2476 = vmatpush.bf16.xpose.msra.mxu0 0
        %2477 = vmatpush.bf16.xpose.msra.mxu0 0
        %2478 = vmatpush.bf16.xpose.msra.mxu0 0
        %2479 = vmatpush.bf16.xpose.msra.mxu0 %v2256
        %2480 = vmatpush.bf16.xpose.msra.mxu0 %v2240
        %2481 = vmatmul.bf16.gmra.mxu0 %v2092
        %v2482 = vpop.f32.mrf.mxu0
        %v2483 = vadd.f32 %v2469, %v2482
        %v2484 = vpop.f32.mrf.mxu0
        %v2485 = vadd.f32 %v2471, %v2484
        %2486 = vdwg.mxu0
        %2487 = vmatpush.bf16.xpose.msra.mxu0 0
        %2488 = vmatpush.bf16.xpose.msra.mxu0 0
        %2489 = vmatpush.bf16.xpose.msra.mxu0 0
        %2490 = vmatpush.bf16.xpose.msra.mxu0 0
        %2491 = vmatpush.bf16.xpose.msra.mxu0 0
        %2492 = vmatpush.bf16.xpose.msra.mxu0 0
        %2493 = vmatpush.bf16.xpose.msra.mxu0 %v2257
        %2494 = vmatpush.bf16.xpose.msra.mxu0 %v2241
        %2495 = vmatmul.bf16.gmra.mxu0 %v2093
        %v2496 = vpop.f32.mrf.mxu0
        %v2497 = vadd.f32 %v2483, %v2496
        %v2498 = vpop.f32.mrf.mxu0
        %v2499 = vadd.f32 %v2485, %v2498
        %2500 = vdwg.mxu0
        %2501 = vmatpush.bf16.xpose.msra.mxu0 0
        %2502 = vmatpush.bf16.xpose.msra.mxu0 0
        %2503 = vmatpush.bf16.xpose.msra.mxu0 0
        %2504 = vmatpush.bf16.xpose.msra.mxu0 0
        %2505 = vmatpush.bf16.xpose.msra.mxu0 0
        %2506 = vmatpush.bf16.xpose.msra.mxu0 0
        %2507 = vmatpush.bf16.xpose.msra.mxu0 %v2258
        %2508 = vmatpush.bf16.xpose.msra.mxu0 %v2242
        %2509 = vmatmul.bf16.gmra.mxu0 %v2094
        %v2510 = vpop.f32.mrf.mxu0
        %v2511 = vadd.f32 %v2497, %v2510
        %v2512 = vpop.f32.mrf.mxu0
        %v2513 = vadd.f32 %v2499, %v2512
        %2514 = vdwg.mxu0
        %v2515 = vadd.f32 %v1589, %v2511
        %v2516 = vadd.f32 %v1590, %v2513
        %v2517 = vsel %vm966, %v2515, 0.0
        %2518 = vadd.xlane.f32.xlu0 %v2517
        %v2519 = vpop.xlane.xlu0 %2518
        %v2520 = vsel %vm966, %v2516, 0.0
        %2521 = vadd.xlane.f32.xlu0 %v2520
        %v2522 = vpop.xlane.xlu0 %2521
        %v2523 = vmul.f32 %v2519, %v1540
        %v2524 = vmul.f32 %v2522, %v1540
        %v2525 = vsub.f32 %v2515, %v2523
        %v2526 = vsub.f32 %v2516, %v2524
        %v2527 = vmul.f32 %v2525, %v2525
        %v2528 = vmul.f32 %v2526, %v2526
        %v2529 = vsel %vm966, %v2527, 0.0
        %2530 = vadd.xlane.f32.xlu0 %v2529
        %v2531 = vpop.xlane.xlu0 %2530
        %v2532 = vsel %vm966, %v2528, 0.0
        %2533 = vadd.xlane.f32.xlu0 %v2532
        %v2534 = vpop.xlane.xlu0 %2533
        %v2535 = vmul.f32 %v2531, %v1540
        %v2536 = vmul.f32 %v2534, %v1540
        %v2537 = vadd.f32 %v2535, 1e-05
        %v2538 = vadd.f32 %v2536, 1e-05
        %v2539 = vrsqrt.pop %v2537
        %v2540 = vmul.f32 %v2539, %v2537
        %v2541 = vmul.f32 %v2540, %v2539
        %v2542 = vmul.f32 0.5, %v2541
        %v2543 = vsub.f32 1.5, %v2542
        %v2544 = vmul.f32 %v2539, %v2543
        %vm2545 = vweird.f32 %v2537
        %vm2546 = vweird.f32 %v2539
        %vm2547 = vmor %vm2545, %vm2546
        %v2548 = vsel %vm2547, %v2539, %v2544
        %v2549 = vrsqrt.pop %v2538
        %v2550 = vmul.f32 %v2549, %v2538
        %v2551 = vmul.f32 %v2550, %v2549
        %v2552 = vmul.f32 0.5, %v2551
        %v2553 = vsub.f32 1.5, %v2552
        %v2554 = vmul.f32 %v2549, %v2553
        %vm2555 = vweird.f32 %v2538
        %vm2556 = vweird.f32 %v2549
        %vm2557 = vmor %vm2555, %vm2556
        %v2558 = vsel %vm2557, %v2549, %v2554
        %v2559 = vmul.f32 %v2525, %v2548
        %v2560 = vmul.f32 %v2526, %v2558
        %v2561 = vld [vmem:[%s917] sm:$0x1]
        %v2563 = vperm.slane %v2561, 0
        %v2565 = vmul.f32 %v2559, %v2563
        %v2566 = vmul.f32 %v2560, %v2563
        %v2567 = vld [vmem:[%s802] sm:$0x1]
        %v2569 = vperm.slane %v2567, 0
        %v2571 = vadd.f32 %v2565, %v2569
        %v2572 = vadd.f32 %v2566, %v2569
        %2573 = vst.msk [vmem:[#allocation2] sm:$0xff] %vm966, %v2571
        %2574 = vst.msk [vmem:[#allocation2 + $0x8] sm:$0xff] %vm966, %v2572
        %p2575 = scmp.eq.s32.totalorder %s35, 1
        // Predicated region
        $region133: #{vit_forward.1} parent=99 // pred_check
          %p2576 = pneg %p2575
        $region134: #{vit_forward.1} parent=99 // pred_check_branch
          %2578 = sbr.rel (%p2576) target = $region136
        $region135: #{vit_forward.1} parent=99 // pred_region
          %v2579 = vld [vmem:[%s5] sm:$0x3]
          %v2581 = vsel %vm1042, %v2579, 0
          %2583 = vmatpush.msra.mxu0 0.0
          %2584 = vmatpush.msra.mxu0 0.0
          %2585 = vmatpush.msra.mxu0 0.0
          %2586 = vmatpush.msra.mxu0 0.0
          %2587 = vmatpush.msra.mxu0 0.0
          %2588 = vmatpush.msra.mxu0 0.0
          %2589 = vmatpush.msra.mxu0 0.0
          %2590 = vmatpush.msra.mxu0 0.0
          %2591 = vmatpush.msra.mxu0 0.0
          %2592 = vmatpush.msra.mxu0 0.0
          %2593 = vmatpush.msra.mxu0 0.0
          %2594 = vmatpush.msra.mxu0 0.0
          %2595 = vmatpush.msra.mxu0 0.0
          %2596 = vmatpush.msra.mxu0 0.0
          %2597 = vmatpush.msra.mxu0 %v2572
          %2598 = vmatpush.msra.mxu0 %v2571
          %2599 = vmatmul.f32.gmra.mxu0 %v2581
          %v2600 = vpop.f32.mrf.mxu0
          %v2601 = vadd.f32 0.0, %v2600
          %2602 = vdwg.mxu0
          %v2603 = vld [vmem:[%s6] sm:$0xff]
          %v2604 = vld [vmem:[%s6 + $0x8] sm:$0xff]
          %v2605 = vld [vmem:[%s6 + $0x10] sm:$0xff]
          %v2606 = vld [vmem:[%s6 + $0x18] sm:$0xff]
          %v2607 = vld [vmem:[#allocation3] sm:$0x1]
          %v2609 = vperm.slane %v2607, 0
          %v2612 = vsel %vm966, %v2601, 0
          %2614 = vmatpush.msra.mxu0 0.0
          %2615 = vmatpush.msra.mxu0 0.0
          %2616 = vmatpush.msra.mxu0 0.0
          %2617 = vmatpush.msra.mxu0 0.0
          %2618 = vmatpush.msra.mxu0 0.0
          %2619 = vmatpush.msra.mxu0 0.0
          %2620 = vmatpush.msra.mxu0 0.0
          %2621 = vmatpush.msra.mxu0 0.0
          %2622 = vmatpush.msra.mxu0 0.0
          %2623 = vmatpush.msra.mxu0 0.0
          %2624 = vmatpush.msra.mxu0 0.0
          %2625 = vmatpush.msra.mxu0 0.0
          %2626 = vmatpush.msra.mxu0 %v2606
          %2627 = vmatpush.msra.mxu0 %v2605
          %2628 = vmatpush.msra.mxu0 %v2604
          %2629 = vmatpush.msra.mxu0 %v2603
          %2630 = vmatmul.f32.gmra.mxu0 %v2612
          %v2631 = vpop.f32.mrf.mxu0
          %v2632 = vadd.f32 %v2609, %v2631
          %2633 = vdwg.mxu0
          %v2634 = vsub.f32 0.0, %v2632
          %v2635 = vmul.f32 %v2634, 1.442695
          %v2636 = vpow.pop %v2635
          %v2637 = vadd.f32 %v2636, 1.0
          %v2638 = vrcp.pop %v2637
          %v2639 = vmul.f32 %v2637, %v2638
          %v2640 = vsub.f32 1.0, %v2639
          %v2641 = vmul.f32 %v2638, %v2640
          %v2642 = vadd.f32 %v2638, %v2641
          %vm2643 = vweird.f32 %v2637
          %vm2644 = vweird.f32 %v2638
          %vm2645 = vmor %vm2643, %vm2644
          %v2646 = vsel %vm2645, %v2638, %v2642
          %v2647 = vand.u32 2147483647, %v2637
          %vm2648 = vcmp.eq.f32.partialorder %v2647, 8.507059e+37
          %v2649 = vand.u32 %v2637, 2147483648
          %v2650 = vor.u32 1.1754944e-38, %v2649
          %v2651 = vsel %vm2648, %v2650, %v2646
          %v2652 = vmul.f32 1.0, %v2651
          %vm2653 = vcmask 1024
          %2654 = vst.msk [vmem:[%s20] sm:$0x3] %vm2653, %v2652
        $region136: #{vit_forward.1} parent=99 // pred_fallthru
          _
        // Predicated region
        $region137: #{vit_forward.1} parent=99 // pred_check
          %p2655 = pneg %p528
        $region138: #{vit_forward.1} parent=99 // pred_check_branch
          %2657 = sbr.rel (%p2655) target = $region140
        $region139: #{vit_forward.1} parent=99 // pred_region
          _
        $region140: #{vit_forward.1} parent=99 // pred_fallthru
          _
        // Predicated region
        $region141: #{vit_forward.1} parent=99 // pred_check
          %p2658 = pneg %p528
        $region142: #{vit_forward.1} parent=99 // pred_check_branch
          %2660 = sbr.rel (%p2658) target = $region144
        $region143: #{vit_forward.1} parent=99 // pred_region
          _
        $region144: #{vit_forward.1} parent=99 // pred_fallthru
          _
      $region100: #{vit_forward.1} parent=5 // pred_fallthru
        _
      %p2661 = scmp.le.s32.totalorder 2, %s30
      // Predicated region
      $region145: #{vit_forward.1} parent=5 // pred_check
        %p2662 = pneg %p2661
      $region146: #{vit_forward.1} parent=5 // pred_check_branch
        %2664 = sbr.rel (%p2662) target = $region148
      $region147: #{vit_forward.1} parent=5 // pred_region
        %s2665 = ssub.s32 %s30, 2
      $region148: #{vit_forward.1} parent=5 // pred_fallthru
        _
    $region6: #{vit_forward.1} parent=1 // loop_footer
      %s34 = sadd.s32 1, %s30
    $region7: #{vit_forward.1} parent=1 // loop_footer_branch
      %29 = sbr.rel target = $region3
    $region8: #{vit_forward.1} parent=1 // loop_exit
      _
    %2666 = vsyncpa [#allocation5], 1
    %s2667 = scalar_lea.sflag [#allocation5], 1
    %2668 = vsyncpa %s2667, 1
    %2669 = vsyncpa [#allocation7], 1

</llo_original>
